<compile_context>
chip_gen: v7x
topology: tpu7x:2x2x1
jax: 0.10.0
libtpu: 0.0.40
codegen_flags: <defaults>
</compile_context>

<pallas_src>
import jax
import jax.numpy as jnp
import numpy as np
from jax.experimental import pallas as pl
from jax.experimental.pallas import tpu as pltpu

# ---- small, module-consistent sizes (scaled down from 362 / 256 / 60 / 49710) ----
INPUT_DIM = 64      # original: 362
HIDDEN_DIM = 32     # original: 256
STYLE_NUM = 16      # original: 60
OUTFIT_NUM = 256    # original: 49710
BATCH = 8


def _cdiv(a, b):
    return -(-a // b)


def _round_up(x, m):
    return _cdiv(x, m) * m


def _full_spec(shape):
    # whole-array block (allowed even when dims aren't (8,128)-multiples)
    return pl.BlockSpec(shape, lambda *_: (0,) * len(shape))


def _tpu_nmf_config():
    """(tn, num_cores, vmem_limit_bytes) for the NMF SSE kernel, per generation."""
    try:
        vmem = pltpu.get_tpu_info().vmem_capacity_bytes
        if vmem <= 96 * 1024 * 1024:
            # v7x-class: 64 MiB VMEM per TensorCore, 2 TensorCores per chip.
            return 1024, 2, 40 * 1024 * 1024
        # v5e / v6e: 128 MiB VMEM, single TensorCore -> bigger tile, no core split.
        return 2048, 1, 64 * 1024 * 1024
    except Exception:
        # Unknown chip: conservative tile / VMEM limit that is safe everywhere.
        return 1024, 1, 40 * 1024 * 1024


# --------------------------------------------------------------------------------------
# Kernel 1: fused pair scores (ij / ik) + style scores (style_ij / style_ik)
# --------------------------------------------------------------------------------------
def _score_kernel(i_ref, j_ref, k_ref, pt_ref, pb_ref, nt_ref, nb_ref,
                  wt_ref, bt_ref, wb_ref, bb_ref, o_ref):
    f32 = jnp.float32
    i = i_ref[...]                       # (B, D)
    j = j_ref[...]
    k = k_ref[...]
    wt = wt_ref[...]                     # (D, H)
    bt = bt_ref[...]                     # (1, H)
    wb = wb_ref[...]
    bb = bb_ref[...]
    b, d = i.shape
    h = wt.shape[1]

    # ---- pair scores: diag(top_emb(i) @ bottom_emb(x).T) ----
    ti = jax.nn.sigmoid(jnp.dot(i, wt, preferred_element_type=f32) + bt)
    jk = jnp.concatenate([j, k], axis=0)                  # batch the two bottom matmuls
    bjk = jax.nn.sigmoid(jnp.dot(jk, wb, preferred_element_type=f32) + bb)
    bj = bjk[:b]
    bk = bjk[b:]
    ij = jnp.sum(ti * bj, axis=1, keepdims=True)          # (B, 1)
    ik = jnp.sum(ti * bk, axis=1, keepdims=True)          # (B, 1)

    # ---- style scores: nearest style column, then embedding dot product ----
    i2 = jnp.sum(i * i, axis=1, keepdims=True)            # shared ||i||^2 partial
    inv_two_d = 1.0 / (2.0 * d)
    dn0 = (((0,), (0,)), ((), ()))                        # contract dim 0 with dim 0
    bias = jnp.concatenate([bt, bb], axis=1)              # (1, 2H)

    def style_score(other, stt, stb):
        s = stt.shape[1]
        # mean_f (outfit[b,f] - styles[f,s])^2 expanded: (||o||^2 - 2 o.s + ||s||^2)/2D
        # HIGHEST precision only where it matters: the discrete argmin decision.
        cross = (jnp.dot(i, stt, preferred_element_type=f32,
                         precision=jax.lax.Precision.HIGHEST)
                 + jnp.dot(other, stb, preferred_element_type=f32,
                           precision=jax.lax.Precision.HIGHEST))              # (B, S)
        o2 = i2 + jnp.sum(other * other, axis=1, keepdims=True)               # (B, 1)
        s2 = (jnp.sum(stt * stt, axis=0, keepdims=True)
              + jnp.sum(stb * stb, axis=0, keepdims=True))                    # (1, S)
        dist = (o2 - 2.0 * cross + s2) * inv_two_d                            # (B, S)

        # first-argmin one-hot (matches torch.argmin tie-break to the first index)
        cols = jax.lax.broadcasted_iota(jnp.int32, dist.shape, 1)
        dmin = jnp.min(dist, axis=1, keepdims=True)
        idx = jnp.min(jnp.where(dist <= dmin, cols, s), axis=1, keepdims=True)
        onehot = (cols == idx).astype(f32)                                    # (B, S)

        # algebraic simplification: (onehot @ st.T) @ W == onehot @ (st.T @ W);
        # batch the top/bottom projections into one (B,S)@(S,2H) matmul.
        proj = jnp.concatenate(
            [jax.lax.dot_general(stt, wt, dn0, preferred_element_type=f32),
             jax.lax.dot_general(stb, wb, dn0, preferred_element_type=f32)],
            axis=1)                                                           # (S, 2H)
        e = jax.nn.sigmoid(jnp.dot(onehot, proj, preferred_element_type=f32) + bias)
        return jnp.sum(e[:, :h] * e[:, h:], axis=1, keepdims=True)            # (B, 1)

    s_ij = style_score(j, pt_ref[...], pb_ref[...])
    s_ik = style_score(k, nt_ref[...], nb_ref[...])

    # ---- lane-dense output slab: a single full (B, 128) store (no masked (B,1) vst) ----
    lane = jax.lax.broadcasted_iota(jnp.int32, o_ref.shape, 1)
    o_ref[...] = (jnp.where(lane == 0, ij, 0.0)
                  + jnp.where(lane == 1, ik, 0.0)
                  + jnp.where(lane == 2, s_ij, 0.0)
                  + jnp.where(lane == 3, s_ik, 0.0))


def pair_and_style_scores(i_feat, j_feat, k_feat, styles_pos, styles_neg,
                          wt, bt, wb, bb):
    b, d = i_feat.shape
    h = wt.shape[1]
    s = styles_pos.shape[1]
    out = pl.pallas_call(
        _score_kernel,
        grid=(1,),
        in_specs=[_full_spec((b, d)), _full_spec((b, d)), _full_spec((b, d)),
                  _full_spec((d, s)), _full_spec((d, s)),
                  _full_spec((d, s)), _full_spec((d, s)),
                  _full_spec((d, h)), _full_spec((1, h)),
                  _full_spec((d, h)), _full_spec((1, h))],
        out_specs=_full_spec((b, 128)),
        out_shape=jax.ShapeDtypeStruct((b, 128), jnp.float32),
    )(i_feat, j_feat, k_feat,
      styles_pos[:d], styles_pos[d:], styles_neg[:d], styles_neg[d:],
      wt, bt, wb, bb)
    return out[:, 0], out[:, 1], out[:, 2], out[:, 3]


# --------------------------------------------------------------------------------------
# Kernel 2: NMF reconstruction sum-of-squared-errors, tiled over the outfit axis
# --------------------------------------------------------------------------------------
def nmf_sse(p, h1, m_pos, n, h2, m_neg):
    """sum((m_pos - P@relu(H1))^2) + sum((m_neg - N@relu(H2))^2).

    p / n must already be ReLU'd (they are shared with the score path); H1 / H2 are
    ReLU'd + cast to bf16 *inside* the kernel (hidden under the m-stream DMA);
    m_pos / m_neg are streamed in their stored dtype (bf16 recommended, converted
    once and kept persistent) and upcast to f32 in-kernel.
    """
    two_d, s = p.shape
    n_out = h1.shape[1]

    tn_cfg, num_cores, vmem_limit = _tpu_nmf_config()
    # Outfit-axis tile: large for HBM-roofline efficiency at production sizes,
    # shrunk automatically for small demo sizes.
    tn = min(tn_cfg, max(128, _round_up(_cdiv(n_out, num_cores), 128)))
    num_blocks = _cdiv(n_out, tn)                  # real (possibly ragged) outfit tiles
    tiles_per_core = _cdiv(num_blocks, num_cores)
    last_block = num_blocks - 1

    # Resident factors: tiny one-off bf16 cast (724 x 60 at prod).
    p16 = p.astype(jnp.bfloat16)
    n16 = n.astype(jnp.bfloat16)

    def tile_idx(c, t):
        # Clamp so a core's trailing (fully out-of-range) steps re-read the last valid
        # tile; their contribution is masked to zero inside the kernel.
        return (0, jnp.minimum(c * tiles_per_core + t, last_block))

    def kernel(p_ref, h1_ref, mpos_ref, n_ref, h2_ref, mneg_ref, o_ref, acc_ref):
        c = pl.program_id(0)
        t = pl.program_id(1)

        @pl.when(t == 0)
        def _():
            acc_ref[...] = jnp.zeros_like(acc_ref)

        # ReLU + bf16 cast of the H tiles in-kernel (VPU filler under the DMA stream).
        h1_t = jnp.maximum(h1_ref[...], 0.0).astype(jnp.bfloat16)
        h2_t = jnp.maximum(h2_ref[...], 0.0).astype(jnp.bfloat16)

        rec_p = jnp.dot(p_ref[...], h1_t, preferred_element_type=jnp.float32)
        rec_n = jnp.dot(n_ref[...], h2_t, preferred_element_type=jnp.float32)
        err_p = mpos_ref[...].astype(jnp.float32) - rec_p
        err_n = mneg_ref[...].astype(jnp.float32) - rec_n

        # Mask the ragged last tile (and any clamped trailing tile): out-of-range VMEM
        # columns contain uninitialized data and MUST NOT reach the SSE.
        col0 = (c * tiles_per_core + t) * tn
        col = col0 + jax.lax.broadcasted_iota(jnp.int32, (two_d, tn), 1)
        sq = jnp.where(col < n_out, err_p * err_p + err_n * err_n, 0.0)
        # Elementwise accumulation into a vreg-shaped VMEM scratch: pure VPU work,
        # hidden under the m_pos/m_neg DMA stream.
        acc_ref[...] += sq

        @pl.when(t == pl.num_programs(1) - 1)
        def _():
            total = jnp.sum(acc_ref[...])
            r = jax.lax.broadcasted_iota(jnp.int32, o_ref.shape, 0)
            cc = jax.lax.broadcasted_iota(jnp.int32, o_ref.shape, 1)
            o_ref[...] = jnp.where((r == 0) & (cc == 0), total, 0.0)

    out = pl.pallas_call(
        kernel,
        grid=(num_cores, tiles_per_core),
        in_specs=[
            pl.BlockSpec((two_d, s), lambda c, t: (0, 0)),   # relu(P) bf16 (resident)
            pl.BlockSpec((s, tn), tile_idx),                 # H1 tile (f32 stream)
            pl.BlockSpec((two_d, tn), tile_idx),             # m_pos tile (bf16 stream)
            pl.BlockSpec((two_d, s), lambda c, t: (0, 0)),   # relu(N) bf16 (resident)
            pl.BlockSpec((s, tn), tile_idx),                 # H2 tile
            pl.BlockSpec((two_d, tn), tile_idx),             # m_neg tile
        ],
        out_specs=pl.BlockSpec((8, 128), lambda c, t: (c, 0)),
        out_shape=jax.ShapeDtypeStruct((num_cores * 8, 128), jnp.float32),
        scratch_shapes=[pltpu.VMEM((two_d, tn), jnp.float32)],
        compiler_params=pltpu.CompilerParams(
            dimension_semantics=("parallel", "arbitrary"),
            vmem_limit_bytes=vmem_limit),
    )(p16, h1, m_pos, n16, h2, m_neg)
    # per-core partial SSEs live at out[8*c, 0]; everything else is zero.
    return jnp.sum(out)


# --------------------------------------------------------------------------------------
# PAICM forward (wrapper)
# --------------------------------------------------------------------------------------
@jax.jit
def paicm_forward(params, i_feat, j_feat, k_feat):
    wt, bt, wb, bb, P, N, H1, H2, m_pos, m_neg = params

    # forward() applies relu_ in place to the NMF parameters before using them.
    # P / N are needed in f32 for the style-score kernel, so relu them here; the
    # relu of H1 / H2 is fused into the SSE kernel (saves full wrapper passes).
    P = jnp.maximum(P, 0.0)
    N = jnp.maximum(N, 0.0)

    ij_score, ik_score, style_ij, style_ik = pair_and_style_scores(
        i_feat, j_feat, k_feat, P, N, wt, bt, wb, bb)
    sse = nmf_sse(P, H1, m_pos, N, H2, m_neg)

    ijk = jax.nn.sigmoid(ij_score - ik_score)
    style_ijk = jax.nn.sigmoid(style_ij - style_ik)
    loss1 = -jnp.mean(jnp.log(ijk))
    loss2 = -jnp.mean(jnp.log(style_ijk))
    loss3 = sse / (P.shape[0] * H1.shape[1])   # mean over all (2D x outfit) entries
    loss = loss1 + loss2 + 0.1 * loss3
    # argmax([ij, ik], dim=1) == 0   <=>   ij >= ik  (ties resolve to index 0)
    auc = jnp.mean((ij_score >= ik_score).astype(jnp.float32))
    return loss, loss1, loss2, loss3, auc


# --------------------------------------------------------------------------------------
# Pure-JAX reference (for a sanity check; uses the original f32 NMF targets)
# --------------------------------------------------------------------------------------
def reference_forward(params, i_feat, j_feat, k_feat):
    wt, bt, wb, bb, P, N, H1, H2, m_pos, m_neg = params
    P = jnp.maximum(P, 0.0); N = jnp.maximum(N, 0.0)
    H1 = jnp.maximum(H1, 0.0); H2 = jnp.maximum(H2, 0.0)
    d = i_feat.shape[1]

    top = lambda x: jax.nn.sigmoid(x @ wt + bt[0])
    bot = lambda x: jax.nn.sigmoid(x @ wb + bb[0])

    ij = jnp.sum(top(i_feat) * bot(j_feat), axis=1)
    ik = jnp.sum(top(i_feat) * bot(k_feat), axis=1)

    def style_score(a, b, styles):
        outfit = jnp.concatenate([a, b], axis=1)                       # (B, 2D)
        dist = jnp.mean((outfit[:, :, None] - styles[None, :, :]) ** 2, axis=1)
        idx = jnp.argmin(dist, axis=1)
        sel = styles.T[idx]                                            # (B, 2D)
        return jnp.sum(top(sel[:, :d]) * bot(sel[:, d:]), axis=1)

    s_ij = style_score(i_feat, j_feat, P)
    s_ik = style_score(i_feat, k_feat, N)
    loss1 = -jnp.mean(jnp.log(jax.nn.sigmoid(ij - ik)))
    loss2 = -jnp.mean(jnp.log(jax.nn.sigmoid(s_ij - s_ik)))
    loss3 = jnp.mean(jnp.square(m_pos - P @ H1) + jnp.square(m_neg - N @ H2))
    loss = loss1 + loss2 + 0.1 * loss3
    auc = jnp.mean((ij >= ik).astype(jnp.float32))
    return loss, loss1, loss2, loss3, auc


# --------------------------------------------------------------------------------------
if __name__ == "__main__":
    key = jax.random.PRNGKey(0)
    ks = jax.random.split(key, 12)
    f32 = jnp.float32

    wt = jax.random.normal(ks[0], (INPUT_DIM, HIDDEN_DIM), f32) / np.sqrt(INPUT_DIM)
    bt = 0.1 * jax.random.normal(ks[1], (1, HIDDEN_DIM), f32)
    wb = jax.random.normal(ks[2], (INPUT_DIM, HIDDEN_DIM), f32) / np.sqrt(INPUT_DIM)
    bb = 0.1 * jax.random.normal(ks[3], (1, HIDDEN_DIM), f32)
    P = jax.random.normal(ks[4], (2 * INPUT_DIM, STYLE_NUM), f32)
    N = jax.random.normal(ks[5], (2 * INPUT_DIM, STYLE_NUM), f32)
    H1 = jax.random.normal(ks[6], (STYLE_NUM, OUTFIT_NUM), f32)
    H2 = jax.random.normal(ks[7], (STYLE_NUM, OUTFIT_NUM), f32)
    m_pos = jax.random.normal(ks[8], (2 * INPUT_DIM, OUTFIT_NUM), f32)
    m_neg = jax.random.normal(ks[9], (2 * INPUT_DIM, OUTFIT_NUM), f32)

    i_feat = jax.random.normal(ks[10], (BATCH, INPUT_DIM), f32)
    jk = jax.random.split(ks[11], 2)
    j_feat = jax.random.normal(jk[0], (BATCH, INPUT_DIM), f32)
    k_feat = jax.random.normal(jk[1], (BATCH, INPUT_DIM), f32)

    # Fixed NMF targets: convert to bf16 ONCE (persistent) per the perf review; the
    # kernel upcasts the streamed tiles back to f32.  Accepted ~1e-3-level numerics
    # change on loss3 (well within the test tolerance).
    m_pos16 = m_pos.astype(jnp.bfloat16)
    m_neg16 = m_neg.astype(jnp.bfloat16)

    params = (wt, bt, wb, bb, P, N, H1, H2, m_pos16, m_neg16)
    params_ref = (wt, bt, wb, bb, P, N, H1, H2, m_pos, m_neg)

    out = paicm_forward(params, i_feat, j_feat, k_feat)
    out = jax.block_until_ready(out)

    ref = reference_forward(params_ref, i_feat, j_feat, k_feat)
    for got, want in zip(out[:4], ref[:4]):   # loss, loss1, loss2, loss3
        np.testing.assert_allclose(np.asarray(got), np.asarray(want),
                                   rtol=2e-2, atol=2e-2)
    assert all(np.isfinite(np.asarray(v)) for v in out)

    print("KERNEL_OK")
</pallas_src>

<mosaic_0001>
module attributes {stable_mosaic.version = 11 : i64} {
  func.func @kernel(%arg0: i32, %arg1: i32, %arg2: memref<128x16xbf16, #tpu.memory_space<vmem>>, %arg3: memref<16x256xf32, #tpu.memory_space<vmem>>, %arg4: memref<128x256xbf16, #tpu.memory_space<vmem>>, %arg5: memref<128x16xbf16, #tpu.memory_space<vmem>>, %arg6: memref<16x256xf32, #tpu.memory_space<vmem>>, %arg7: memref<128x256xbf16, #tpu.memory_space<vmem>>, %arg8: memref<8x128xf32, #tpu.memory_space<vmem>>, %arg9: memref<128x256xf32, #tpu.memory_space<vmem>>) attributes {dimension_semantics = [#tpu.dimension_semantics<parallel>, #tpu.dimension_semantics<arbitrary>], iteration_bounds = array<i64: 1, 1>, scalar_prefetch = 0 : i64, scratch_operands = 1 : i64, tpu.core_type = #tpu.core_type<tc>, window_params = [{pipeline_mode = #tpu.pipeline_mode<synchronous>, transform_indices = @transform_0, window_bounds = array<i64: 128, 16>}, {transform_indices = @transform_1, window_bounds = array<i64: 16, 256>}, {transform_indices = @transform_2, window_bounds = array<i64: 128, 256>}, {pipeline_mode = #tpu.pipeline_mode<synchronous>, transform_indices = @transform_3, window_bounds = array<i64: 128, 16>}, {transform_indices = @transform_4, window_bounds = array<i64: 16, 256>}, {transform_indices = @transform_5, window_bounds = array<i64: 128, 256>}, {transform_indices = @transform_6, window_bounds = array<i64: 8, 128>}]} {
    %c0_i32 = arith.constant 0 : i32
    %0 = arith.cmpi eq, %arg1, %c0_i32 : i32
    %1 = arith.extui %0 : i1 to i32
    %c0_i32_0 = arith.constant 0 : i32
    %2 = arith.cmpi ne, %1, %c0_i32_0 : i32
    scf.if %2 {
      %cst_23 = arith.constant 0.000000e+00 : f32
      %40 = vector.broadcast %cst_23 : f32 to vector<128x256xf32>
      %c0_24 = arith.constant 0 : index
      %c0_25 = arith.constant 0 : index
      %41 = vector.load %arg9[%c0_24, %c0_25] : memref<128x256xf32, #tpu.memory_space<vmem>>, vector<128x256xf32>
      tpu.vector_store %arg9[%c0_24, %c0_25], %40 {strides = array<i32>} : memref<128x256xf32, #tpu.memory_space<vmem>>, vector<128x256xf32>,
    } else {
    }
    %c0 = arith.constant 0 : index
    %c0_1 = arith.constant 0 : index
    %3 = vector.load %arg3[%c0, %c0_1] : memref<16x256xf32, #tpu.memory_space<vmem>>, vector<16x256xf32>
    %cst = arith.constant 0.000000e+00 : f32
    %4 = vector.broadcast %cst : f32 to vector<16x256xf32>
    %5 = arith.maximumf %3, %4 : vector<16x256xf32>
    %6 = arith.truncf %5 : vector<16x256xf32> to vector<16x256xbf16>
    %c0_2 = arith.constant 0 : index
    %c0_3 = arith.constant 0 : index
    %7 = vector.load %arg6[%c0_2, %c0_3] : memref<16x256xf32, #tpu.memory_space<vmem>>, vector<16x256xf32>
    %cst_4 = arith.constant 0.000000e+00 : f32
    %8 = vector.broadcast %cst_4 : f32 to vector<16x256xf32>
    %9 = arith.maximumf %7, %8 : vector<16x256xf32>
    %10 = arith.truncf %9 : vector<16x256xf32> to vector<16x256xbf16>
    %c0_5 = arith.constant 0 : index
    %c0_6 = arith.constant 0 : index
    %11 = vector.load %arg2[%c0_5, %c0_6] : memref<128x16xbf16, #tpu.memory_space<vmem>>, vector<128x16xbf16>
    %cst_7 = arith.constant dense<0.000000e+00> : vector<128x256xf32>
    %12 = tpu.matmul %11, %6, %cst_7 {dimension_numbers = #tpu.dot_dimension_numbers<[1], [0], [0], [1], [0, 0, 1, 1], [], []>} : vector<128x16xbf16>, vector<16x256xbf16>, vector<128x256xf32> -> vector<128x256xf32>
    %c0_8 = arith.constant 0 : index
    %c0_9 = arith.constant 0 : index
    %13 = vector.load %arg5[%c0_8, %c0_9] : memref<128x16xbf16, #tpu.memory_space<vmem>>, vector<128x16xbf16>
    %cst_10 = arith.constant dense<0.000000e+00> : vector<128x256xf32>
    %14 = tpu.matmul %13, %10, %cst_10 {dimension_numbers = #tpu.dot_dimension_numbers<[1], [0], [0], [1], [0, 0, 1, 1], [], []>} : vector<128x16xbf16>, vector<16x256xbf16>, vector<128x256xf32> -> vector<128x256xf32>
    %c0_11 = arith.constant 0 : index
    %c0_12 = arith.constant 0 : index
    %15 = vector.load %arg4[%c0_11, %c0_12] : memref<128x256xbf16, #tpu.memory_space<vmem>>, vector<128x256xbf16>
    %16 = arith.extf %15 : vector<128x256xbf16> to vector<128x256xf32>
    %17 = arith.subf %16, %12 : vector<128x256xf32>
    %c0_13 = arith.constant 0 : index
    %c0_14 = arith.constant 0 : index
    %18 = vector.load %arg7[%c0_13, %c0_14] : memref<128x256xbf16, #tpu.memory_space<vmem>>, vector<128x256xbf16>
    %19 = arith.extf %18 : vector<128x256xbf16> to vector<128x256xf32>
    %20 = arith.subf %19, %14 : vector<128x256xf32>
    %c1_i32 = arith.constant 1 : i32
    %21 = arith.muli %arg0, %c1_i32 : i32
    %22 = arith.addi %21, %arg1 : i32
    %c256_i32 = arith.constant 256 : i32
    %23 = arith.muli %22, %c256_i32 : i32
    %24 = tpu.iota {dimensions = array<i32: 1>} : vector<128x256xi32>
    %25 = vector.broadcast %23 : i32 to vector<128x256xi32>
    %26 = arith.addi %25, %24 : vector<128x256xi32>
    %c256_i32_15 = arith.constant 256 : i32
    %27 = vector.broadcast %c256_i32_15 : i32 to vector<128x256xi32>
    %28 = arith.cmpi slt, %26, %27 : vector<128x256xi32>
    %29 = arith.mulf %17, %17 : vector<128x256xf32>
    %30 = arith.mulf %20, %20 : vector<128x256xf32>
    %31 = arith.addf %29, %30 : vector<128x256xf32>
    %cst_16 = arith.constant 0.000000e+00 : f32
    %32 = vector.broadcast %cst_16 : f32 to vector<128x256xf32>
    %33 = arith.select %28, %31, %32 : vector<128x256xi1>, vector<128x256xf32>
    %c0_17 = arith.constant 0 : index
    %c0_18 = arith.constant 0 : index
    %34 = vector.load %arg9[%c0_17, %c0_18] : memref<128x256xf32, #tpu.memory_space<vmem>>, vector<128x256xf32>
    %35 = arith.addf %34, %33 : vector<128x256xf32>
    %c0_19 = arith.constant 0 : index
    %c0_20 = arith.constant 0 : index
    %36 = vector.load %arg9[%c0_19, %c0_20] : memref<128x256xf32, #tpu.memory_space<vmem>>, vector<128x256xf32>
    tpu.vector_store %arg9[%c0_19, %c0_20], %35 {strides = array<i32>} : memref<128x256xf32, #tpu.memory_space<vmem>>, vector<128x256xf32>,
    %c0_i32_21 = arith.constant 0 : i32
    %37 = arith.cmpi eq, %arg1, %c0_i32_21 : i32
    %38 = arith.extui %37 : i1 to i32
    %c0_i32_22 = arith.constant 0 : i32
    %39 = arith.cmpi ne, %38, %c0_i32_22 : i32
    scf.if %39 {
      %c0_23 = arith.constant 0 : index
      %c0_24 = arith.constant 0 : index
      %40 = vector.load %arg9[%c0_23, %c0_24] : memref<128x256xf32, #tpu.memory_space<vmem>>, vector<128x256xf32>
      %41 = vector.shape_cast %40 : vector<128x256xf32> to vector<1x128x256xf32>
      %cst_25 = arith.constant dense<0.000000e+00> : vector<1xf32>
      %42 = vector.multi_reduction <add>, %41, %cst_25 [1, 2] : vector<1x128x256xf32> to vector<1xf32>
      %43 = vector.shape_cast %42 : vector<1xf32> to vector<1x1x1xf32>
      %44 = vector.extract %43[0, 0, 0] : f32 from vector<1x1x1xf32>
      %45 = tpu.iota {dimensions = array<i32: 0>} : vector<8x128xi32>
      %46 = tpu.iota {dimensions = array<i32: 1>} : vector<8x128xi32>
      %c0_i32_26 = arith.constant 0 : i32
      %47 = vector.broadcast %c0_i32_26 : i32 to vector<8x128xi32>
      %48 = arith.cmpi eq, %45, %47 : vector<8x128xi32>
      %c0_i32_27 = arith.constant 0 : i32
      %49 = vector.broadcast %c0_i32_27 : i32 to vector<8x128xi32>
      %50 = arith.cmpi eq, %46, %49 : vector<8x128xi32>
      %51 = arith.andi %48, %50 : vector<8x128xi1>
      %cst_28 = arith.constant 0.000000e+00 : f32
      %52 = vector.broadcast %44 : f32 to vector<8x128xf32>
      %53 = vector.broadcast %cst_28 : f32 to vector<8x128xf32>
      %54 = arith.select %51, %52, %53 : vector<8x128xi1>, vector<8x128xf32>
      %c0_29 = arith.constant 0 : index
      %c0_30 = arith.constant 0 : index
      %55 = vector.load %arg8[%c0_29, %c0_30] : memref<8x128xf32, #tpu.memory_space<vmem>>, vector<8x128xf32>
      tpu.vector_store %arg8[%c0_29, %c0_30], %54 {strides = array<i32>} : memref<8x128xf32, #tpu.memory_space<vmem>>, vector<8x128xf32>,
    } else {
    }
    return
  }
  func.func @transform_0(%arg0: i32, %arg1: i32) -> (i32, i32) {
    %c0_i32 = arith.constant 0 : i32
    %c0_i32_0 = arith.constant 0 : i32
    %c0_i32_1 = arith.constant 0 : i32
    return %c0_i32, %c0_i32_0 : i32, i32
  }
  func.func @transform_1(%arg0: i32, %arg1: i32) -> (i32, i32) {
    %c1_i32 = arith.constant 1 : i32
    %0 = arith.muli %arg0, %c1_i32 : i32
    %1 = arith.addi %0, %arg1 : i32
    %c0_i32 = arith.constant 0 : i32
    %2 = arith.minsi %1, %c0_i32 : i32
    %c0_i32_0 = arith.constant 0 : i32
    %c0_i32_1 = arith.constant 0 : i32
    return %c0_i32_0, %2 : i32, i32
  }
  func.func @transform_2(%arg0: i32, %arg1: i32) -> (i32, i32) {
    %c1_i32 = arith.constant 1 : i32
    %0 = arith.muli %arg0, %c1_i32 : i32
    %1 = arith.addi %0, %arg1 : i32
    %c0_i32 = arith.constant 0 : i32
    %2 = arith.minsi %1, %c0_i32 : i32
    %c0_i32_0 = arith.constant 0 : i32
    %c0_i32_1 = arith.constant 0 : i32
    return %c0_i32_0, %2 : i32, i32
  }
  func.func @transform_3(%arg0: i32, %arg1: i32) -> (i32, i32) {
    %c0_i32 = arith.constant 0 : i32
    %c0_i32_0 = arith.constant 0 : i32
    %c0_i32_1 = arith.constant 0 : i32
    return %c0_i32, %c0_i32_0 : i32, i32
  }
  func.func @transform_4(%arg0: i32, %arg1: i32) -> (i32, i32) {
    %c1_i32 = arith.constant 1 : i32
    %0 = arith.muli %arg0, %c1_i32 : i32
    %1 = arith.addi %0, %arg1 : i32
    %c0_i32 = arith.constant 0 : i32
    %2 = arith.minsi %1, %c0_i32 : i32
    %c0_i32_0 = arith.constant 0 : i32
    %c0_i32_1 = arith.constant 0 : i32
    return %c0_i32_0, %2 : i32, i32
  }
  func.func @transform_5(%arg0: i32, %arg1: i32) -> (i32, i32) {
    %c1_i32 = arith.constant 1 : i32
    %0 = arith.muli %arg0, %c1_i32 : i32
    %1 = arith.addi %0, %arg1 : i32
    %c0_i32 = arith.constant 0 : i32
    %2 = arith.minsi %1, %c0_i32 : i32
    %c0_i32_0 = arith.constant 0 : i32
    %c0_i32_1 = arith.constant 0 : i32
    return %c0_i32_0, %2 : i32, i32
  }
  func.func @transform_6(%arg0: i32, %arg1: i32) -> (i32, i32) {
    %c0_i32 = arith.constant 0 : i32
    %c0_i32_0 = arith.constant 0 : i32
    return %arg0, %c0_i32 : i32, i32
  }
}

module attributes {stable_mosaic.version = 11 : i64} {
  func.func @_score_kernel(%arg0: i32, %arg1: memref<8x64xf32, #tpu.memory_space<vmem>>, %arg2: memref<8x64xf32, #tpu.memory_space<vmem>>, %arg3: memref<8x64xf32, #tpu.memory_space<vmem>>, %arg4: memref<64x16xf32, #tpu.memory_space<vmem>>, %arg5: memref<64x16xf32, #tpu.memory_space<vmem>>, %arg6: memref<64x16xf32, #tpu.memory_space<vmem>>, %arg7: memref<64x16xf32, #tpu.memory_space<vmem>>, %arg8: memref<64x32xf32, #tpu.memory_space<vmem>>, %arg9: memref<1x32xf32, #tpu.memory_space<vmem>>, %arg10: memref<64x32xf32, #tpu.memory_space<vmem>>, %arg11: memref<1x32xf32, #tpu.memory_space<vmem>>, %arg12: memref<8x128xf32, #tpu.memory_space<vmem>>) attributes {dimension_semantics = [#tpu.dimension_semantics<arbitrary>], iteration_bounds = array<i64: 1>, scalar_prefetch = 0 : i64, scratch_operands = 0 : i64, tpu.core_type = #tpu.core_type<tc>, window_params = [{pipeline_mode = #tpu.pipeline_mode<synchronous>, transform_indices = @transform_0, window_bounds = array<i64: 8, 64>}, {pipeline_mode = #tpu.pipeline_mode<synchronous>, transform_indices = @transform_1, window_bounds = array<i64: 8, 64>}, {pipeline_mode = #tpu.pipeline_mode<synchronous>, transform_indices = @transform_2, window_bounds = array<i64: 8, 64>}, {pipeline_mode = #tpu.pipeline_mode<synchronous>, transform_indices = @transform_3, window_bounds = array<i64: 64, 16>}, {pipeline_mode = #tpu.pipeline_mode<synchronous>, transform_indices = @transform_4, window_bounds = array<i64: 64, 16>}, {pipeline_mode = #tpu.pipeline_mode<synchronous>, transform_indices = @transform_5, window_bounds = array<i64: 64, 16>}, {pipeline_mode = #tpu.pipeline_mode<synchronous>, transform_indices = @transform_6, window_bounds = array<i64: 64, 16>}, {pipeline_mode = #tpu.pipeline_mode<synchronous>, transform_indices = @transform_7, window_bounds = array<i64: 64, 32>}, {pipeline_mode = #tpu.pipeline_mode<synchronous>, transform_indices = @transform_8, window_bounds = array<i64: 1, 32>}, {pipeline_mode = #tpu.pipeline_mode<synchronous>, transform_indices = @transform_9, window_bounds = array<i64: 64, 32>}, {pipeline_mode = #tpu.pipeline_mode<synchronous>, transform_indices = @transform_10, window_bounds = array<i64: 1, 32>}, {pipeline_mode = #tpu.pipeline_mode<synchronous>, transform_indices = @transform_11, window_bounds = array<i64: 8, 128>}]} {
    %c0 = arith.constant 0 : index
    %c0_0 = arith.constant 0 : index
    %0 = vector.load %arg1[%c0, %c0_0] : memref<8x64xf32, #tpu.memory_space<vmem>>, vector<8x64xf32>
    %c0_1 = arith.constant 0 : index
    %c0_2 = arith.constant 0 : index
    %1 = vector.load %arg2[%c0_1, %c0_2] : memref<8x64xf32, #tpu.memory_space<vmem>>, vector<8x64xf32>
    %c0_3 = arith.constant 0 : index
    %c0_4 = arith.constant 0 : index
    %2 = vector.load %arg3[%c0_3, %c0_4] : memref<8x64xf32, #tpu.memory_space<vmem>>, vector<8x64xf32>
    %c0_5 = arith.constant 0 : index
    %c0_6 = arith.constant 0 : index
    %3 = vector.load %arg8[%c0_5, %c0_6] : memref<64x32xf32, #tpu.memory_space<vmem>>, vector<64x32xf32>
    %c0_7 = arith.constant 0 : index
    %c0_8 = arith.constant 0 : index
    %4 = vector.load %arg9[%c0_7, %c0_8] : memref<1x32xf32, #tpu.memory_space<vmem>>, vector<1x32xf32>
    %c0_9 = arith.constant 0 : index
    %c0_10 = arith.constant 0 : index
    %5 = vector.load %arg10[%c0_9, %c0_10] : memref<64x32xf32, #tpu.memory_space<vmem>>, vector<64x32xf32>
    %c0_11 = arith.constant 0 : index
    %c0_12 = arith.constant 0 : index
    %6 = vector.load %arg11[%c0_11, %c0_12] : memref<1x32xf32, #tpu.memory_space<vmem>>, vector<1x32xf32>
    %cst = arith.constant dense<0.000000e+00> : vector<8x32xf32>
    %7 = tpu.matmul %0, %3, %cst {dimension_numbers = #tpu.dot_dimension_numbers<[1], [0], [0], [1], [0, 0, 1, 1], [], []>} : vector<8x64xf32>, vector<64x32xf32>, vector<8x32xf32> -> vector<8x32xf32>
    %8 = vector.broadcast %4 : vector<1x32xf32> to vector<8x32xf32>
    %9 = arith.addf %7, %8 : vector<8x32xf32>
    %10 = arith.negf %9 : vector<8x32xf32>
    %11 = math.exp %10 : vector<8x32xf32>
    %cst_13 = arith.constant 1.000000e+00 : f32
    %12 = vector.broadcast %cst_13 : f32 to vector<8x32xf32>
    %13 = arith.addf %12, %11 : vector<8x32xf32>
    %14 = arith.divf %12, %13 : vector<8x32xf32>
    %15 = tpu.concatenate %1, %2 in 0 : vector<8x64xf32>, vector<8x64xf32> -> vector<16x64xf32>
    %cst_14 = arith.constant dense<0.000000e+00> : vector<16x32xf32>
    %16 = tpu.matmul %15, %5, %cst_14 {dimension_numbers = #tpu.dot_dimension_numbers<[1], [0], [0], [1], [0, 0, 1, 1], [], []>} : vector<16x64xf32>, vector<64x32xf32>, vector<16x32xf32> -> vector<16x32xf32>
    %17 = vector.broadcast %6 : vector<1x32xf32> to vector<16x32xf32>
    %18 = arith.addf %16, %17 : vector<16x32xf32>
    %19 = arith.negf %18 : vector<16x32xf32>
    %20 = math.exp %19 : vector<16x32xf32>
    %cst_15 = arith.constant 1.000000e+00 : f32
    %21 = vector.broadcast %cst_15 : f32 to vector<16x32xf32>
    %22 = arith.addf %21, %20 : vector<16x32xf32>
    %23 = arith.divf %21, %22 : vector<16x32xf32>
    %24 = vector.extract_strided_slice %23 {offsets = [0, 0], sizes = [8, 32], strides = [1, 1]} : vector<16x32xf32> to vector<8x32xf32>
    %25 = vector.extract_strided_slice %23 {offsets = [8, 0], sizes = [8, 32], strides = [1, 1]} : vector<16x32xf32> to vector<8x32xf32>
    %26 = arith.mulf %14, %24 : vector<8x32xf32>
    %cst_16 = arith.constant dense<0.000000e+00> : vector<8xf32>
    %27 = vector.multi_reduction <add>, %26, %cst_16 [1] : vector<8x32xf32> to vector<8xf32>
    %28 = vector.shape_cast %27 : vector<8xf32> to vector<8x1xf32>
    %29 = arith.mulf %14, %25 : vector<8x32xf32>
    %cst_17 = arith.constant dense<0.000000e+00> : vector<8xf32>
    %30 = vector.multi_reduction <add>, %29, %cst_17 [1] : vector<8x32xf32> to vector<8xf32>
    %31 = vector.shape_cast %30 : vector<8xf32> to vector<8x1xf32>
    %32 = arith.mulf %0, %0 : vector<8x64xf32>
    %cst_18 = arith.constant dense<0.000000e+00> : vector<8xf32>
    %33 = vector.multi_reduction <add>, %32, %cst_18 [1] : vector<8x64xf32> to vector<8xf32>
    %34 = vector.shape_cast %33 : vector<8xf32> to vector<8x1xf32>
    %35 = tpu.concatenate %4, %6 in 1 : vector<1x32xf32>, vector<1x32xf32> -> vector<1x64xf32>
    %c0_19 = arith.constant 0 : index
    %c0_20 = arith.constant 0 : index
    %36 = vector.load %arg4[%c0_19, %c0_20] : memref<64x16xf32, #tpu.memory_space<vmem>>, vector<64x16xf32>
    %c0_21 = arith.constant 0 : index
    %c0_22 = arith.constant 0 : index
    %37 = vector.load %arg5[%c0_21, %c0_22] : memref<64x16xf32, #tpu.memory_space<vmem>>, vector<64x16xf32>
    %cst_23 = arith.constant dense<0.000000e+00> : vector<8x16xf32>
    %38 = tpu.matmul %0, %36, %cst_23 {dimension_numbers = #tpu.dot_dimension_numbers<[1], [0], [0], [1], [0, 0, 1, 1], [], []>, precision = #tpu.contract_precision<fp32>} : vector<8x64xf32>, vector<64x16xf32>, vector<8x16xf32> -> vector<8x16xf32>
    %cst_24 = arith.constant dense<0.000000e+00> : vector<8x16xf32>
    %39 = tpu.matmul %1, %37, %cst_24 {dimension_numbers = #tpu.dot_dimension_numbers<[1], [0], [0], [1], [0, 0, 1, 1], [], []>, precision = #tpu.contract_precision<fp32>} : vector<8x64xf32>, vector<64x16xf32>, vector<8x16xf32> -> vector<8x16xf32>
    %40 = arith.addf %38, %39 : vector<8x16xf32>
    %41 = arith.mulf %1, %1 : vector<8x64xf32>
    %cst_25 = arith.constant dense<0.000000e+00> : vector<8xf32>
    %42 = vector.multi_reduction <add>, %41, %cst_25 [1] : vector<8x64xf32> to vector<8xf32>
    %43 = vector.shape_cast %42 : vector<8xf32> to vector<8x1xf32>
    %44 = arith.addf %34, %43 : vector<8x1xf32>
    %45 = arith.mulf %36, %36 : vector<64x16xf32>
    %cst_26 = arith.constant dense<0.000000e+00> : vector<16xf32>
    %46 = vector.multi_reduction <add>, %45, %cst_26 [0] : vector<64x16xf32> to vector<16xf32>
    %47 = vector.shape_cast %46 : vector<16xf32> to vector<1x16xf32>
    %48 = arith.mulf %37, %37 : vector<64x16xf32>
    %cst_27 = arith.constant dense<0.000000e+00> : vector<16xf32>
    %49 = vector.multi_reduction <add>, %48, %cst_27 [0] : vector<64x16xf32> to vector<16xf32>
    %50 = vector.shape_cast %49 : vector<16xf32> to vector<1x16xf32>
    %51 = arith.addf %47, %50 : vector<1x16xf32>
    %cst_28 = arith.constant 2.000000e+00 : f32
    %52 = vector.broadcast %cst_28 : f32 to vector<8x16xf32>
    %53 = arith.mulf %52, %40 : vector<8x16xf32>
    %54 = vector.broadcast %44 : vector<8x1xf32> to vector<8x16xf32>
    %55 = arith.subf %54, %53 : vector<8x16xf32>
    %56 = vector.broadcast %51 : vector<1x16xf32> to vector<8x16xf32>
    %57 = arith.addf %55, %56 : vector<8x16xf32>
    %cst_29 = arith.constant 7.812500e-03 : f32
    %58 = vector.broadcast %cst_29 : f32 to vector<8x16xf32>
    %59 = arith.mulf %57, %58 : vector<8x16xf32>
    %60 = tpu.iota {dimensions = array<i32: 1>} : vector<8x16xi32>
    %cst_30 = arith.constant dense<0x7F800000> : vector<8xf32>
    %61 = vector.multi_reduction <minimumf>, %59, %cst_30 [1] : vector<8x16xf32> to vector<8xf32>
    %62 = vector.shape_cast %61 : vector<8xf32> to vector<8x1xf32>
    %63 = vector.broadcast %62 : vector<8x1xf32> to vector<8x16xf32>
    %64 = arith.cmpf ole, %59, %63 : vector<8x16xf32>
    %c16_i32 = arith.constant 16 : i32
    %65 = vector.broadcast %c16_i32 : i32 to vector<8x16xi32>
    %66 = arith.select %64, %60, %65 : vector<8x16xi1>, vector<8x16xi32>
    %cst_31 = arith.constant dense<2147483647> : vector<8xi32>
    %67 = vector.multi_reduction <minsi>, %66, %cst_31 [1] : vector<8x16xi32> to vector<8xi32>
    %68 = vector.shape_cast %67 : vector<8xi32> to vector<8x1xi32>
    %69 = vector.broadcast %68 : vector<8x1xi32> to vector<8x16xi32>
    %70 = arith.cmpi eq, %60, %69 : vector<8x16xi32>
    %71 = arith.extui %70 : vector<8x16xi1> to vector<8x16xi32>
    %72 = arith.sitofp %71 : vector<8x16xi32> to vector<8x16xf32>
    %cst_32 = arith.constant dense<0.000000e+00> : vector<16x32xf32>
    %73 = tpu.matmul %36, %3, %cst_32 {dimension_numbers = #tpu.dot_dimension_numbers<[0], [0], [1], [1], [0, 1, 1, 1], [], []>} : vector<64x16xf32>, vector<64x32xf32>, vector<16x32xf32> -> vector<16x32xf32>
    %cst_33 = arith.constant dense<0.000000e+00> : vector<16x32xf32>
    %74 = tpu.matmul %37, %5, %cst_33 {dimension_numbers = #tpu.dot_dimension_numbers<[0], [0], [1], [1], [0, 1, 1, 1], [], []>} : vector<64x16xf32>, vector<64x32xf32>, vector<16x32xf32> -> vector<16x32xf32>
    %75 = tpu.concatenate %73, %74 in 1 : vector<16x32xf32>, vector<16x32xf32> -> vector<16x64xf32>
    %cst_34 = arith.constant dense<0.000000e+00> : vector<8x64xf32>
    %76 = tpu.matmul %72, %75, %cst_34 {dimension_numbers = #tpu.dot_dimension_numbers<[1], [0], [0], [1], [0, 0, 1, 1], [], []>} : vector<8x16xf32>, vector<16x64xf32>, vector<8x64xf32> -> vector<8x64xf32>
    %77 = vector.broadcast %35 : vector<1x64xf32> to vector<8x64xf32>
    %78 = arith.addf %76, %77 : vector<8x64xf32>
    %79 = arith.negf %78 : vector<8x64xf32>
    %80 = math.exp %79 : vector<8x64xf32>
    %cst_35 = arith.constant 1.000000e+00 : f32
    %81 = vector.broadcast %cst_35 : f32 to vector<8x64xf32>
    %82 = arith.addf %81, %80 : vector<8x64xf32>
    %83 = arith.divf %81, %82 : vector<8x64xf32>
    %84 = vector.extract_strided_slice %83 {offsets = [0, 0], sizes = [8, 32], strides = [1, 1]} : vector<8x64xf32> to vector<8x32xf32>
    %85 = vector.extract_strided_slice %83 {offsets = [0, 32], sizes = [8, 32], strides = [1, 1]} : vector<8x64xf32> to vector<8x32xf32>
    %86 = arith.mulf %84, %85 : vector<8x32xf32>
    %cst_36 = arith.constant dense<0.000000e+00> : vector<8xf32>
    %87 = vector.multi_reduction <add>, %86, %cst_36 [1] : vector<8x32xf32> to vector<8xf32>
    %88 = vector.shape_cast %87 : vector<8xf32> to vector<8x1xf32>
    %c0_37 = arith.constant 0 : index
    %c0_38 = arith.constant 0 : index
    %89 = vector.load %arg6[%c0_37, %c0_38] : memref<64x16xf32, #tpu.memory_space<vmem>>, vector<64x16xf32>
    %c0_39 = arith.constant 0 : index
    %c0_40 = arith.constant 0 : index
    %90 = vector.load %arg7[%c0_39, %c0_40] : memref<64x16xf32, #tpu.memory_space<vmem>>, vector<64x16xf32>
    %cst_41 = arith.constant dense<0.000000e+00> : vector<8x16xf32>
    %91 = tpu.matmul %0, %89, %cst_41 {dimension_numbers = #tpu.dot_dimension_numbers<[1], [0], [0], [1], [0, 0, 1, 1], [], []>, precision = #tpu.contract_precision<fp32>} : vector<8x64xf32>, vector<64x16xf32>, vector<8x16xf32> -> vector<8x16xf32>
    %cst_42 = arith.constant dense<0.000000e+00> : vector<8x16xf32>
    %92 = tpu.matmul %2, %90, %cst_42 {dimension_numbers = #tpu.dot_dimension_numbers<[1], [0], [0], [1], [0, 0, 1, 1], [], []>, precision = #tpu.contract_precision<fp32>} : vector<8x64xf32>, vector<64x16xf32>, vector<8x16xf32> -> vector<8x16xf32>
    %93 = arith.addf %91, %92 : vector<8x16xf32>
    %94 = arith.mulf %2, %2 : vector<8x64xf32>
    %cst_43 = arith.constant dense<0.000000e+00> : vector<8xf32>
    %95 = vector.multi_reduction <add>, %94, %cst_43 [1] : vector<8x64xf32> to vector<8xf32>
    %96 = vector.shape_cast %95 : vector<8xf32> to vector<8x1xf32>
    %97 = arith.addf %34, %96 : vector<8x1xf32>
    %98 = arith.mulf %89, %89 : vector<64x16xf32>
    %cst_44 = arith.constant dense<0.000000e+00> : vector<16xf32>
    %99 = vector.multi_reduction <add>, %98, %cst_44 [0] : vector<64x16xf32> to vector<16xf32>
    %100 = vector.shape_cast %99 : vector<16xf32> to vector<1x16xf32>
    %101 = arith.mulf %90, %90 : vector<64x16xf32>
    %cst_45 = arith.constant dense<0.000000e+00> : vector<16xf32>
    %102 = vector.multi_reduction <add>, %101, %cst_45 [0] : vector<64x16xf32> to vector<16xf32>
    %103 = vector.shape_cast %102 : vector<16xf32> to vector<1x16xf32>
    %104 = arith.addf %100, %103 : vector<1x16xf32>
    %cst_46 = arith.constant 2.000000e+00 : f32
    %105 = vector.broadcast %cst_46 : f32 to vector<8x16xf32>
    %106 = arith.mulf %105, %93 : vector<8x16xf32>
    %107 = vector.broadcast %97 : vector<8x1xf32> to vector<8x16xf32>
    %108 = arith.subf %107, %106 : vector<8x16xf32>
    %109 = vector.broadcast %104 : vector<1x16xf32> to vector<8x16xf32>
    %110 = arith.addf %108, %109 : vector<8x16xf32>
    %cst_47 = arith.constant 7.812500e-03 : f32
    %111 = vector.broadcast %cst_47 : f32 to vector<8x16xf32>
    %112 = arith.mulf %110, %111 : vector<8x16xf32>
    %113 = tpu.iota {dimensions = array<i32: 1>} : vector<8x16xi32>
    %cst_48 = arith.constant dense<0x7F800000> : vector<8xf32>
    %114 = vector.multi_reduction <minimumf>, %112, %cst_48 [1] : vector<8x16xf32> to vector<8xf32>
    %115 = vector.shape_cast %114 : vector<8xf32> to vector<8x1xf32>
    %116 = vector.broadcast %115 : vector<8x1xf32> to vector<8x16xf32>
    %117 = arith.cmpf ole, %112, %116 : vector<8x16xf32>
    %c16_i32_49 = arith.constant 16 : i32
    %118 = vector.broadcast %c16_i32_49 : i32 to vector<8x16xi32>
    %119 = arith.select %117, %113, %118 : vector<8x16xi1>, vector<8x16xi32>
    %cst_50 = arith.constant dense<2147483647> : vector<8xi32>
    %120 = vector.multi_reduction <minsi>, %119, %cst_50 [1] : vector<8x16xi32> to vector<8xi32>
    %121 = vector.shape_cast %120 : vector<8xi32> to vector<8x1xi32>
    %122 = vector.broadcast %121 : vector<8x1xi32> to vector<8x16xi32>
    %123 = arith.cmpi eq, %113, %122 : vector<8x16xi32>
    %124 = arith.extui %123 : vector<8x16xi1> to vector<8x16xi32>
    %125 = arith.sitofp %124 : vector<8x16xi32> to vector<8x16xf32>
    %cst_51 = arith.constant dense<0.000000e+00> : vector<16x32xf32>
    %126 = tpu.matmul %89, %3, %cst_51 {dimension_numbers = #tpu.dot_dimension_numbers<[0], [0], [1], [1], [0, 1, 1, 1], [], []>} : vector<64x16xf32>, vector<64x32xf32>, vector<16x32xf32> -> vector<16x32xf32>
    %cst_52 = arith.constant dense<0.000000e+00> : vector<16x32xf32>
    %127 = tpu.matmul %90, %5, %cst_52 {dimension_numbers = #tpu.dot_dimension_numbers<[0], [0], [1], [1], [0, 1, 1, 1], [], []>} : vector<64x16xf32>, vector<64x32xf32>, vector<16x32xf32> -> vector<16x32xf32>
    %128 = tpu.concatenate %126, %127 in 1 : vector<16x32xf32>, vector<16x32xf32> -> vector<16x64xf32>
    %cst_53 = arith.constant dense<0.000000e+00> : vector<8x64xf32>
    %129 = tpu.matmul %125, %128, %cst_53 {dimension_numbers = #tpu.dot_dimension_numbers<[1], [0], [0], [1], [0, 0, 1, 1], [], []>} : vector<8x16xf32>, vector<16x64xf32>, vector<8x64xf32> -> vector<8x64xf32>
    %130 = vector.broadcast %35 : vector<1x64xf32> to vector<8x64xf32>
    %131 = arith.addf %129, %130 : vector<8x64xf32>
    %132 = arith.negf %131 : vector<8x64xf32>
    %133 = math.exp %132 : vector<8x64xf32>
    %cst_54 = arith.constant 1.000000e+00 : f32
    %134 = vector.broadcast %cst_54 : f32 to vector<8x64xf32>
    %135 = arith.addf %134, %133 : vector<8x64xf32>
    %136 = arith.divf %134, %135 : vector<8x64xf32>
    %137 = vector.extract_strided_slice %136 {offsets = [0, 0], sizes = [8, 32], strides = [1, 1]} : vector<8x64xf32> to vector<8x32xf32>
    %138 = vector.extract_strided_slice %136 {offsets = [0, 32], sizes = [8, 32], strides = [1, 1]} : vector<8x64xf32> to vector<8x32xf32>
    %139 = arith.mulf %137, %138 : vector<8x32xf32>
    %cst_55 = arith.constant dense<0.000000e+00> : vector<8xf32>
    %140 = vector.multi_reduction <add>, %139, %cst_55 [1] : vector<8x32xf32> to vector<8xf32>
    %141 = vector.shape_cast %140 : vector<8xf32> to vector<8x1xf32>
    %142 = tpu.iota {dimensions = array<i32: 1>} : vector<8x128xi32>
    %c0_i32 = arith.constant 0 : i32
    %143 = vector.broadcast %c0_i32 : i32 to vector<8x128xi32>
    %144 = arith.cmpi eq, %142, %143 : vector<8x128xi32>
    %cst_56 = arith.constant 0.000000e+00 : f32
    %145 = vector.shape_cast %28 : vector<8x1xf32> to vector<8x1xf32>
    %146 = vector.broadcast %145 : vector<8x1xf32> to vector<8x128xf32>
    %147 = vector.broadcast %cst_56 : f32 to vector<8x128xf32>
    %148 = arith.select %144, %146, %147 : vector<8x128xi1>, vector<8x128xf32>
    %c1_i32 = arith.constant 1 : i32
    %149 = vector.broadcast %c1_i32 : i32 to vector<8x128xi32>
    %150 = arith.cmpi eq, %142, %149 : vector<8x128xi32>
    %cst_57 = arith.constant 0.000000e+00 : f32
    %151 = vector.shape_cast %31 : vector<8x1xf32> to vector<8x1xf32>
    %152 = vector.broadcast %151 : vector<8x1xf32> to vector<8x128xf32>
    %153 = vector.broadcast %cst_57 : f32 to vector<8x128xf32>
    %154 = arith.select %150, %152, %153 : vector<8x128xi1>, vector<8x128xf32>
    %155 = arith.addf %148, %154 : vector<8x128xf32>
    %c2_i32 = arith.constant 2 : i32
    %156 = vector.broadcast %c2_i32 : i32 to vector<8x128xi32>
    %157 = arith.cmpi eq, %142, %156 : vector<8x128xi32>
    %cst_58 = arith.constant 0.000000e+00 : f32
    %158 = vector.shape_cast %88 : vector<8x1xf32> to vector<8x1xf32>
    %159 = vector.broadcast %158 : vector<8x1xf32> to vector<8x128xf32>
    %160 = vector.broadcast %cst_58 : f32 to vector<8x128xf32>
    %161 = arith.select %157, %159, %160 : vector<8x128xi1>, vector<8x128xf32>
    %162 = arith.addf %155, %161 : vector<8x128xf32>
    %c3_i32 = arith.constant 3 : i32
    %163 = vector.broadcast %c3_i32 : i32 to vector<8x128xi32>
    %164 = arith.cmpi eq, %142, %163 : vector<8x128xi32>
    %cst_59 = arith.constant 0.000000e+00 : f32
    %165 = vector.shape_cast %141 : vector<8x1xf32> to vector<8x1xf32>
    %166 = vector.broadcast %165 : vector<8x1xf32> to vector<8x128xf32>
    %167 = vector.broadcast %cst_59 : f32 to vector<8x128xf32>
    %168 = arith.select %164, %166, %167 : vector<8x128xi1>, vector<8x128xf32>
    %169 = arith.addf %162, %168 : vector<8x128xf32>
    %c0_60 = arith.constant 0 : index
    %c0_61 = arith.constant 0 : index
    %170 = vector.load %arg12[%c0_60, %c0_61] : memref<8x128xf32, #tpu.memory_space<vmem>>, vector<8x128xf32>
    tpu.vector_store %arg12[%c0_60, %c0_61], %169 {strides = array<i32>} : memref<8x128xf32, #tpu.memory_space<vmem>>, vector<8x128xf32>,
    return
  }
  func.func @transform_0(%arg0: i32) -> (i32, i32) {
    %c0_i32 = arith.constant 0 : i32
    %c0_i32_0 = arith.constant 0 : i32
    %c0_i32_1 = arith.constant 0 : i32
    return %c0_i32, %c0_i32_0 : i32, i32
  }
  func.func @transform_1(%arg0: i32) -> (i32, i32) {
    %c0_i32 = arith.constant 0 : i32
    %c0_i32_0 = arith.constant 0 : i32
    %c0_i32_1 = arith.constant 0 : i32
    return %c0_i32, %c0_i32_0 : i32, i32
  }
  func.func @transform_2(%arg0: i32) -> (i32, i32) {
    %c0_i32 = arith.constant 0 : i32
    %c0_i32_0 = arith.constant 0 : i32
    %c0_i32_1 = arith.constant 0 : i32
    return %c0_i32, %c0_i32_0 : i32, i32
  }
  func.func @transform_3(%arg0: i32) -> (i32, i32) {
    %c0_i32 = arith.constant 0 : i32
    %c0_i32_0 = arith.constant 0 : i32
    %c0_i32_1 = arith.constant 0 : i32
    return %c0_i32, %c0_i32_0 : i32, i32
  }
  func.func @transform_4(%arg0: i32) -> (i32, i32) {
    %c0_i32 = arith.constant 0 : i32
    %c0_i32_0 = arith.constant 0 : i32
    %c0_i32_1 = arith.constant 0 : i32
    return %c0_i32, %c0_i32_0 : i32, i32
  }
  func.func @transform_5(%arg0: i32) -> (i32, i32) {
    %c0_i32 = arith.constant 0 : i32
    %c0_i32_0 = arith.constant 0 : i32
    %c0_i32_1 = arith.constant 0 : i32
    return %c0_i32, %c0_i32_0 : i32, i32
  }
  func.func @transform_6(%arg0: i32) -> (i32, i32) {
    %c0_i32 = arith.constant 0 : i32
    %c0_i32_0 = arith.constant 0 : i32
    %c0_i32_1 = arith.constant 0 : i32
    return %c0_i32, %c0_i32_0 : i32, i32
  }
  func.func @transform_7(%arg0: i32) -> (i32, i32) {
    %c0_i32 = arith.constant 0 : i32
    %c0_i32_0 = arith.constant 0 : i32
    %c0_i32_1 = arith.constant 0 : i32
    return %c0_i32, %c0_i32_0 : i32, i32
  }
  func.func @transform_8(%arg0: i32) -> (i32, i32) {
    %c0_i32 = arith.constant 0 : i32
    %c0_i32_0 = arith.constant 0 : i32
    %c0_i32_1 = arith.constant 0 : i32
    return %c0_i32, %c0_i32_0 : i32, i32
  }
  func.func @transform_9(%arg0: i32) -> (i32, i32) {
    %c0_i32 = arith.constant 0 : i32
    %c0_i32_0 = arith.constant 0 : i32
    %c0_i32_1 = arith.constant 0 : i32
    return %c0_i32, %c0_i32_0 : i32, i32
  }
  func.func @transform_10(%arg0: i32) -> (i32, i32) {
    %c0_i32 = arith.constant 0 : i32
    %c0_i32_0 = arith.constant 0 : i32
    %c0_i32_1 = arith.constant 0 : i32
    return %c0_i32, %c0_i32_0 : i32, i32
  }
  func.func @transform_11(%arg0: i32) -> (i32, i32) {
    %c0_i32 = arith.constant 0 : i32
    %c0_i32_0 = arith.constant 0 : i32
    %c0_i32_1 = arith.constant 0 : i32
    return %c0_i32, %c0_i32_0 : i32, i32
  }
}

</mosaic_0001>

<llo_original>
// kernel: paicm_forward.3
$region0: #{paicm_forward.3}
  #allocation0 [shape = 'u32[]', space=smem, size = 0x4, offset = 0x4, fixed_abs, tag = 'smem constant byte address 0x4 - core index']
  #allocation1 [shape = 'u32[144,128]{1,0:T(1,128)}', space=vmem, size = 0x12000, scoped, tag = 'internal scratch']
  #allocation2 [shape = 'f32[128,256]{1,0:T(8,128)}', space=vmem, size = 0x20000, scoped, tag = 'scratch operand']
  %s0 = inlined_call_operand.vmem [shape: bf16[128,16], index: 0, kind: input, shape index: {}]
  %s1 = inlined_call_operand.vmem [shape: f32[16,256], index: 1, kind: input, shape index: {}]
  %s2 = inlined_call_operand.vmem [shape: bf16[128,256], index: 2, kind: input, shape index: {}]
  %s3 = inlined_call_operand.vmem [shape: bf16[128,16], index: 3, kind: input, shape index: {}]
  %s4 = inlined_call_operand.vmem [shape: f32[16,256], index: 4, kind: input, shape index: {}]
  %s5 = inlined_call_operand.vmem [shape: bf16[128,256], index: 5, kind: input, shape index: {}]
  %s6 = inlined_call_operand.vmem [shape: f32[8,128], index: 6, kind: output, shape index: {}]
  %s7 = sld [smem:[#allocation0]]
  $region42: #{paicm_forward.3} parent=0
    _
  %s9 = ssub.s32 1, %s7
  %s10 = scalar_select 0, %s9, %s7
  // Predicated region
  $region2: #{paicm_forward.3} parent=0 // pred_check
    _
  $region3: #{paicm_forward.3} parent=0 // pred_check_branch
    %12 = sbr.rel (0) target = $region5
  $region4: #{paicm_forward.3} parent=0 // pred_region
    _
  $region5: #{paicm_forward.3} parent=0 // pred_fallthru
    _
  // Predicated region
  $region6: #{paicm_forward.3} parent=0 // pred_check
    _
  $region7: #{paicm_forward.3} parent=0 // pred_check_branch
    %14 = sbr.rel (0) target = $region9
  $region8: #{paicm_forward.3} parent=0 // pred_region
    %s15 = sadd.s32 0, 0
    %p16 = scmp.lt.s32.totalorder %s15, 0
    %s17 = scalar_select %p16, %s15, 0
    %s18 = smul.u32 2, %s17
    %p19 = scmp.lt.s32.totalorder %s18, 1
    %s20 = scalar_select %p19, %s18, 1
    %s21 = smul.addr %s20, 8
    %s22 = scalar_lea.vmem %s1, %s21
    %s23 = sadd.s32 0, 0
    %p24 = scmp.lt.s32.totalorder %s23, 0
    %s25 = scalar_select %p24, %s23, 0
    %s26 = smul.u32 2, %s25
  $region9: #{paicm_forward.3} parent=0 // pred_fallthru
    _
  // Predicated region
  $region10: #{paicm_forward.3} parent=0 // pred_check
    _
  $region11: #{paicm_forward.3} parent=0 // pred_check_branch
    %28 = sbr.rel (0) target = $region13
  $region12: #{paicm_forward.3} parent=0 // pred_region
    %s29 = sadd.s32 0, 0
    %p30 = scmp.lt.s32.totalorder %s29, 0
    %s31 = scalar_select %p30, %s29, 0
    %s32 = smul.u32 2, %s31
    %p33 = scmp.lt.s32.totalorder %s32, 1
    %s34 = scalar_select %p33, %s32, 1
    %s35 = smul.addr %s34, 4
    %s36 = scalar_lea.vmem %s2, %s35
    %s37 = sadd.s32 0, 0
    %p38 = scmp.lt.s32.totalorder %s37, 0
    %s39 = scalar_select %p38, %s37, 0
    %s40 = smul.u32 2, %s39
  $region13: #{paicm_forward.3} parent=0 // pred_fallthru
    _
  // Predicated region
  $region14: #{paicm_forward.3} parent=0 // pred_check
    _
  $region15: #{paicm_forward.3} parent=0 // pred_check_branch
    %42 = sbr.rel (0) target = $region17
  $region16: #{paicm_forward.3} parent=0 // pred_region
    _
  $region17: #{paicm_forward.3} parent=0 // pred_fallthru
    _
  // Predicated region
  $region18: #{paicm_forward.3} parent=0 // pred_check
    _
  $region19: #{paicm_forward.3} parent=0 // pred_check_branch
    %44 = sbr.rel (0) target = $region21
  $region20: #{paicm_forward.3} parent=0 // pred_region
    %s45 = sadd.s32 0, 0
    %p46 = scmp.lt.s32.totalorder %s45, 0
    %s47 = scalar_select %p46, %s45, 0
    %s48 = smul.u32 2, %s47
    %p49 = scmp.lt.s32.totalorder %s48, 1
    %s50 = scalar_select %p49, %s48, 1
    %s51 = smul.addr %s50, 8
    %s52 = scalar_lea.vmem %s4, %s51
    %s53 = sadd.s32 0, 0
    %p54 = scmp.lt.s32.totalorder %s53, 0
    %s55 = scalar_select %p54, %s53, 0
    %s56 = smul.u32 2, %s55
  $region21: #{paicm_forward.3} parent=0 // pred_fallthru
    _
  // Predicated region
  $region22: #{paicm_forward.3} parent=0 // pred_check
    _
  $region23: #{paicm_forward.3} parent=0 // pred_check_branch
    %58 = sbr.rel (0) target = $region25
  $region24: #{paicm_forward.3} parent=0 // pred_region
    %s59 = sadd.s32 0, 0
    %p60 = scmp.lt.s32.totalorder %s59, 0
    %s61 = scalar_select %p60, %s59, 0
    %s62 = smul.u32 2, %s61
    %p63 = scmp.lt.s32.totalorder %s62, 1
    %s64 = scalar_select %p63, %s62, 1
    %s65 = smul.addr %s64, 4
    %s66 = scalar_lea.vmem %s5, %s65
    %s67 = sadd.s32 0, 0
    %p68 = scmp.lt.s32.totalorder %s67, 0
    %s69 = scalar_select %p68, %s67, 0
    %s70 = smul.u32 2, %s69
  $region25: #{paicm_forward.3} parent=0 // pred_fallthru
    _
  %s71 = sadd.s32 0, 0
  %p72 = scmp.lt.s32.totalorder %s71, 0
  %s73 = scalar_select %p72, %s71, 0
  %s74 = smul.u32 2, %s73
  %p75 = scmp.lt.s32.totalorder %s74, 1
  %s76 = scalar_select %p75, %s74, 1
  %s77 = smul.addr %s76, 8
  %s78 = scalar_lea.vmem %s1, %s77
  %s79 = sadd.s32 0, 0
  %p80 = scmp.lt.s32.totalorder %s79, 0
  %s81 = scalar_select %p80, %s79, 0
  %s82 = smul.u32 2, %s81
  %p83 = scmp.lt.s32.totalorder %s82, 1
  %s84 = scalar_select %p83, %s82, 1
  %s85 = smul.addr %s84, 4
  %s86 = scalar_lea.vmem %s2, %s85
  %s87 = sadd.s32 0, 0
  %p88 = scmp.lt.s32.totalorder %s87, 0
  %s89 = scalar_select %p88, %s87, 0
  %s90 = smul.u32 2, %s89
  %p91 = scmp.lt.s32.totalorder %s90, 1
  %s92 = scalar_select %p91, %s90, 1
  %s93 = smul.addr %s92, 8
  %s94 = scalar_lea.vmem %s4, %s93
  %s95 = sadd.s32 0, 0
  %p96 = scmp.lt.s32.totalorder %s95, 0
  %s97 = scalar_select %p96, %s95, 0
  %s98 = smul.u32 2, %s97
  %p99 = scmp.lt.s32.totalorder %s98, 1
  %s100 = scalar_select %p99, %s98, 1
  %s101 = smul.addr %s100, 4
  %s102 = scalar_lea.vmem %s5, %s101
  %s103 = sadd.s32 0, 0
  %p104 = scmp.lt.s32.totalorder %s103, 0
  %s105 = scalar_select %p104, %s103, 0
  %s106 = smul.u32 2, %s105
  %p107 = scmp.lt.s32.totalorder %s106, 1
  %s108 = scalar_select %p107, %s106, 1
  %s109 = smul.addr %s108, 8
  %s110 = scalar_lea.vmem %s1, %s109
  %s111 = sadd.s32 0, 0
  %p112 = scmp.lt.s32.totalorder %s111, 0
  %s113 = scalar_select %p112, %s111, 0
  %s114 = smul.u32 2, %s113
  %s115 = sadd.s32 0, 0
  %p116 = scmp.lt.s32.totalorder %s115, 0
  %s117 = scalar_select %p116, %s115, 0
  %s118 = smul.u32 2, %s117
  %p119 = scmp.lt.s32.totalorder %s118, 1
  %s120 = scalar_select %p119, %s118, 1
  %s121 = smul.addr %s120, 4
  %s122 = scalar_lea.vmem %s2, %s121
  %s123 = sadd.s32 0, 0
  %p124 = scmp.lt.s32.totalorder %s123, 0
  %s125 = scalar_select %p124, %s123, 0
  %s126 = smul.u32 2, %s125
  %s127 = sadd.s32 0, 0
  %p128 = scmp.lt.s32.totalorder %s127, 0
  %s129 = scalar_select %p128, %s127, 0
  %s130 = smul.u32 2, %s129
  %p131 = scmp.lt.s32.totalorder %s130, 1
  %s132 = scalar_select %p131, %s130, 1
  %s133 = smul.addr %s132, 8
  %s134 = scalar_lea.vmem %s4, %s133
  %s135 = sadd.s32 0, 0
  %p136 = scmp.lt.s32.totalorder %s135, 0
  %s137 = scalar_select %p136, %s135, 0
  %s138 = smul.u32 2, %s137
  %s139 = sadd.s32 0, 0
  %p140 = scmp.lt.s32.totalorder %s139, 0
  %s141 = scalar_select %p140, %s139, 0
  %s142 = smul.u32 2, %s141
  %p143 = scmp.lt.s32.totalorder %s142, 1
  %s144 = scalar_select %p143, %s142, 1
  %s145 = smul.addr %s144, 4
  %s146 = scalar_lea.vmem %s5, %s145
  %s147 = sadd.s32 0, 0
  %p148 = scmp.lt.s32.totalorder %s147, 0
  %s149 = scalar_select %p148, %s147, 0
  %s150 = smul.u32 2, %s149
  %p152 = scmp.eq.s32.totalorder 0, 0
  // Predicated region
  $region26: #{paicm_forward.3} parent=0 // pred_check
    %p153 = pneg %p152
  $region27: #{paicm_forward.3} parent=0 // pred_check_branch
    %155 = sbr.rel (%p153) target = $region29
  $region28: #{paicm_forward.3} parent=0 // pred_region
    %156 = vst [vmem:[#allocation2] sm:$0xff] 0.0
    %157 = vst [vmem:[#allocation2 + $0x8] sm:$0xff] 0.0
    %158 = vst [vmem:[#allocation2 + $0x10] sm:$0xff] 0.0
    %159 = vst [vmem:[#allocation2 + $0x18] sm:$0xff] 0.0
    %160 = vst [vmem:[#allocation2 + $0x20] sm:$0xff] 0.0
    %161 = vst [vmem:[#allocation2 + $0x28] sm:$0xff] 0.0
    %162 = vst [vmem:[#allocation2 + $0x30] sm:$0xff] 0.0
    %163 = vst [vmem:[#allocation2 + $0x38] sm:$0xff] 0.0
    %164 = vst [vmem:[#allocation2 + $0x40] sm:$0xff] 0.0
    %165 = vst [vmem:[#allocation2 + $0x48] sm:$0xff] 0.0
    %166 = vst [vmem:[#allocation2 + $0x50] sm:$0xff] 0.0
    %167 = vst [vmem:[#allocation2 + $0x58] sm:$0xff] 0.0
    %168 = vst [vmem:[#allocation2 + $0x60] sm:$0xff] 0.0
    %169 = vst [vmem:[#allocation2 + $0x68] sm:$0xff] 0.0
    %170 = vst [vmem:[#allocation2 + $0x70] sm:$0xff] 0.0
    %171 = vst [vmem:[#allocation2 + $0x78] sm:$0xff] 0.0
    %172 = vst [vmem:[#allocation2 + $0x80] sm:$0xff] 0.0
    %173 = vst [vmem:[#allocation2 + $0x88] sm:$0xff] 0.0
    %174 = vst [vmem:[#allocation2 + $0x90] sm:$0xff] 0.0
    %175 = vst [vmem:[#allocation2 + $0x98] sm:$0xff] 0.0
    %176 = vst [vmem:[#allocation2 + $0xa0] sm:$0xff] 0.0
    %177 = vst [vmem:[#allocation2 + $0xa8] sm:$0xff] 0.0
    %178 = vst [vmem:[#allocation2 + $0xb0] sm:$0xff] 0.0
    %179 = vst [vmem:[#allocation2 + $0xb8] sm:$0xff] 0.0
    %180 = vst [vmem:[#allocation2 + $0xc0] sm:$0xff] 0.0
    %181 = vst [vmem:[#allocation2 + $0xc8] sm:$0xff] 0.0
    %182 = vst [vmem:[#allocation2 + $0xd0] sm:$0xff] 0.0
    %183 = vst [vmem:[#allocation2 + $0xd8] sm:$0xff] 0.0
    %184 = vst [vmem:[#allocation2 + $0xe0] sm:$0xff] 0.0
    %185 = vst [vmem:[#allocation2 + $0xe8] sm:$0xff] 0.0
    %186 = vst [vmem:[#allocation2 + $0xf0] sm:$0xff] 0.0
    %187 = vst [vmem:[#allocation2 + $0xf8] sm:$0xff] 0.0
  $region29: #{paicm_forward.3} parent=0 // pred_fallthru
    _
  %v188 = vld [vmem:[%s110] sm:$0xff]
  %v189 = vld [vmem:[%s110 + $0x8] sm:$0xff]
  %v190 = vld [vmem:[%s110 + $0x10] sm:$0xff]
  %v191 = vld [vmem:[%s110 + $0x18] sm:$0xff]
  %v192 = vmax.f32 %v188, 0.0
  %v193 = vmax.f32 %v189, 0.0
  %v194 = vmax.f32 %v190, 0.0
  %v195 = vmax.f32 %v191, 0.0
  %v196 = vpack.c.bf16 %v194, %v192
  %v197 = vpack.c.bf16 %v195, %v193
  %v198 = vld [vmem:[%s134] sm:$0xff]
  %v199 = vld [vmem:[%s134 + $0x8] sm:$0xff]
  %v200 = vld [vmem:[%s134 + $0x10] sm:$0xff]
  %v201 = vld [vmem:[%s134 + $0x18] sm:$0xff]
  %v202 = vmax.f32 %v198, 0.0
  %v203 = vmax.f32 %v199, 0.0
  %v204 = vmax.f32 %v200, 0.0
  %v205 = vmax.f32 %v201, 0.0
  %v206 = vpack.c.bf16 %v204, %v202
  %v207 = vpack.c.bf16 %v205, %v203
  %v208 = vld [vmem:[%s0] sm:$0xf]
  %v209 = vld [vmem:[%s0 + $0x4] sm:$0xf]
  %v210 = vld [vmem:[%s0 + $0x8] sm:$0xf]
  %v211 = vld [vmem:[%s0 + $0xc] sm:$0xf]
  %v212 = vld [vmem:[%s0 + $0x10] sm:$0xf]
  %v213 = vld [vmem:[%s0 + $0x14] sm:$0xf]
  %v214 = vld [vmem:[%s0 + $0x18] sm:$0xf]
  %v215 = vld [vmem:[%s0 + $0x1c] sm:$0xf]
  %v216 = vld [vmem:[%s0 + $0x20] sm:$0xf]
  %v217 = vld [vmem:[%s0 + $0x24] sm:$0xf]
  %v218 = vld [vmem:[%s0 + $0x28] sm:$0xf]
  %v219 = vld [vmem:[%s0 + $0x2c] sm:$0xf]
  %v220 = vld [vmem:[%s0 + $0x30] sm:$0xf]
  %v221 = vld [vmem:[%s0 + $0x34] sm:$0xf]
  %v222 = vld [vmem:[%s0 + $0x38] sm:$0xf]
  %v223 = vld [vmem:[%s0 + $0x3c] sm:$0xf]
  %v240 = vunpack.c.l.b16 %v208
  %v241 = vunpack.c.l.b16 %v209
  %v242 = vunpack.c.l.b16 %v210
  %v243 = vunpack.c.l.b16 %v211
  %v244 = vunpack.c.l.b16 %v212
  %v245 = vunpack.c.l.b16 %v213
  %v246 = vunpack.c.l.b16 %v214
  %v247 = vunpack.c.l.b16 %v215
  %v248 = vunpack.c.l.b16 %v216
  %v249 = vunpack.c.l.b16 %v217
  %v250 = vunpack.c.l.b16 %v218
  %v251 = vunpack.c.l.b16 %v219
  %v252 = vunpack.c.l.b16 %v220
  %v253 = vunpack.c.l.b16 %v221
  %v254 = vunpack.c.l.b16 %v222
  %v255 = vunpack.c.l.b16 %v223
  %v256 = vpack.c.b16 %v241, %v240
  %v257 = vpack.c.b16 %v243, %v242
  %v258 = vpack.c.b16 %v245, %v244
  %v259 = vpack.c.b16 %v247, %v246
  %v260 = vpack.c.b16 %v249, %v248
  %v261 = vpack.c.b16 %v251, %v250
  %v262 = vpack.c.b16 %v253, %v252
  %v263 = vpack.c.b16 %v255, %v254
  %vm264 = vcmask 130048
  %v266 = vsel %vm264, %v256, 0
  %v269 = vsel %vm264, %v257, 0
  %v272 = vsel %vm264, %v258, 0
  %v275 = vsel %vm264, %v259, 0
  %v278 = vsel %vm264, %v260, 0
  %v281 = vsel %vm264, %v261, 0
  %v284 = vsel %vm264, %v262, 0
  %v287 = vsel %vm264, %v263, 0
  %289 = vmatprep.subr.bf16.mxu0 %v197
  %290 = vmatpush1.bf16.msra.mxu0 %v196
  %291 = vmatprep.subr.bf16.mxu0 0
  %292 = vmatpush1.bf16.msra.mxu0 0
  %293 = vmatprep.subr.bf16.mxu0 0
  %294 = vmatpush1.bf16.msra.mxu0 0
  %295 = vmatprep.subr.bf16.mxu0 0
  %296 = vmatpush1.bf16.msra.mxu0 0
  %297 = vmatprep.subr.bf16.mxu0 0
  %298 = vmatpush1.bf16.msra.mxu0 0
  %299 = vmatprep.subr.bf16.mxu0 0
  %300 = vmatpush1.bf16.msra.mxu0 0
  %301 = vmatprep.subr.bf16.mxu0 0
  %302 = vmatpush1.bf16.msra.mxu0 0
  %303 = vmatprep.subr.bf16.mxu0 0
  %304 = vmatpush1.bf16.msra.mxu0 0
  %305 = vmatprep.subr.bf16.mxu0 0
  %306 = vmatpush1.bf16.msra.mxu0 0
  %307 = vmatprep.subr.bf16.mxu0 0
  %308 = vmatpush1.bf16.msra.mxu0 0
  %309 = vmatprep.subr.bf16.mxu0 0
  %310 = vmatpush1.bf16.msra.mxu0 0
  %311 = vmatprep.subr.bf16.mxu0 0
  %312 = vmatpush1.bf16.msra.mxu0 0
  %313 = vmatprep.subr.bf16.mxu0 0
  %314 = vmatpush1.bf16.msra.mxu0 0
  %315 = vmatprep.subr.bf16.mxu0 0
  %316 = vmatpush1.bf16.msra.mxu0 0
  %317 = vmatprep.subr.bf16.mxu0 0
  %318 = vmatpush1.bf16.msra.mxu0 0
  %319 = vmatprep.subr.bf16.mxu0 0
  %320 = vmatpush1.bf16.msra.mxu0 0
  %321 = vmatprep.mubr.bf16.mxu0 0
  %322 = vmatmul.mubr.bf16.gmra.mrb[0].mxu0 %v266
  %v323 = vpop.f32.mrb[0].mxu0
  %v324 = vadd.f32 0.0, %v323
  %v325 = vpop.f32.mrb[0].mxu0
  %v326 = vadd.f32 0.0, %v325
  %v327 = vpop.f32.mrb[0].mxu0
  %v328 = vadd.f32 0.0, %v327
  %v329 = vpop.f32.mrb[0].mxu0
  %v330 = vadd.f32 0.0, %v329
  %331 = vmatprep.mubr.bf16.mxu0 0
  %332 = vmatmul.mubr.bf16.gmra.mrb[0].mxu0 %v269
  %v333 = vpop.f32.mrb[0].mxu0
  %v334 = vadd.f32 0.0, %v333
  %v335 = vpop.f32.mrb[0].mxu0
  %v336 = vadd.f32 0.0, %v335
  %v337 = vpop.f32.mrb[0].mxu0
  %v338 = vadd.f32 0.0, %v337
  %v339 = vpop.f32.mrb[0].mxu0
  %v340 = vadd.f32 0.0, %v339
  %341 = vmatprep.mubr.bf16.mxu0 0
  %342 = vmatmul.mubr.bf16.gmra.mrb[0].mxu0 %v272
  %v343 = vpop.f32.mrb[0].mxu0
  %v344 = vadd.f32 0.0, %v343
  %v345 = vpop.f32.mrb[0].mxu0
  %v346 = vadd.f32 0.0, %v345
  %v347 = vpop.f32.mrb[0].mxu0
  %v348 = vadd.f32 0.0, %v347
  %v349 = vpop.f32.mrb[0].mxu0
  %v350 = vadd.f32 0.0, %v349
  %351 = vmatprep.mubr.bf16.mxu0 0
  %352 = vmatmul.mubr.bf16.gmra.mrb[0].mxu0 %v275
  %v353 = vpop.f32.mrb[0].mxu0
  %v354 = vadd.f32 0.0, %v353
  %v355 = vpop.f32.mrb[0].mxu0
  %v356 = vadd.f32 0.0, %v355
  %v357 = vpop.f32.mrb[0].mxu0
  %v358 = vadd.f32 0.0, %v357
  %v359 = vpop.f32.mrb[0].mxu0
  %v360 = vadd.f32 0.0, %v359
  %361 = vmatprep.mubr.bf16.mxu0 0
  %362 = vmatmul.mubr.bf16.gmra.mrb[0].mxu0 %v278
  %v363 = vpop.f32.mrb[0].mxu0
  %v364 = vadd.f32 0.0, %v363
  %v365 = vpop.f32.mrb[0].mxu0
  %v366 = vadd.f32 0.0, %v365
  %v367 = vpop.f32.mrb[0].mxu0
  %v368 = vadd.f32 0.0, %v367
  %v369 = vpop.f32.mrb[0].mxu0
  %v370 = vadd.f32 0.0, %v369
  %371 = vmatprep.mubr.bf16.mxu0 0
  %372 = vmatmul.mubr.bf16.gmra.mrb[0].mxu0 %v281
  %v373 = vpop.f32.mrb[0].mxu0
  %v374 = vadd.f32 0.0, %v373
  %v375 = vpop.f32.mrb[0].mxu0
  %v376 = vadd.f32 0.0, %v375
  %v377 = vpop.f32.mrb[0].mxu0
  %v378 = vadd.f32 0.0, %v377
  %v379 = vpop.f32.mrb[0].mxu0
  %v380 = vadd.f32 0.0, %v379
  %381 = vmatprep.mubr.bf16.mxu0 0
  %382 = vmatmul.mubr.bf16.gmra.mrb[0].mxu0 %v284
  %v383 = vpop.f32.mrb[0].mxu0
  %v384 = vadd.f32 0.0, %v383
  %v385 = vpop.f32.mrb[0].mxu0
  %v386 = vadd.f32 0.0, %v385
  %v387 = vpop.f32.mrb[0].mxu0
  %v388 = vadd.f32 0.0, %v387
  %v389 = vpop.f32.mrb[0].mxu0
  %v390 = vadd.f32 0.0, %v389
  %391 = vmatprep.mubr.bf16.mxu0 0
  %392 = vmatmul.mubr.bf16.gmra.mrb[0].mxu0 %v287
  %v393 = vpop.f32.mrb[0].mxu0
  %v394 = vadd.f32 0.0, %v393
  %v395 = vpop.f32.mrb[0].mxu0
  %v396 = vadd.f32 0.0, %v395
  %v397 = vpop.f32.mrb[0].mxu0
  %v398 = vadd.f32 0.0, %v397
  %v399 = vpop.f32.mrb[0].mxu0
  %v400 = vadd.f32 0.0, %v399
  %401 = vdwg.mxu0
  %v402 = vld [vmem:[%s3] sm:$0xf]
  %v403 = vld [vmem:[%s3 + $0x4] sm:$0xf]
  %v404 = vld [vmem:[%s3 + $0x8] sm:$0xf]
  %v405 = vld [vmem:[%s3 + $0xc] sm:$0xf]
  %v406 = vld [vmem:[%s3 + $0x10] sm:$0xf]
  %v407 = vld [vmem:[%s3 + $0x14] sm:$0xf]
  %v408 = vld [vmem:[%s3 + $0x18] sm:$0xf]
  %v409 = vld [vmem:[%s3 + $0x1c] sm:$0xf]
  %v410 = vld [vmem:[%s3 + $0x20] sm:$0xf]
  %v411 = vld [vmem:[%s3 + $0x24] sm:$0xf]
  %v412 = vld [vmem:[%s3 + $0x28] sm:$0xf]
  %v413 = vld [vmem:[%s3 + $0x2c] sm:$0xf]
  %v414 = vld [vmem:[%s3 + $0x30] sm:$0xf]
  %v415 = vld [vmem:[%s3 + $0x34] sm:$0xf]
  %v416 = vld [vmem:[%s3 + $0x38] sm:$0xf]
  %v417 = vld [vmem:[%s3 + $0x3c] sm:$0xf]
  %v434 = vunpack.c.l.b16 %v402
  %v435 = vunpack.c.l.b16 %v403
  %v436 = vunpack.c.l.b16 %v404
  %v437 = vunpack.c.l.b16 %v405
  %v438 = vunpack.c.l.b16 %v406
  %v439 = vunpack.c.l.b16 %v407
  %v440 = vunpack.c.l.b16 %v408
  %v441 = vunpack.c.l.b16 %v409
  %v442 = vunpack.c.l.b16 %v410
  %v443 = vunpack.c.l.b16 %v411
  %v444 = vunpack.c.l.b16 %v412
  %v445 = vunpack.c.l.b16 %v413
  %v446 = vunpack.c.l.b16 %v414
  %v447 = vunpack.c.l.b16 %v415
  %v448 = vunpack.c.l.b16 %v416
  %v449 = vunpack.c.l.b16 %v417
  %v450 = vpack.c.b16 %v435, %v434
  %v451 = vpack.c.b16 %v437, %v436
  %v452 = vpack.c.b16 %v439, %v438
  %v453 = vpack.c.b16 %v441, %v440
  %v454 = vpack.c.b16 %v443, %v442
  %v455 = vpack.c.b16 %v445, %v444
  %v456 = vpack.c.b16 %v447, %v446
  %v457 = vpack.c.b16 %v449, %v448
  %v459 = vsel %vm264, %v450, 0
  %v462 = vsel %vm264, %v451, 0
  %v465 = vsel %vm264, %v452, 0
  %v468 = vsel %vm264, %v453, 0
  %v471 = vsel %vm264, %v454, 0
  %v474 = vsel %vm264, %v455, 0
  %v477 = vsel %vm264, %v456, 0
  %v480 = vsel %vm264, %v457, 0
  %482 = vmatprep.subr.bf16.mxu0 %v207
  %483 = vmatpush1.bf16.msra.mxu0 %v206
  %484 = vmatprep.subr.bf16.mxu0 0
  %485 = vmatpush1.bf16.msra.mxu0 0
  %486 = vmatprep.subr.bf16.mxu0 0
  %487 = vmatpush1.bf16.msra.mxu0 0
  %488 = vmatprep.subr.bf16.mxu0 0
  %489 = vmatpush1.bf16.msra.mxu0 0
  %490 = vmatprep.subr.bf16.mxu0 0
  %491 = vmatpush1.bf16.msra.mxu0 0
  %492 = vmatprep.subr.bf16.mxu0 0
  %493 = vmatpush1.bf16.msra.mxu0 0
  %494 = vmatprep.subr.bf16.mxu0 0
  %495 = vmatpush1.bf16.msra.mxu0 0
  %496 = vmatprep.subr.bf16.mxu0 0
  %497 = vmatpush1.bf16.msra.mxu0 0
  %498 = vmatprep.subr.bf16.mxu0 0
  %499 = vmatpush1.bf16.msra.mxu0 0
  %500 = vmatprep.subr.bf16.mxu0 0
  %501 = vmatpush1.bf16.msra.mxu0 0
  %502 = vmatprep.subr.bf16.mxu0 0
  %503 = vmatpush1.bf16.msra.mxu0 0
  %504 = vmatprep.subr.bf16.mxu0 0
  %505 = vmatpush1.bf16.msra.mxu0 0
  %506 = vmatprep.subr.bf16.mxu0 0
  %507 = vmatpush1.bf16.msra.mxu0 0
  %508 = vmatprep.subr.bf16.mxu0 0
  %509 = vmatpush1.bf16.msra.mxu0 0
  %510 = vmatprep.subr.bf16.mxu0 0
  %511 = vmatpush1.bf16.msra.mxu0 0
  %512 = vmatprep.subr.bf16.mxu0 0
  %513 = vmatpush1.bf16.msra.mxu0 0
  %514 = vmatprep.mubr.bf16.mxu0 0
  %515 = vmatmul.mubr.bf16.gmra.mrb[0].mxu0 %v459
  %v516 = vpop.f32.mrb[0].mxu0
  %v517 = vadd.f32 0.0, %v516
  %v518 = vpop.f32.mrb[0].mxu0
  %v519 = vadd.f32 0.0, %v518
  %v520 = vpop.f32.mrb[0].mxu0
  %v521 = vadd.f32 0.0, %v520
  %v522 = vpop.f32.mrb[0].mxu0
  %v523 = vadd.f32 0.0, %v522
  %524 = vmatprep.mubr.bf16.mxu0 0
  %525 = vmatmul.mubr.bf16.gmra.mrb[0].mxu0 %v462
  %v526 = vpop.f32.mrb[0].mxu0
  %v527 = vadd.f32 0.0, %v526
  %v528 = vpop.f32.mrb[0].mxu0
  %v529 = vadd.f32 0.0, %v528
  %v530 = vpop.f32.mrb[0].mxu0
  %v531 = vadd.f32 0.0, %v530
  %v532 = vpop.f32.mrb[0].mxu0
  %v533 = vadd.f32 0.0, %v532
  %534 = vmatprep.mubr.bf16.mxu0 0
  %535 = vmatmul.mubr.bf16.gmra.mrb[0].mxu0 %v465
  %v536 = vpop.f32.mrb[0].mxu0
  %v537 = vadd.f32 0.0, %v536
  %v538 = vpop.f32.mrb[0].mxu0
  %v539 = vadd.f32 0.0, %v538
  %v540 = vpop.f32.mrb[0].mxu0
  %v541 = vadd.f32 0.0, %v540
  %v542 = vpop.f32.mrb[0].mxu0
  %v543 = vadd.f32 0.0, %v542
  %544 = vmatprep.mubr.bf16.mxu0 0
  %545 = vmatmul.mubr.bf16.gmra.mrb[0].mxu0 %v468
  %v546 = vpop.f32.mrb[0].mxu0
  %v547 = vadd.f32 0.0, %v546
  %v548 = vpop.f32.mrb[0].mxu0
  %v549 = vadd.f32 0.0, %v548
  %v550 = vpop.f32.mrb[0].mxu0
  %v551 = vadd.f32 0.0, %v550
  %v552 = vpop.f32.mrb[0].mxu0
  %v553 = vadd.f32 0.0, %v552
  %554 = vmatprep.mubr.bf16.mxu0 0
  %555 = vmatmul.mubr.bf16.gmra.mrb[0].mxu0 %v471
  %v556 = vpop.f32.mrb[0].mxu0
  %v557 = vadd.f32 0.0, %v556
  %v558 = vpop.f32.mrb[0].mxu0
  %v559 = vadd.f32 0.0, %v558
  %v560 = vpop.f32.mrb[0].mxu0
  %v561 = vadd.f32 0.0, %v560
  %v562 = vpop.f32.mrb[0].mxu0
  %v563 = vadd.f32 0.0, %v562
  %564 = vmatprep.mubr.bf16.mxu0 0
  %565 = vmatmul.mubr.bf16.gmra.mrb[0].mxu0 %v474
  %v566 = vpop.f32.mrb[0].mxu0
  %v567 = vadd.f32 0.0, %v566
  %v568 = vpop.f32.mrb[0].mxu0
  %v569 = vadd.f32 0.0, %v568
  %v570 = vpop.f32.mrb[0].mxu0
  %v571 = vadd.f32 0.0, %v570
  %v572 = vpop.f32.mrb[0].mxu0
  %v573 = vadd.f32 0.0, %v572
  %574 = vmatprep.mubr.bf16.mxu0 0
  %575 = vmatmul.mubr.bf16.gmra.mrb[0].mxu0 %v477
  %v576 = vpop.f32.mrb[0].mxu0
  %v577 = vadd.f32 0.0, %v576
  %v578 = vpop.f32.mrb[0].mxu0
  %v579 = vadd.f32 0.0, %v578
  %v580 = vpop.f32.mrb[0].mxu0
  %v581 = vadd.f32 0.0, %v580
  %v582 = vpop.f32.mrb[0].mxu0
  %v583 = vadd.f32 0.0, %v582
  %584 = vmatprep.mubr.bf16.mxu0 0
  %585 = vmatmul.mubr.bf16.gmra.mrb[0].mxu0 %v480
  %v586 = vpop.f32.mrb[0].mxu0
  %v587 = vadd.f32 0.0, %v586
  %v588 = vpop.f32.mrb[0].mxu0
  %v589 = vadd.f32 0.0, %v588
  %v590 = vpop.f32.mrb[0].mxu0
  %v591 = vadd.f32 0.0, %v590
  %v592 = vpop.f32.mrb[0].mxu0
  %v593 = vadd.f32 0.0, %v592
  %594 = vdwg.mxu0
  %v595 = vld [vmem:[%s122] sm:$0xff]
  %v596 = vld [vmem:[%s122 + $0x8] sm:$0xff]
  %v597 = vld [vmem:[%s122 + $0x10] sm:$0xff]
  %v598 = vld [vmem:[%s122 + $0x18] sm:$0xff]
  %v599 = vld [vmem:[%s122 + $0x20] sm:$0xff]
  %v600 = vld [vmem:[%s122 + $0x28] sm:$0xff]
  %v601 = vld [vmem:[%s122 + $0x30] sm:$0xff]
  %v602 = vld [vmem:[%s122 + $0x38] sm:$0xff]
  %v603 = vld [vmem:[%s122 + $0x40] sm:$0xff]
  %v604 = vld [vmem:[%s122 + $0x48] sm:$0xff]
  %v605 = vld [vmem:[%s122 + $0x50] sm:$0xff]
  %v606 = vld [vmem:[%s122 + $0x58] sm:$0xff]
  %v607 = vld [vmem:[%s122 + $0x60] sm:$0xff]
  %v608 = vld [vmem:[%s122 + $0x68] sm:$0xff]
  %v609 = vld [vmem:[%s122 + $0x70] sm:$0xff]
  %v610 = vld [vmem:[%s122 + $0x78] sm:$0xff]
  %v611 = vunpack.c.l.bf16 %v595
  %v612 = vunpack.c.h.bf16 %v595
  %v613 = vunpack.c.l.bf16 %v596
  %v614 = vunpack.c.h.bf16 %v596
  %v615 = vunpack.c.l.bf16 %v597
  %v616 = vunpack.c.h.bf16 %v597
  %v617 = vunpack.c.l.bf16 %v598
  %v618 = vunpack.c.h.bf16 %v598
  %v619 = vunpack.c.l.bf16 %v599
  %v620 = vunpack.c.h.bf16 %v599
  %v621 = vunpack.c.l.bf16 %v600
  %v622 = vunpack.c.h.bf16 %v600
  %v623 = vunpack.c.l.bf16 %v601
  %v624 = vunpack.c.h.bf16 %v601
  %v625 = vunpack.c.l.bf16 %v602
  %v626 = vunpack.c.h.bf16 %v602
  %v627 = vunpack.c.l.bf16 %v603
  %v628 = vunpack.c.h.bf16 %v603
  %v629 = vunpack.c.l.bf16 %v604
  %v630 = vunpack.c.h.bf16 %v604
  %v631 = vunpack.c.l.bf16 %v605
  %v632 = vunpack.c.h.bf16 %v605
  %v633 = vunpack.c.l.bf16 %v606
  %v634 = vunpack.c.h.bf16 %v606
  %v635 = vunpack.c.l.bf16 %v607
  %v636 = vunpack.c.h.bf16 %v607
  %v637 = vunpack.c.l.bf16 %v608
  %v638 = vunpack.c.h.bf16 %v608
  %v639 = vunpack.c.l.bf16 %v609
  %v640 = vunpack.c.h.bf16 %v609
  %v641 = vunpack.c.l.bf16 %v610
  %v642 = vunpack.c.h.bf16 %v610
  %v643 = vsub.f32 %v611, %v324
  %v644 = vsub.f32 %v612, %v326
  %v645 = vsub.f32 %v613, %v328
  %v646 = vsub.f32 %v614, %v330
  %v647 = vsub.f32 %v615, %v334
  %v648 = vsub.f32 %v616, %v336
  %v649 = vsub.f32 %v617, %v338
  %v650 = vsub.f32 %v618, %v340
  %v651 = vsub.f32 %v619, %v344
  %v652 = vsub.f32 %v620, %v346
  %v653 = vsub.f32 %v621, %v348
  %v654 = vsub.f32 %v622, %v350
  %v655 = vsub.f32 %v623, %v354
  %v656 = vsub.f32 %v624, %v356
  %v657 = vsub.f32 %v625, %v358
  %v658 = vsub.f32 %v626, %v360
  %v659 = vsub.f32 %v627, %v364
  %v660 = vsub.f32 %v628, %v366
  %v661 = vsub.f32 %v629, %v368
  %v662 = vsub.f32 %v630, %v370
  %v663 = vsub.f32 %v631, %v374
  %v664 = vsub.f32 %v632, %v376
  %v665 = vsub.f32 %v633, %v378
  %v666 = vsub.f32 %v634, %v380
  %v667 = vsub.f32 %v635, %v384
  %v668 = vsub.f32 %v636, %v386
  %v669 = vsub.f32 %v637, %v388
  %v670 = vsub.f32 %v638, %v390
  %v671 = vsub.f32 %v639, %v394
  %v672 = vsub.f32 %v640, %v396
  %v673 = vsub.f32 %v641, %v398
  %v674 = vsub.f32 %v642, %v400
  %v675 = vld [vmem:[%s146] sm:$0xff]
  %v676 = vld [vmem:[%s146 + $0x8] sm:$0xff]
  %v677 = vld [vmem:[%s146 + $0x10] sm:$0xff]
  %v678 = vld [vmem:[%s146 + $0x18] sm:$0xff]
  %v679 = vld [vmem:[%s146 + $0x20] sm:$0xff]
  %v680 = vld [vmem:[%s146 + $0x28] sm:$0xff]
  %v681 = vld [vmem:[%s146 + $0x30] sm:$0xff]
  %v682 = vld [vmem:[%s146 + $0x38] sm:$0xff]
  %v683 = vld [vmem:[%s146 + $0x40] sm:$0xff]
  %v684 = vld [vmem:[%s146 + $0x48] sm:$0xff]
  %v685 = vld [vmem:[%s146 + $0x50] sm:$0xff]
  %v686 = vld [vmem:[%s146 + $0x58] sm:$0xff]
  %v687 = vld [vmem:[%s146 + $0x60] sm:$0xff]
  %v688 = vld [vmem:[%s146 + $0x68] sm:$0xff]
  %v689 = vld [vmem:[%s146 + $0x70] sm:$0xff]
  %v690 = vld [vmem:[%s146 + $0x78] sm:$0xff]
  %v691 = vunpack.c.l.bf16 %v675
  %v692 = vunpack.c.h.bf16 %v675
  %v693 = vunpack.c.l.bf16 %v676
  %v694 = vunpack.c.h.bf16 %v676
  %v695 = vunpack.c.l.bf16 %v677
  %v696 = vunpack.c.h.bf16 %v677
  %v697 = vunpack.c.l.bf16 %v678
  %v698 = vunpack.c.h.bf16 %v678
  %v699 = vunpack.c.l.bf16 %v679
  %v700 = vunpack.c.h.bf16 %v679
  %v701 = vunpack.c.l.bf16 %v680
  %v702 = vunpack.c.h.bf16 %v680
  %v703 = vunpack.c.l.bf16 %v681
  %v704 = vunpack.c.h.bf16 %v681
  %v705 = vunpack.c.l.bf16 %v682
  %v706 = vunpack.c.h.bf16 %v682
  %v707 = vunpack.c.l.bf16 %v683
  %v708 = vunpack.c.h.bf16 %v683
  %v709 = vunpack.c.l.bf16 %v684
  %v710 = vunpack.c.h.bf16 %v684
  %v711 = vunpack.c.l.bf16 %v685
  %v712 = vunpack.c.h.bf16 %v685
  %v713 = vunpack.c.l.bf16 %v686
  %v714 = vunpack.c.h.bf16 %v686
  %v715 = vunpack.c.l.bf16 %v687
  %v716 = vunpack.c.h.bf16 %v687
  %v717 = vunpack.c.l.bf16 %v688
  %v718 = vunpack.c.h.bf16 %v688
  %v719 = vunpack.c.l.bf16 %v689
  %v720 = vunpack.c.h.bf16 %v689
  %v721 = vunpack.c.l.bf16 %v690
  %v722 = vunpack.c.h.bf16 %v690
  %v723 = vsub.f32 %v691, %v517
  %v724 = vsub.f32 %v692, %v519
  %v725 = vsub.f32 %v693, %v521
  %v726 = vsub.f32 %v694, %v523
  %v727 = vsub.f32 %v695, %v527
  %v728 = vsub.f32 %v696, %v529
  %v729 = vsub.f32 %v697, %v531
  %v730 = vsub.f32 %v698, %v533
  %v731 = vsub.f32 %v699, %v537
  %v732 = vsub.f32 %v700, %v539
  %v733 = vsub.f32 %v701, %v541
  %v734 = vsub.f32 %v702, %v543
  %v735 = vsub.f32 %v703, %v547
  %v736 = vsub.f32 %v704, %v549
  %v737 = vsub.f32 %v705, %v551
  %v738 = vsub.f32 %v706, %v553
  %v739 = vsub.f32 %v707, %v557
  %v740 = vsub.f32 %v708, %v559
  %v741 = vsub.f32 %v709, %v561
  %v742 = vsub.f32 %v710, %v563
  %v743 = vsub.f32 %v711, %v567
  %v744 = vsub.f32 %v712, %v569
  %v745 = vsub.f32 %v713, %v571
  %v746 = vsub.f32 %v714, %v573
  %v747 = vsub.f32 %v715, %v577
  %v748 = vsub.f32 %v716, %v579
  %v749 = vsub.f32 %v717, %v581
  %v750 = vsub.f32 %v718, %v583
  %v751 = vsub.f32 %v719, %v587
  %v752 = vsub.f32 %v720, %v589
  %v753 = vsub.f32 %v721, %v591
  %v754 = vsub.f32 %v722, %v593
  %s755 = sadd.s32 0, 0
  %s756 = smul.u32 %s755, 256
  %v757 = vlaneseq
  %v758 = vand.u32 %v757, 127
  %v759 = vadd.s32 %v758, 128
  %v760 = vstv %s756
  %v761 = vadd.s32 %v760, %v758
  %v762 = vadd.s32 %v760, %v759
  %vm763 = vcmp.lt.s32.totalorder %v761, 256
  %vm764 = vcmp.lt.s32.totalorder %v762, 256
  %v765 = vmul.f32 %v643, %v643
  %v766 = vmul.f32 %v644, %v644
  %v767 = vmul.f32 %v645, %v645
  %v768 = vmul.f32 %v646, %v646
  %v769 = vmul.f32 %v647, %v647
  %v770 = vmul.f32 %v648, %v648
  %v771 = vmul.f32 %v649, %v649
  %v772 = vmul.f32 %v650, %v650
  %v773 = vmul.f32 %v651, %v651
  %v774 = vmul.f32 %v652, %v652
  %v775 = vmul.f32 %v653, %v653
  %v776 = vmul.f32 %v654, %v654
  %v777 = vmul.f32 %v655, %v655
  %v778 = vmul.f32 %v656, %v656
  %v779 = vmul.f32 %v657, %v657
  %v780 = vmul.f32 %v658, %v658
  %v781 = vmul.f32 %v659, %v659
  %v782 = vmul.f32 %v660, %v660
  %v783 = vmul.f32 %v661, %v661
  %v784 = vmul.f32 %v662, %v662
  %v785 = vmul.f32 %v663, %v663
  %v786 = vmul.f32 %v664, %v664
  %v787 = vmul.f32 %v665, %v665
  %v788 = vmul.f32 %v666, %v666
  %v789 = vmul.f32 %v667, %v667
  %v790 = vmul.f32 %v668, %v668
  %v791 = vmul.f32 %v669, %v669
  %v792 = vmul.f32 %v670, %v670
  %v793 = vmul.f32 %v671, %v671
  %v794 = vmul.f32 %v672, %v672
  %v795 = vmul.f32 %v673, %v673
  %v796 = vmul.f32 %v674, %v674
  %v797 = vmul.f32 %v723, %v723
  %v798 = vmul.f32 %v724, %v724
  %v799 = vmul.f32 %v725, %v725
  %v800 = vmul.f32 %v726, %v726
  %v801 = vmul.f32 %v727, %v727
  %v802 = vmul.f32 %v728, %v728
  %v803 = vmul.f32 %v729, %v729
  %v804 = vmul.f32 %v730, %v730
  %v805 = vmul.f32 %v731, %v731
  %v806 = vmul.f32 %v732, %v732
  %v807 = vmul.f32 %v733, %v733
  %v808 = vmul.f32 %v734, %v734
  %v809 = vmul.f32 %v735, %v735
  %v810 = vmul.f32 %v736, %v736
  %v811 = vmul.f32 %v737, %v737
  %v812 = vmul.f32 %v738, %v738
  %v813 = vmul.f32 %v739, %v739
  %v814 = vmul.f32 %v740, %v740
  %v815 = vmul.f32 %v741, %v741
  %v816 = vmul.f32 %v742, %v742
  %v817 = vmul.f32 %v743, %v743
  %v818 = vmul.f32 %v744, %v744
  %v819 = vmul.f32 %v745, %v745
  %v820 = vmul.f32 %v746, %v746
  %v821 = vmul.f32 %v747, %v747
  %v822 = vmul.f32 %v748, %v748
  %v823 = vmul.f32 %v749, %v749
  %v824 = vmul.f32 %v750, %v750
  %v825 = vmul.f32 %v751, %v751
  %v826 = vmul.f32 %v752, %v752
  %v827 = vmul.f32 %v753, %v753
  %v828 = vmul.f32 %v754, %v754
  %v829 = vadd.f32 %v765, %v797
  %v830 = vadd.f32 %v766, %v798
  %v831 = vadd.f32 %v767, %v799
  %v832 = vadd.f32 %v768, %v800
  %v833 = vadd.f32 %v769, %v801
  %v834 = vadd.f32 %v770, %v802
  %v835 = vadd.f32 %v771, %v803
  %v836 = vadd.f32 %v772, %v804
  %v837 = vadd.f32 %v773, %v805
  %v838 = vadd.f32 %v774, %v806
  %v839 = vadd.f32 %v775, %v807
  %v840 = vadd.f32 %v776, %v808
  %v841 = vadd.f32 %v777, %v809
  %v842 = vadd.f32 %v778, %v810
  %v843 = vadd.f32 %v779, %v811
  %v844 = vadd.f32 %v780, %v812
  %v845 = vadd.f32 %v781, %v813
  %v846 = vadd.f32 %v782, %v814
  %v847 = vadd.f32 %v783, %v815
  %v848 = vadd.f32 %v784, %v816
  %v849 = vadd.f32 %v785, %v817
  %v850 = vadd.f32 %v786, %v818
  %v851 = vadd.f32 %v787, %v819
  %v852 = vadd.f32 %v788, %v820
  %v853 = vadd.f32 %v789, %v821
  %v854 = vadd.f32 %v790, %v822
  %v855 = vadd.f32 %v791, %v823
  %v856 = vadd.f32 %v792, %v824
  %v857 = vadd.f32 %v793, %v825
  %v858 = vadd.f32 %v794, %v826
  %v859 = vadd.f32 %v795, %v827
  %v860 = vadd.f32 %v796, %v828
  %v861 = vsel %vm763, %v829, 0.0
  %v862 = vsel %vm764, %v830, 0.0
  %v863 = vsel %vm763, %v831, 0.0
  %v864 = vsel %vm764, %v832, 0.0
  %v865 = vsel %vm763, %v833, 0.0
  %v866 = vsel %vm764, %v834, 0.0
  %v867 = vsel %vm763, %v835, 0.0
  %v868 = vsel %vm764, %v836, 0.0
  %v869 = vsel %vm763, %v837, 0.0
  %v870 = vsel %vm764, %v838, 0.0
  %v871 = vsel %vm763, %v839, 0.0
  %v872 = vsel %vm764, %v840, 0.0
  %v873 = vsel %vm763, %v841, 0.0
  %v874 = vsel %vm764, %v842, 0.0
  %v875 = vsel %vm763, %v843, 0.0
  %v876 = vsel %vm764, %v844, 0.0
  %v877 = vsel %vm763, %v845, 0.0
  %v878 = vsel %vm764, %v846, 0.0
  %v879 = vsel %vm763, %v847, 0.0
  %v880 = vsel %vm764, %v848, 0.0
  %v881 = vsel %vm763, %v849, 0.0
  %v882 = vsel %vm764, %v850, 0.0
  %v883 = vsel %vm763, %v851, 0.0
  %v884 = vsel %vm764, %v852, 0.0
  %v885 = vsel %vm763, %v853, 0.0
  %v886 = vsel %vm764, %v854, 0.0
  %v887 = vsel %vm763, %v855, 0.0
  %v888 = vsel %vm764, %v856, 0.0
  %v889 = vsel %vm763, %v857, 0.0
  %v890 = vsel %vm764, %v858, 0.0
  %v891 = vsel %vm763, %v859, 0.0
  %v892 = vsel %vm764, %v860, 0.0
  %v893 = vld [vmem:[#allocation2] sm:$0xff]
  %v894 = vld [vmem:[#allocation2 + $0x8] sm:$0xff]
  %v895 = vld [vmem:[#allocation2 + $0x10] sm:$0xff]
  %v896 = vld [vmem:[#allocation2 + $0x18] sm:$0xff]
  %v897 = vld [vmem:[#allocation2 + $0x20] sm:$0xff]
  %v898 = vld [vmem:[#allocation2 + $0x28] sm:$0xff]
  %v899 = vld [vmem:[#allocation2 + $0x30] sm:$0xff]
  %v900 = vld [vmem:[#allocation2 + $0x38] sm:$0xff]
  %v901 = vld [vmem:[#allocation2 + $0x40] sm:$0xff]
  %v902 = vld [vmem:[#allocation2 + $0x48] sm:$0xff]
  %v903 = vld [vmem:[#allocation2 + $0x50] sm:$0xff]
  %v904 = vld [vmem:[#allocation2 + $0x58] sm:$0xff]
  %v905 = vld [vmem:[#allocation2 + $0x60] sm:$0xff]
  %v906 = vld [vmem:[#allocation2 + $0x68] sm:$0xff]
  %v907 = vld [vmem:[#allocation2 + $0x70] sm:$0xff]
  %v908 = vld [vmem:[#allocation2 + $0x78] sm:$0xff]
  %v909 = vld [vmem:[#allocation2 + $0x80] sm:$0xff]
  %v910 = vld [vmem:[#allocation2 + $0x88] sm:$0xff]
  %v911 = vld [vmem:[#allocation2 + $0x90] sm:$0xff]
  %v912 = vld [vmem:[#allocation2 + $0x98] sm:$0xff]
  %v913 = vld [vmem:[#allocation2 + $0xa0] sm:$0xff]
  %v914 = vld [vmem:[#allocation2 + $0xa8] sm:$0xff]
  %v915 = vld [vmem:[#allocation2 + $0xb0] sm:$0xff]
  %v916 = vld [vmem:[#allocation2 + $0xb8] sm:$0xff]
  %v917 = vld [vmem:[#allocation2 + $0xc0] sm:$0xff]
  %v918 = vld [vmem:[#allocation2 + $0xc8] sm:$0xff]
  %v919 = vld [vmem:[#allocation2 + $0xd0] sm:$0xff]
  %v920 = vld [vmem:[#allocation2 + $0xd8] sm:$0xff]
  %v921 = vld [vmem:[#allocation2 + $0xe0] sm:$0xff]
  %v922 = vld [vmem:[#allocation2 + $0xe8] sm:$0xff]
  %v923 = vld [vmem:[#allocation2 + $0xf0] sm:$0xff]
  %v924 = vld [vmem:[#allocation2 + $0xf8] sm:$0xff]
  %v925 = vadd.f32 %v893, %v861
  %v926 = vadd.f32 %v894, %v862
  %v927 = vadd.f32 %v895, %v863
  %v928 = vadd.f32 %v896, %v864
  %v929 = vadd.f32 %v897, %v865
  %v930 = vadd.f32 %v898, %v866
  %v931 = vadd.f32 %v899, %v867
  %v932 = vadd.f32 %v900, %v868
  %v933 = vadd.f32 %v901, %v869
  %v934 = vadd.f32 %v902, %v870
  %v935 = vadd.f32 %v903, %v871
  %v936 = vadd.f32 %v904, %v872
  %v937 = vadd.f32 %v905, %v873
  %v938 = vadd.f32 %v906, %v874
  %v939 = vadd.f32 %v907, %v875
  %v940 = vadd.f32 %v908, %v876
  %v941 = vadd.f32 %v909, %v877
  %v942 = vadd.f32 %v910, %v878
  %v943 = vadd.f32 %v911, %v879
  %v944 = vadd.f32 %v912, %v880
  %v945 = vadd.f32 %v913, %v881
  %v946 = vadd.f32 %v914, %v882
  %v947 = vadd.f32 %v915, %v883
  %v948 = vadd.f32 %v916, %v884
  %v949 = vadd.f32 %v917, %v885
  %v950 = vadd.f32 %v918, %v886
  %v951 = vadd.f32 %v919, %v887
  %v952 = vadd.f32 %v920, %v888
  %v953 = vadd.f32 %v921, %v889
  %v954 = vadd.f32 %v922, %v890
  %v955 = vadd.f32 %v923, %v891
  %v956 = vadd.f32 %v924, %v892
  %957 = vst [vmem:[#allocation2] sm:$0xff] %v925
  %958 = vst [vmem:[#allocation2 + $0x8] sm:$0xff] %v926
  %959 = vst [vmem:[#allocation2 + $0x10] sm:$0xff] %v927
  %960 = vst [vmem:[#allocation2 + $0x18] sm:$0xff] %v928
  %961 = vst [vmem:[#allocation2 + $0x20] sm:$0xff] %v929
  %962 = vst [vmem:[#allocation2 + $0x28] sm:$0xff] %v930
  %963 = vst [vmem:[#allocation2 + $0x30] sm:$0xff] %v931
  %964 = vst [vmem:[#allocation2 + $0x38] sm:$0xff] %v932
  %965 = vst [vmem:[#allocation2 + $0x40] sm:$0xff] %v933
  %966 = vst [vmem:[#allocation2 + $0x48] sm:$0xff] %v934
  %967 = vst [vmem:[#allocation2 + $0x50] sm:$0xff] %v935
  %968 = vst [vmem:[#allocation2 + $0x58] sm:$0xff] %v936
  %969 = vst [vmem:[#allocation2 + $0x60] sm:$0xff] %v937
  %970 = vst [vmem:[#allocation2 + $0x68] sm:$0xff] %v938
  %971 = vst [vmem:[#allocation2 + $0x70] sm:$0xff] %v939
  %972 = vst [vmem:[#allocation2 + $0x78] sm:$0xff] %v940
  %973 = vst [vmem:[#allocation2 + $0x80] sm:$0xff] %v941
  %974 = vst [vmem:[#allocation2 + $0x88] sm:$0xff] %v942
  %975 = vst [vmem:[#allocation2 + $0x90] sm:$0xff] %v943
  %976 = vst [vmem:[#allocation2 + $0x98] sm:$0xff] %v944
  %977 = vst [vmem:[#allocation2 + $0xa0] sm:$0xff] %v945
  %978 = vst [vmem:[#allocation2 + $0xa8] sm:$0xff] %v946
  %979 = vst [vmem:[#allocation2 + $0xb0] sm:$0xff] %v947
  %980 = vst [vmem:[#allocation2 + $0xb8] sm:$0xff] %v948
  %981 = vst [vmem:[#allocation2 + $0xc0] sm:$0xff] %v949
  %982 = vst [vmem:[#allocation2 + $0xc8] sm:$0xff] %v950
  %983 = vst [vmem:[#allocation2 + $0xd0] sm:$0xff] %v951
  %984 = vst [vmem:[#allocation2 + $0xd8] sm:$0xff] %v952
  %985 = vst [vmem:[#allocation2 + $0xe0] sm:$0xff] %v953
  %986 = vst [vmem:[#allocation2 + $0xe8] sm:$0xff] %v954
  %987 = vst [vmem:[#allocation2 + $0xf0] sm:$0xff] %v955
  %988 = vst [vmem:[#allocation2 + $0xf8] sm:$0xff] %v956
  // Predicated region
  $region30: #{paicm_forward.3} parent=0 // pred_check
    %p989 = pneg %p152
  $region31: #{paicm_forward.3} parent=0 // pred_check_branch
    %991 = sbr.rel (%p989) target = $region33
  $region32: #{paicm_forward.3} parent=0 // pred_region
    %v992 = vld [vmem:[#allocation2] sm:$0xff]
    %v993 = vld [vmem:[#allocation2 + $0x8] sm:$0xff]
    %v994 = vld [vmem:[#allocation2 + $0x10] sm:$0xff]
    %v995 = vld [vmem:[#allocation2 + $0x18] sm:$0xff]
    %v996 = vld [vmem:[#allocation2 + $0x20] sm:$0xff]
    %v997 = vld [vmem:[#allocation2 + $0x28] sm:$0xff]
    %v998 = vld [vmem:[#allocation2 + $0x30] sm:$0xff]
    %v999 = vld [vmem:[#allocation2 + $0x38] sm:$0xff]
    %v1000 = vld [vmem:[#allocation2 + $0x40] sm:$0xff]
    %v1001 = vld [vmem:[#allocation2 + $0x48] sm:$0xff]
    %v1002 = vld [vmem:[#allocation2 + $0x50] sm:$0xff]
    %v1003 = vld [vmem:[#allocation2 + $0x58] sm:$0xff]
    %v1004 = vld [vmem:[#allocation2 + $0x60] sm:$0xff]
    %v1005 = vld [vmem:[#allocation2 + $0x68] sm:$0xff]
    %v1006 = vld [vmem:[#allocation2 + $0x70] sm:$0xff]
    %v1007 = vld [vmem:[#allocation2 + $0x78] sm:$0xff]
    %v1008 = vld [vmem:[#allocation2 + $0x80] sm:$0xff]
    %v1009 = vld [vmem:[#allocation2 + $0x88] sm:$0xff]
    %v1010 = vld [vmem:[#allocation2 + $0x90] sm:$0xff]
    %v1011 = vld [vmem:[#allocation2 + $0x98] sm:$0xff]
    %v1012 = vld [vmem:[#allocation2 + $0xa0] sm:$0xff]
    %v1013 = vld [vmem:[#allocation2 + $0xa8] sm:$0xff]
    %v1014 = vld [vmem:[#allocation2 + $0xb0] sm:$0xff]
    %v1015 = vld [vmem:[#allocation2 + $0xb8] sm:$0xff]
    %v1016 = vld [vmem:[#allocation2 + $0xc0] sm:$0xff]
    %v1017 = vld [vmem:[#allocation2 + $0xc8] sm:$0xff]
    %v1018 = vld [vmem:[#allocation2 + $0xd0] sm:$0xff]
    %v1019 = vld [vmem:[#allocation2 + $0xd8] sm:$0xff]
    %v1020 = vld [vmem:[#allocation2 + $0xe0] sm:$0xff]
    %v1021 = vld [vmem:[#allocation2 + $0xe8] sm:$0xff]
    %v1022 = vld [vmem:[#allocation2 + $0xf0] sm:$0xff]
    %v1023 = vld [vmem:[#allocation2 + $0xf8] sm:$0xff]
    %v1024 = vadd.f32 %v992, %v993
    %v1025 = vadd.f32 %v1024, %v994
    %v1026 = vadd.f32 %v1025, %v995
    %v1027 = vadd.f32 %v1026, %v996
    %v1028 = vadd.f32 %v1027, %v997
    %v1029 = vadd.f32 %v1028, %v998
    %v1030 = vadd.f32 %v1029, %v999
    %v1031 = vadd.f32 %v1030, %v1000
    %v1032 = vadd.f32 %v1031, %v1001
    %v1033 = vadd.f32 %v1032, %v1002
    %v1034 = vadd.f32 %v1033, %v1003
    %v1035 = vadd.f32 %v1034, %v1004
    %v1036 = vadd.f32 %v1035, %v1005
    %v1037 = vadd.f32 %v1036, %v1006
    %v1038 = vadd.f32 %v1037, %v1007
    %v1039 = vadd.f32 %v1038, %v1008
    %v1040 = vadd.f32 %v1039, %v1009
    %v1041 = vadd.f32 %v1040, %v1010
    %v1042 = vadd.f32 %v1041, %v1011
    %v1043 = vadd.f32 %v1042, %v1012
    %v1044 = vadd.f32 %v1043, %v1013
    %v1045 = vadd.f32 %v1044, %v1014
    %v1046 = vadd.f32 %v1045, %v1015
    %v1047 = vadd.f32 %v1046, %v1016
    %v1048 = vadd.f32 %v1047, %v1017
    %v1049 = vadd.f32 %v1048, %v1018
    %v1050 = vadd.f32 %v1049, %v1019
    %v1051 = vadd.f32 %v1050, %v1020
    %v1052 = vadd.f32 %v1051, %v1021
    %v1053 = vadd.f32 %v1052, %v1022
    %v1054 = vadd.f32 %v1053, %v1023
    %1055 = vadd.xlane.f32.xlu0 %v1054
    %v1056 = vpop.xlane.xlu0 %1055
    %v1057 = vrot.slane %v1056, 4
    %v1058 = vadd.f32 %v1056, %v1057
    %v1059 = vrot.slane %v1058, 2
    %v1060 = vadd.f32 %v1058, %v1059
    %v1061 = vrot.slane %v1060, 1
    %v1062 = vadd.f32 %v1060, %v1061
    %s1063 = vtos %v1062
    %v1064 = vlaneseq
    %v1065 = vshrl.u32 %v1064, 7
    %vm1066 = vcmp.eq.s32.totalorder %v1065, 0
    %vm1067 = vcmp.eq.s32.totalorder %v758, 0
    %vm1068 = vmand %vm1066, %vm1067
    %v1069 = vstv %s1063
    %v1070 = vsel %vm1068, %v1069, 0.0
    %1071 = vst [vmem:[%s6] sm:$0xff] %v1070
  $region33: #{paicm_forward.3} parent=0 // pred_fallthru
    _
  // Predicated region
  $region34: #{paicm_forward.3} parent=0 // pred_check
    _
  $region35: #{paicm_forward.3} parent=0 // pred_check_branch
    %1073 = sbr.rel (0) target = $region37
  $region36: #{paicm_forward.3} parent=0 // pred_region
    _
  $region37: #{paicm_forward.3} parent=0 // pred_fallthru
    _
  // Predicated region
  $region38: #{paicm_forward.3} parent=0 // pred_check
    _
  $region39: #{paicm_forward.3} parent=0 // pred_check_branch
    %1075 = sbr.rel (0) target = $region41
  $region40: #{paicm_forward.3} parent=0 // pred_region
    _
  $region41: #{paicm_forward.3} parent=0 // pred_fallthru
    _

// kernel: paicm_forward.2
$region0: #{paicm_forward.2}
  #allocation0 [shape = 'u32[]', space=smem, size = 0x4, offset = 0x4, fixed_abs, tag = 'smem constant byte address 0x4 - core index']
  #allocation1 [shape = 'u32[144,128]{1,0:T(1,128)}', space=vmem, size = 0x12000, scoped, tag = 'internal scratch']
  %s0 = inlined_call_operand.vmem [shape: f32[8,64], index: 0, kind: input, shape index: {}]
  %s1 = inlined_call_operand.vmem [shape: f32[8,64], index: 1, kind: input, shape index: {}]
  %s2 = inlined_call_operand.vmem [shape: f32[8,64], index: 2, kind: input, shape index: {}]
  %s3 = inlined_call_operand.vmem [shape: f32[64,16], index: 3, kind: input, shape index: {}]
  %s4 = inlined_call_operand.vmem [shape: f32[64,16], index: 4, kind: input, shape index: {}]
  %s5 = inlined_call_operand.vmem [shape: f32[64,16], index: 5, kind: input, shape index: {}]
  %s6 = inlined_call_operand.vmem [shape: f32[64,16], index: 6, kind: input, shape index: {}]
  %s7 = inlined_call_operand.vmem [shape: f32[64,32], index: 7, kind: input, shape index: {}]
  %s8 = inlined_call_operand.vmem [shape: f32[1,32], index: 8, kind: input, shape index: {}]
  %s9 = inlined_call_operand.vmem [shape: f32[64,32], index: 9, kind: input, shape index: {}]
  %s10 = inlined_call_operand.vmem [shape: f32[1,32], index: 10, kind: input, shape index: {}]
  %s11 = inlined_call_operand.vmem [shape: f32[8,128], index: 11, kind: output, shape index: {}]
  %s12 = sld [smem:[#allocation0]]
  $region54: #{paicm_forward.2} parent=0
    _
  %s14 = ssub.s32 1, %s12
  %s15 = scalar_select 0, %s14, %s12
  // Predicated region
  $region2: #{paicm_forward.2} parent=0 // pred_check
    _
  $region3: #{paicm_forward.2} parent=0 // pred_check_branch
    %17 = sbr.rel (0) target = $region5
  $region4: #{paicm_forward.2} parent=0 // pred_region
    _
  $region5: #{paicm_forward.2} parent=0 // pred_fallthru
    _
  // Predicated region
  $region6: #{paicm_forward.2} parent=0 // pred_check
    _
  $region7: #{paicm_forward.2} parent=0 // pred_check_branch
    %19 = sbr.rel (0) target = $region9
  $region8: #{paicm_forward.2} parent=0 // pred_region
    _
  $region9: #{paicm_forward.2} parent=0 // pred_fallthru
    _
  // Predicated region
  $region10: #{paicm_forward.2} parent=0 // pred_check
    _
  $region11: #{paicm_forward.2} parent=0 // pred_check_branch
    %21 = sbr.rel (0) target = $region13
  $region12: #{paicm_forward.2} parent=0 // pred_region
    _
  $region13: #{paicm_forward.2} parent=0 // pred_fallthru
    _
  // Predicated region
  $region14: #{paicm_forward.2} parent=0 // pred_check
    _
  $region15: #{paicm_forward.2} parent=0 // pred_check_branch
    %23 = sbr.rel (0) target = $region17
  $region16: #{paicm_forward.2} parent=0 // pred_region
    _
  $region17: #{paicm_forward.2} parent=0 // pred_fallthru
    _
  // Predicated region
  $region18: #{paicm_forward.2} parent=0 // pred_check
    _
  $region19: #{paicm_forward.2} parent=0 // pred_check_branch
    %25 = sbr.rel (0) target = $region21
  $region20: #{paicm_forward.2} parent=0 // pred_region
    _
  $region21: #{paicm_forward.2} parent=0 // pred_fallthru
    _
  // Predicated region
  $region22: #{paicm_forward.2} parent=0 // pred_check
    _
  $region23: #{paicm_forward.2} parent=0 // pred_check_branch
    %27 = sbr.rel (0) target = $region25
  $region24: #{paicm_forward.2} parent=0 // pred_region
    _
  $region25: #{paicm_forward.2} parent=0 // pred_fallthru
    _
  // Predicated region
  $region26: #{paicm_forward.2} parent=0 // pred_check
    _
  $region27: #{paicm_forward.2} parent=0 // pred_check_branch
    %29 = sbr.rel (0) target = $region29
  $region28: #{paicm_forward.2} parent=0 // pred_region
    _
  $region29: #{paicm_forward.2} parent=0 // pred_fallthru
    _
  // Predicated region
  $region30: #{paicm_forward.2} parent=0 // pred_check
    _
  $region31: #{paicm_forward.2} parent=0 // pred_check_branch
    %31 = sbr.rel (0) target = $region33
  $region32: #{paicm_forward.2} parent=0 // pred_region
    _
  $region33: #{paicm_forward.2} parent=0 // pred_fallthru
    _
  // Predicated region
  $region34: #{paicm_forward.2} parent=0 // pred_check
    _
  $region35: #{paicm_forward.2} parent=0 // pred_check_branch
    %33 = sbr.rel (0) target = $region37
  $region36: #{paicm_forward.2} parent=0 // pred_region
    _
  $region37: #{paicm_forward.2} parent=0 // pred_fallthru
    _
  // Predicated region
  $region38: #{paicm_forward.2} parent=0 // pred_check
    _
  $region39: #{paicm_forward.2} parent=0 // pred_check_branch
    %35 = sbr.rel (0) target = $region41
  $region40: #{paicm_forward.2} parent=0 // pred_region
    _
  $region41: #{paicm_forward.2} parent=0 // pred_fallthru
    _
  // Predicated region
  $region42: #{paicm_forward.2} parent=0 // pred_check
    _
  $region43: #{paicm_forward.2} parent=0 // pred_check_branch
    %37 = sbr.rel (0) target = $region45
  $region44: #{paicm_forward.2} parent=0 // pred_region
    _
  $region45: #{paicm_forward.2} parent=0 // pred_fallthru
    _
  %v38 = vld [vmem:[%s0] sm:$0xff]
  %v39 = vld [vmem:[%s1] sm:$0xff]
  %v40 = vld [vmem:[%s2] sm:$0xff]
  %v41 = vld [vmem:[%s7] sm:$0xff]
  %v42 = vld [vmem:[%s7 + $0x8] sm:$0xff]
  %v43 = vld [vmem:[%s7 + $0x10] sm:$0xff]
  %v44 = vld [vmem:[%s7 + $0x18] sm:$0xff]
  %v45 = vld [vmem:[%s7 + $0x20] sm:$0xff]
  %v46 = vld [vmem:[%s7 + $0x28] sm:$0xff]
  %v47 = vld [vmem:[%s7 + $0x30] sm:$0xff]
  %v48 = vld [vmem:[%s7 + $0x38] sm:$0xff]
  %v49 = vld [vmem:[%s8] sm:$0x1]
  %v50 = vld [vmem:[%s9] sm:$0xff]
  %v51 = vld [vmem:[%s9 + $0x8] sm:$0xff]
  %v52 = vld [vmem:[%s9 + $0x10] sm:$0xff]
  %v53 = vld [vmem:[%s9 + $0x18] sm:$0xff]
  %v54 = vld [vmem:[%s9 + $0x20] sm:$0xff]
  %v55 = vld [vmem:[%s9 + $0x28] sm:$0xff]
  %v56 = vld [vmem:[%s9 + $0x30] sm:$0xff]
  %v57 = vld [vmem:[%s9 + $0x38] sm:$0xff]
  %v58 = vld [vmem:[%s10] sm:$0x1]
  %v60 = vlaneseq
  %v61 = vshrl.u32 %v60, 7
  %v62 = vsub.s32 0, %v61
  %v63 = vrot.slane %v49, %v62
  %vm65 = vcmask 523264
  %v67 = vsel %vm65, %v38, 0
  %69 = vmatprep.subr.mxu0 0.0
  %70 = vmatpush1.msra.mxu0 %v41
  %71 = vmatprep.subr.mxu0 0.0
  %72 = vmatpush1.msra.mxu0 %v42
  %73 = vmatprep.subr.mxu0 0.0
  %74 = vmatpush1.msra.mxu0 %v43
  %75 = vmatprep.subr.mxu0 0.0
  %76 = vmatpush1.msra.mxu0 %v44
  %77 = vmatprep.subr.mxu0 0.0
  %78 = vmatpush1.msra.mxu0 %v45
  %79 = vmatprep.subr.mxu0 0.0
  %80 = vmatpush1.msra.mxu0 %v46
  %81 = vmatprep.subr.mxu0 0.0
  %82 = vmatpush1.msra.mxu0 %v47
  %83 = vmatprep.subr.mxu0 0.0
  %84 = vmatpush1.msra.mxu0 %v48
  %85 = vmatprep.subr.mxu0 0.0
  %86 = vmatpush1.msra.mxu0 0.0
  %87 = vmatprep.subr.mxu0 0.0
  %88 = vmatpush1.msra.mxu0 0.0
  %89 = vmatprep.subr.mxu0 0.0
  %90 = vmatpush1.msra.mxu0 0.0
  %91 = vmatprep.subr.mxu0 0.0
  %92 = vmatpush1.msra.mxu0 0.0
  %93 = vmatprep.subr.mxu0 0.0
  %94 = vmatpush1.msra.mxu0 0.0
  %95 = vmatprep.subr.mxu0 0.0
  %96 = vmatpush1.msra.mxu0 0.0
  %97 = vmatprep.subr.mxu0 0.0
  %98 = vmatpush1.msra.mxu0 0.0
  %99 = vmatprep.subr.mxu0 0.0
  %100 = vmatpush1.msra.mxu0 0.0
  %101 = vmatprep.subr.mxu0 0.0
  %102 = vmatpush1.msra.mxu0 0.0
  %103 = vmatprep.subr.mxu0 0.0
  %104 = vmatpush1.msra.mxu0 0.0
  %105 = vmatprep.subr.mxu0 0.0
  %106 = vmatpush1.msra.mxu0 0.0
  %107 = vmatprep.subr.mxu0 0.0
  %108 = vmatpush1.msra.mxu0 0.0
  %109 = vmatprep.subr.mxu0 0.0
  %110 = vmatpush1.msra.mxu0 0.0
  %111 = vmatprep.subr.mxu0 0.0
  %112 = vmatpush1.msra.mxu0 0.0
  %113 = vmatprep.subr.mxu0 0.0
  %114 = vmatpush1.msra.mxu0 0.0
  %115 = vmatprep.subr.mxu0 0.0
  %116 = vmatpush1.msra.mxu0 0.0
  %117 = vmatprep.subr.mxu0 0.0
  %118 = vmatpush1.msra.mxu0 0.0
  %119 = vmatprep.subr.mxu0 0.0
  %120 = vmatpush1.msra.mxu0 0.0
  %121 = vmatprep.subr.mxu0 0.0
  %122 = vmatpush1.msra.mxu0 0.0
  %123 = vmatprep.subr.mxu0 0.0
  %124 = vmatpush1.msra.mxu0 0.0
  %125 = vmatprep.subr.mxu0 0.0
  %126 = vmatpush1.msra.mxu0 0.0
  %127 = vmatprep.subr.mxu0 0.0
  %128 = vmatpush1.msra.mxu0 0.0
  %129 = vmatprep.subr.mxu0 0.0
  %130 = vmatpush1.msra.mxu0 0.0
  %131 = vmatprep.subr.mxu0 0.0
  %132 = vmatpush1.msra.mxu0 0.0
  %133 = vmatprep.mubr.f32.mxu0 0.0
  %134 = vmatmul.mubr.f32.gmra.mrb[0].mxu0 %v67
  %v135 = vpop.f32.mrb[0].mxu0
  %v136 = vadd.f32 %v63, %v135
  %v137 = vpop.f32.mrb[0].mxu0
  %138 = vdwg.mxu0
  %v139 = vxor.u32 %v136, 2147483648
  %v140 = vmul.f32 %v139, 1.442695
  %v141 = vpow.pop %v140
  %v142 = vadd.f32 %v141, 1.0
  %v143 = vrcp.pop %v142
  %v144 = vmul.f32 1.0, %v143
  %v146 = vlaneseq
  %v147 = vshrl.u32 %v146, 7
  %v148 = vsub.s32 0, %v147
  %v149 = vrot.slane %v58, %v148
  %v152 = vsel %vm65, %v39, 0
  %v155 = vsel %vm65, %v40, 0
  %157 = vmatprep.subr.mxu0 0.0
  %158 = vmatpush1.msra.mxu0 %v50
  %159 = vmatprep.subr.mxu0 0.0
  %160 = vmatpush1.msra.mxu0 %v51
  %161 = vmatprep.subr.mxu0 0.0
  %162 = vmatpush1.msra.mxu0 %v52
  %163 = vmatprep.subr.mxu0 0.0
  %164 = vmatpush1.msra.mxu0 %v53
  %165 = vmatprep.subr.mxu0 0.0
  %166 = vmatpush1.msra.mxu0 %v54
  %167 = vmatprep.subr.mxu0 0.0
  %168 = vmatpush1.msra.mxu0 %v55
  %169 = vmatprep.subr.mxu0 0.0
  %170 = vmatpush1.msra.mxu0 %v56
  %171 = vmatprep.subr.mxu0 0.0
  %172 = vmatpush1.msra.mxu0 %v57
  %173 = vmatprep.subr.mxu0 0.0
  %174 = vmatpush1.msra.mxu0 0.0
  %175 = vmatprep.subr.mxu0 0.0
  %176 = vmatpush1.msra.mxu0 0.0
  %177 = vmatprep.subr.mxu0 0.0
  %178 = vmatpush1.msra.mxu0 0.0
  %179 = vmatprep.subr.mxu0 0.0
  %180 = vmatpush1.msra.mxu0 0.0
  %181 = vmatprep.subr.mxu0 0.0
  %182 = vmatpush1.msra.mxu0 0.0
  %183 = vmatprep.subr.mxu0 0.0
  %184 = vmatpush1.msra.mxu0 0.0
  %185 = vmatprep.subr.mxu0 0.0
  %186 = vmatpush1.msra.mxu0 0.0
  %187 = vmatprep.subr.mxu0 0.0
  %188 = vmatpush1.msra.mxu0 0.0
  %189 = vmatprep.subr.mxu0 0.0
  %190 = vmatpush1.msra.mxu0 0.0
  %191 = vmatprep.subr.mxu0 0.0
  %192 = vmatpush1.msra.mxu0 0.0
  %193 = vmatprep.subr.mxu0 0.0
  %194 = vmatpush1.msra.mxu0 0.0
  %195 = vmatprep.subr.mxu0 0.0
  %196 = vmatpush1.msra.mxu0 0.0
  %197 = vmatprep.subr.mxu0 0.0
  %198 = vmatpush1.msra.mxu0 0.0
  %199 = vmatprep.subr.mxu0 0.0
  %200 = vmatpush1.msra.mxu0 0.0
  %201 = vmatprep.subr.mxu0 0.0
  %202 = vmatpush1.msra.mxu0 0.0
  %203 = vmatprep.subr.mxu0 0.0
  %204 = vmatpush1.msra.mxu0 0.0
  %205 = vmatprep.subr.mxu0 0.0
  %206 = vmatpush1.msra.mxu0 0.0
  %207 = vmatprep.subr.mxu0 0.0
  %208 = vmatpush1.msra.mxu0 0.0
  %209 = vmatprep.subr.mxu0 0.0
  %210 = vmatpush1.msra.mxu0 0.0
  %211 = vmatprep.subr.mxu0 0.0
  %212 = vmatpush1.msra.mxu0 0.0
  %213 = vmatprep.subr.mxu0 0.0
  %214 = vmatpush1.msra.mxu0 0.0
  %215 = vmatprep.subr.mxu0 0.0
  %216 = vmatpush1.msra.mxu0 0.0
  %217 = vmatprep.subr.mxu0 0.0
  %218 = vmatpush1.msra.mxu0 0.0
  %219 = vmatprep.subr.mxu0 0.0
  %220 = vmatpush1.msra.mxu0 0.0
  %221 = vmatprep.mubr.f32.mxu0 0.0
  %222 = vmatmul.mubr.f32.gmra.mrb[0].mxu0 %v152
  %v223 = vpop.f32.mrb[0].mxu0
  %v224 = vadd.f32 %v149, %v223
  %v225 = vpop.f32.mrb[0].mxu0
  %226 = vmatprep.mubr.f32.mxu0 0.0
  %227 = vmatmul.mubr.f32.gmra.mrb[0].mxu0 %v155
  %v228 = vpop.f32.mrb[0].mxu0
  %v229 = vadd.f32 %v149, %v228
  %v230 = vpop.f32.mrb[0].mxu0
  %231 = vdwg.mxu0
  %v232 = vxor.u32 %v224, 2147483648
  %v233 = vxor.u32 %v229, 2147483648
  %v234 = vmul.f32 %v232, 1.442695
  %v235 = vpow.pop %v234
  %v236 = vmul.f32 %v233, 1.442695
  %v237 = vpow.pop %v236
  %v238 = vadd.f32 %v235, 1.0
  %v239 = vadd.f32 %v237, 1.0
  %v240 = vrcp.pop %v238
  %v241 = vmul.f32 1.0, %v240
  %v242 = vrcp.pop %v239
  %v243 = vmul.f32 1.0, %v242
  %v244 = vmul.f32 %v144, %v241
  %vm245 = vcmask 261120
  %v246 = vsel %vm245, %v244, 0.0
  %247 = vadd.xlane.f32.xlu0 %v246
  %v248 = vpop.xlane.xlu0 %247
  %v249 = vmul.f32 %v144, %v243
  %v250 = vsel %vm245, %v249, 0.0
  %251 = vadd.xlane.f32.xlu0 %v250
  %v252 = vpop.xlane.xlu0 %251
  %v253 = vmul.f32 %v38, %v38
  %v254 = vsel %vm65, %v253, 0.0
  %255 = vadd.xlane.f32.xlu0 %v254
  %v256 = vpop.xlane.xlu0 %255
  %257 = vrot.lane.b32.xlu0 %v149, 32
  %v258 = vpop.permute.xlu0 %257
  %v260 = vsel %vm245, %v49, %v258
  %v261 = vld [vmem:[%s3] sm:$0xff]
  %v262 = vld [vmem:[%s3 + $0x8] sm:$0xff]
  %v263 = vld [vmem:[%s3 + $0x10] sm:$0xff]
  %v264 = vld [vmem:[%s3 + $0x18] sm:$0xff]
  %v265 = vld [vmem:[%s3 + $0x20] sm:$0xff]
  %v266 = vld [vmem:[%s3 + $0x28] sm:$0xff]
  %v267 = vld [vmem:[%s3 + $0x30] sm:$0xff]
  %v268 = vld [vmem:[%s3 + $0x38] sm:$0xff]
  %v269 = vld [vmem:[%s4] sm:$0xff]
  %v270 = vld [vmem:[%s4 + $0x8] sm:$0xff]
  %v271 = vld [vmem:[%s4 + $0x10] sm:$0xff]
  %v272 = vld [vmem:[%s4 + $0x18] sm:$0xff]
  %v273 = vld [vmem:[%s4 + $0x20] sm:$0xff]
  %v274 = vld [vmem:[%s4 + $0x28] sm:$0xff]
  %v275 = vld [vmem:[%s4 + $0x30] sm:$0xff]
  %v276 = vld [vmem:[%s4 + $0x38] sm:$0xff]
  %277 = vmatprep.subr.mxu0 0.0
  %v278 = vand.u32 %v269, 4294901760
  %279 = vmatpush1.msra.mxu0 %v278
  %280 = vmatprep.subr.mxu0 0.0
  %v281 = vand.u32 %v270, 4294901760
  %282 = vmatpush1.msra.mxu0 %v281
  %283 = vmatprep.subr.mxu0 0.0
  %v284 = vand.u32 %v271, 4294901760
  %285 = vmatpush1.msra.mxu0 %v284
  %286 = vmatprep.subr.mxu0 0.0
  %v287 = vand.u32 %v272, 4294901760
  %288 = vmatpush1.msra.mxu0 %v287
  %289 = vmatprep.subr.mxu0 0.0
  %v290 = vand.u32 %v273, 4294901760
  %291 = vmatpush1.msra.mxu0 %v290
  %292 = vmatprep.subr.mxu0 0.0
  %v293 = vand.u32 %v274, 4294901760
  %294 = vmatpush1.msra.mxu0 %v293
  %295 = vmatprep.subr.mxu0 0.0
  %v296 = vand.u32 %v275, 4294901760
  %297 = vmatpush1.msra.mxu0 %v296
  %298 = vmatprep.subr.mxu0 0.0
  %v299 = vand.u32 %v276, 4294901760
  %300 = vmatpush1.msra.mxu0 %v299
  %301 = vmatprep.subr.mxu0 0.0
  %302 = vmatpush1.msra.mxu0 0.0
  %303 = vmatprep.subr.mxu0 0.0
  %304 = vmatpush1.msra.mxu0 0.0
  %305 = vmatprep.subr.mxu0 0.0
  %306 = vmatpush1.msra.mxu0 0.0
  %307 = vmatprep.subr.mxu0 0.0
  %308 = vmatpush1.msra.mxu0 0.0
  %309 = vmatprep.subr.mxu0 0.0
  %310 = vmatpush1.msra.mxu0 0.0
  %311 = vmatprep.subr.mxu0 0.0
  %312 = vmatpush1.msra.mxu0 0.0
  %313 = vmatprep.subr.mxu0 0.0
  %314 = vmatpush1.msra.mxu0 0.0
  %315 = vmatprep.subr.mxu0 0.0
  %316 = vmatpush1.msra.mxu0 0.0
  %317 = vmatprep.subr.mxu0 0.0
  %318 = vmatpush1.msra.mxu0 0.0
  %319 = vmatprep.subr.mxu0 0.0
  %320 = vmatpush1.msra.mxu0 0.0
  %321 = vmatprep.subr.mxu0 0.0
  %322 = vmatpush1.msra.mxu0 0.0
  %323 = vmatprep.subr.mxu0 0.0
  %324 = vmatpush1.msra.mxu0 0.0
  %325 = vmatprep.subr.mxu0 0.0
  %326 = vmatpush1.msra.mxu0 0.0
  %327 = vmatprep.subr.mxu0 0.0
  %328 = vmatpush1.msra.mxu0 0.0
  %329 = vmatprep.subr.mxu0 0.0
  %330 = vmatpush1.msra.mxu0 0.0
  %331 = vmatprep.subr.mxu0 0.0
  %332 = vmatpush1.msra.mxu0 0.0
  %333 = vmatprep.subr.mxu0 0.0
  %334 = vmatpush1.msra.mxu0 0.0
  %335 = vmatprep.subr.mxu0 0.0
  %336 = vmatpush1.msra.mxu0 0.0
  %337 = vmatprep.subr.mxu0 0.0
  %338 = vmatpush1.msra.mxu0 0.0
  %339 = vmatprep.subr.mxu0 0.0
  %340 = vmatpush1.msra.mxu0 0.0
  %341 = vmatprep.subr.mxu0 0.0
  %342 = vmatpush1.msra.mxu0 0.0
  %343 = vmatprep.subr.mxu0 0.0
  %344 = vmatpush1.msra.mxu0 0.0
  %345 = vmatprep.subr.mxu0 0.0
  %346 = vmatpush1.msra.mxu0 0.0
  %347 = vmatprep.subr.mxu0 0.0
  %348 = vmatpush1.msra.mxu0 0.0
  %349 = vmatprep.mubr.f32.mxu0 0.0
  %v350 = vand.u32 %v152, 4294901760
  %v351 = vsub.f32 %v152, %v350
  %v352 = vand.u32 %v351, 4294901760
  %v353 = vsub.f32 %v351, %v352
  %v354 = vand.u32 %v353, 4294901760
  %355 = vmatmul.mubr.f32.gmra.mrb[0].mxu0 %v354
  %v356 = vpop.f32.mrb[0].mxu0
  %v357 = vadd.f32 0.0, %v356
  %v358 = vpop.f32.mrb[0].mxu0
  %359 = vdwg.mxu0
  %360 = vmatprep.subr.mxu0 0.0
  %v361 = vand.u32 %v269, 4294901760
  %v362 = vsub.f32 %v269, %v361
  %v363 = vand.u32 %v362, 4294901760
  %v364 = vsub.f32 %v362, %v363
  %v365 = vand.u32 %v364, 4294901760
  %366 = vmatpush1.msra.mxu0 %v365
  %367 = vmatprep.subr.mxu0 0.0
  %v368 = vand.u32 %v270, 4294901760
  %v369 = vsub.f32 %v270, %v368
  %v370 = vand.u32 %v369, 4294901760
  %v371 = vsub.f32 %v369, %v370
  %v372 = vand.u32 %v371, 4294901760
  %373 = vmatpush1.msra.mxu0 %v372
  %374 = vmatprep.subr.mxu0 0.0
  %v375 = vand.u32 %v271, 4294901760
  %v376 = vsub.f32 %v271, %v375
  %v377 = vand.u32 %v376, 4294901760
  %v378 = vsub.f32 %v376, %v377
  %v379 = vand.u32 %v378, 4294901760
  %380 = vmatpush1.msra.mxu0 %v379
  %381 = vmatprep.subr.mxu0 0.0
  %v382 = vand.u32 %v272, 4294901760
  %v383 = vsub.f32 %v272, %v382
  %v384 = vand.u32 %v383, 4294901760
  %v385 = vsub.f32 %v383, %v384
  %v386 = vand.u32 %v385, 4294901760
  %387 = vmatpush1.msra.mxu0 %v386
  %388 = vmatprep.subr.mxu0 0.0
  %v389 = vand.u32 %v273, 4294901760
  %v390 = vsub.f32 %v273, %v389
  %v391 = vand.u32 %v390, 4294901760
  %v392 = vsub.f32 %v390, %v391
  %v393 = vand.u32 %v392, 4294901760
  %394 = vmatpush1.msra.mxu0 %v393
  %395 = vmatprep.subr.mxu0 0.0
  %v396 = vand.u32 %v274, 4294901760
  %v397 = vsub.f32 %v274, %v396
  %v398 = vand.u32 %v397, 4294901760
  %v399 = vsub.f32 %v397, %v398
  %v400 = vand.u32 %v399, 4294901760
  %401 = vmatpush1.msra.mxu0 %v400
  %402 = vmatprep.subr.mxu0 0.0
  %v403 = vand.u32 %v275, 4294901760
  %v404 = vsub.f32 %v275, %v403
  %v405 = vand.u32 %v404, 4294901760
  %v406 = vsub.f32 %v404, %v405
  %v407 = vand.u32 %v406, 4294901760
  %408 = vmatpush1.msra.mxu0 %v407
  %409 = vmatprep.subr.mxu0 0.0
  %v410 = vand.u32 %v276, 4294901760
  %v411 = vsub.f32 %v276, %v410
  %v412 = vand.u32 %v411, 4294901760
  %v413 = vsub.f32 %v411, %v412
  %v414 = vand.u32 %v413, 4294901760
  %415 = vmatpush1.msra.mxu0 %v414
  %416 = vmatprep.subr.mxu0 0.0
  %417 = vmatpush1.msra.mxu0 0.0
  %418 = vmatprep.subr.mxu0 0.0
  %419 = vmatpush1.msra.mxu0 0.0
  %420 = vmatprep.subr.mxu0 0.0
  %421 = vmatpush1.msra.mxu0 0.0
  %422 = vmatprep.subr.mxu0 0.0
  %423 = vmatpush1.msra.mxu0 0.0
  %424 = vmatprep.subr.mxu0 0.0
  %425 = vmatpush1.msra.mxu0 0.0
  %426 = vmatprep.subr.mxu0 0.0
  %427 = vmatpush1.msra.mxu0 0.0
  %428 = vmatprep.subr.mxu0 0.0
  %429 = vmatpush1.msra.mxu0 0.0
  %430 = vmatprep.subr.mxu0 0.0
  %431 = vmatpush1.msra.mxu0 0.0
  %432 = vmatprep.subr.mxu0 0.0
  %433 = vmatpush1.msra.mxu0 0.0
  %434 = vmatprep.subr.mxu0 0.0
  %435 = vmatpush1.msra.mxu0 0.0
  %436 = vmatprep.subr.mxu0 0.0
  %437 = vmatpush1.msra.mxu0 0.0
  %438 = vmatprep.subr.mxu0 0.0
  %439 = vmatpush1.msra.mxu0 0.0
  %440 = vmatprep.subr.mxu0 0.0
  %441 = vmatpush1.msra.mxu0 0.0
  %442 = vmatprep.subr.mxu0 0.0
  %443 = vmatpush1.msra.mxu0 0.0
  %444 = vmatprep.subr.mxu0 0.0
  %445 = vmatpush1.msra.mxu0 0.0
  %446 = vmatprep.subr.mxu0 0.0
  %447 = vmatpush1.msra.mxu0 0.0
  %448 = vmatprep.subr.mxu0 0.0
  %449 = vmatpush1.msra.mxu0 0.0
  %450 = vmatprep.subr.mxu0 0.0
  %451 = vmatpush1.msra.mxu0 0.0
  %452 = vmatprep.subr.mxu0 0.0
  %453 = vmatpush1.msra.mxu0 0.0
  %454 = vmatprep.subr.mxu0 0.0
  %455 = vmatpush1.msra.mxu0 0.0
  %456 = vmatprep.subr.mxu0 0.0
  %457 = vmatpush1.msra.mxu0 0.0
  %458 = vmatprep.subr.mxu0 0.0
  %459 = vmatpush1.msra.mxu0 0.0
  %460 = vmatprep.subr.mxu0 0.0
  %461 = vmatpush1.msra.mxu0 0.0
  %462 = vmatprep.subr.mxu0 0.0
  %463 = vmatpush1.msra.mxu0 0.0
  %464 = vmatprep.mubr.f32.mxu0 0.0
  %v465 = vand.u32 %v152, 4294901760
  %466 = vmatmul.mubr.f32.gmra.mrb[0].mxu0 %v465
  %v467 = vpop.f32.mrb[0].mxu0
  %v468 = vadd.f32 %v357, %v467
  %v469 = vpop.f32.mrb[0].mxu0
  %470 = vdwg.mxu0
  %471 = vmatprep.subr.mxu0 0.0
  %v472 = vand.u32 %v269, 4294901760
  %v473 = vsub.f32 %v269, %v472
  %474 = vmatpush1.msra.mxu0 %v473
  %475 = vmatprep.subr.mxu0 0.0
  %v476 = vand.u32 %v270, 4294901760
  %v477 = vsub.f32 %v270, %v476
  %478 = vmatpush1.msra.mxu0 %v477
  %479 = vmatprep.subr.mxu0 0.0
  %v480 = vand.u32 %v271, 4294901760
  %v481 = vsub.f32 %v271, %v480
  %482 = vmatpush1.msra.mxu0 %v481
  %483 = vmatprep.subr.mxu0 0.0
  %v484 = vand.u32 %v272, 4294901760
  %v485 = vsub.f32 %v272, %v484
  %486 = vmatpush1.msra.mxu0 %v485
  %487 = vmatprep.subr.mxu0 0.0
  %v488 = vand.u32 %v273, 4294901760
  %v489 = vsub.f32 %v273, %v488
  %490 = vmatpush1.msra.mxu0 %v489
  %491 = vmatprep.subr.mxu0 0.0
  %v492 = vand.u32 %v274, 4294901760
  %v493 = vsub.f32 %v274, %v492
  %494 = vmatpush1.msra.mxu0 %v493
  %495 = vmatprep.subr.mxu0 0.0
  %v496 = vand.u32 %v275, 4294901760
  %v497 = vsub.f32 %v275, %v496
  %498 = vmatpush1.msra.mxu0 %v497
  %499 = vmatprep.subr.mxu0 0.0
  %v500 = vand.u32 %v276, 4294901760
  %v501 = vsub.f32 %v276, %v500
  %502 = vmatpush1.msra.mxu0 %v501
  %503 = vmatprep.subr.mxu0 0.0
  %504 = vmatpush1.msra.mxu0 0.0
  %505 = vmatprep.subr.mxu0 0.0
  %506 = vmatpush1.msra.mxu0 0.0
  %507 = vmatprep.subr.mxu0 0.0
  %508 = vmatpush1.msra.mxu0 0.0
  %509 = vmatprep.subr.mxu0 0.0
  %510 = vmatpush1.msra.mxu0 0.0
  %511 = vmatprep.subr.mxu0 0.0
  %512 = vmatpush1.msra.mxu0 0.0
  %513 = vmatprep.subr.mxu0 0.0
  %514 = vmatpush1.msra.mxu0 0.0
  %515 = vmatprep.subr.mxu0 0.0
  %516 = vmatpush1.msra.mxu0 0.0
  %517 = vmatprep.subr.mxu0 0.0
  %518 = vmatpush1.msra.mxu0 0.0
  %519 = vmatprep.subr.mxu0 0.0
  %520 = vmatpush1.msra.mxu0 0.0
  %521 = vmatprep.subr.mxu0 0.0
  %522 = vmatpush1.msra.mxu0 0.0
  %523 = vmatprep.subr.mxu0 0.0
  %524 = vmatpush1.msra.mxu0 0.0
  %525 = vmatprep.subr.mxu0 0.0
  %526 = vmatpush1.msra.mxu0 0.0
  %527 = vmatprep.subr.mxu0 0.0
  %528 = vmatpush1.msra.mxu0 0.0
  %529 = vmatprep.subr.mxu0 0.0
  %530 = vmatpush1.msra.mxu0 0.0
  %531 = vmatprep.subr.mxu0 0.0
  %532 = vmatpush1.msra.mxu0 0.0
  %533 = vmatprep.subr.mxu0 0.0
  %534 = vmatpush1.msra.mxu0 0.0
  %535 = vmatprep.subr.mxu0 0.0
  %536 = vmatpush1.msra.mxu0 0.0
  %537 = vmatprep.subr.mxu0 0.0
  %538 = vmatpush1.msra.mxu0 0.0
  %539 = vmatprep.subr.mxu0 0.0
  %540 = vmatpush1.msra.mxu0 0.0
  %541 = vmatprep.subr.mxu0 0.0
  %542 = vmatpush1.msra.mxu0 0.0
  %543 = vmatprep.subr.mxu0 0.0
  %544 = vmatpush1.msra.mxu0 0.0
  %545 = vmatprep.subr.mxu0 0.0
  %546 = vmatpush1.msra.mxu0 0.0
  %547 = vmatprep.subr.mxu0 0.0
  %548 = vmatpush1.msra.mxu0 0.0
  %549 = vmatprep.subr.mxu0 0.0
  %550 = vmatpush1.msra.mxu0 0.0
  %551 = vmatprep.mubr.f32.mxu0 0.0
  %v552 = vand.u32 %v152, 4294901760
  %v553 = vsub.f32 %v152, %v552
  %554 = vmatmul.mubr.f32.gmra.mrb[0].mxu0 %v553
  %v555 = vpop.f32.mrb[0].mxu0
  %v556 = vadd.f32 %v468, %v555
  %v557 = vpop.f32.mrb[0].mxu0
  %558 = vdwg.mxu0
  %559 = vmatprep.subr.mxu0 0.0
  %v560 = vand.u32 %v269, 4294901760
  %561 = vmatpush1.msra.mxu0 %v560
  %562 = vmatprep.subr.mxu0 0.0
  %v563 = vand.u32 %v270, 4294901760
  %564 = vmatpush1.msra.mxu0 %v563
  %565 = vmatprep.subr.mxu0 0.0
  %v566 = vand.u32 %v271, 4294901760
  %567 = vmatpush1.msra.mxu0 %v566
  %568 = vmatprep.subr.mxu0 0.0
  %v569 = vand.u32 %v272, 4294901760
  %570 = vmatpush1.msra.mxu0 %v569
  %571 = vmatprep.subr.mxu0 0.0
  %v572 = vand.u32 %v273, 4294901760
  %573 = vmatpush1.msra.mxu0 %v572
  %574 = vmatprep.subr.mxu0 0.0
  %v575 = vand.u32 %v274, 4294901760
  %576 = vmatpush1.msra.mxu0 %v575
  %577 = vmatprep.subr.mxu0 0.0
  %v578 = vand.u32 %v275, 4294901760
  %579 = vmatpush1.msra.mxu0 %v578
  %580 = vmatprep.subr.mxu0 0.0
  %v581 = vand.u32 %v276, 4294901760
  %582 = vmatpush1.msra.mxu0 %v581
  %583 = vmatprep.subr.mxu0 0.0
  %584 = vmatpush1.msra.mxu0 0.0
  %585 = vmatprep.subr.mxu0 0.0
  %586 = vmatpush1.msra.mxu0 0.0
  %587 = vmatprep.subr.mxu0 0.0
  %588 = vmatpush1.msra.mxu0 0.0
  %589 = vmatprep.subr.mxu0 0.0
  %590 = vmatpush1.msra.mxu0 0.0
  %591 = vmatprep.subr.mxu0 0.0
  %592 = vmatpush1.msra.mxu0 0.0
  %593 = vmatprep.subr.mxu0 0.0
  %594 = vmatpush1.msra.mxu0 0.0
  %595 = vmatprep.subr.mxu0 0.0
  %596 = vmatpush1.msra.mxu0 0.0
  %597 = vmatprep.subr.mxu0 0.0
  %598 = vmatpush1.msra.mxu0 0.0
  %599 = vmatprep.subr.mxu0 0.0
  %600 = vmatpush1.msra.mxu0 0.0
  %601 = vmatprep.subr.mxu0 0.0
  %602 = vmatpush1.msra.mxu0 0.0
  %603 = vmatprep.subr.mxu0 0.0
  %604 = vmatpush1.msra.mxu0 0.0
  %605 = vmatprep.subr.mxu0 0.0
  %606 = vmatpush1.msra.mxu0 0.0
  %607 = vmatprep.subr.mxu0 0.0
  %608 = vmatpush1.msra.mxu0 0.0
  %609 = vmatprep.subr.mxu0 0.0
  %610 = vmatpush1.msra.mxu0 0.0
  %611 = vmatprep.subr.mxu0 0.0
  %612 = vmatpush1.msra.mxu0 0.0
  %613 = vmatprep.subr.mxu0 0.0
  %614 = vmatpush1.msra.mxu0 0.0
  %615 = vmatprep.subr.mxu0 0.0
  %616 = vmatpush1.msra.mxu0 0.0
  %617 = vmatprep.subr.mxu0 0.0
  %618 = vmatpush1.msra.mxu0 0.0
  %619 = vmatprep.subr.mxu0 0.0
  %620 = vmatpush1.msra.mxu0 0.0
  %621 = vmatprep.subr.mxu0 0.0
  %622 = vmatpush1.msra.mxu0 0.0
  %623 = vmatprep.subr.mxu0 0.0
  %624 = vmatpush1.msra.mxu0 0.0
  %625 = vmatprep.subr.mxu0 0.0
  %626 = vmatpush1.msra.mxu0 0.0
  %627 = vmatprep.subr.mxu0 0.0
  %628 = vmatpush1.msra.mxu0 0.0
  %629 = vmatprep.subr.mxu0 0.0
  %630 = vmatpush1.msra.mxu0 0.0
  %631 = vmatprep.mubr.f32.mxu0 0.0
  %v632 = vand.u32 %v152, 4294901760
  %v633 = vsub.f32 %v152, %v632
  %v634 = vand.u32 %v633, 4294901760
  %635 = vmatmul.mubr.f32.gmra.mrb[0].mxu0 %v634
  %v636 = vpop.f32.mrb[0].mxu0
  %v637 = vadd.f32 %v556, %v636
  %v638 = vpop.f32.mrb[0].mxu0
  %639 = vdwg.mxu0
  %640 = vmatprep.subr.mxu0 0.0
  %v641 = vand.u32 %v269, 4294901760
  %v642 = vsub.f32 %v269, %v641
  %v643 = vand.u32 %v642, 4294901760
  %644 = vmatpush1.msra.mxu0 %v643
  %645 = vmatprep.subr.mxu0 0.0
  %v646 = vand.u32 %v270, 4294901760
  %v647 = vsub.f32 %v270, %v646
  %v648 = vand.u32 %v647, 4294901760
  %649 = vmatpush1.msra.mxu0 %v648
  %650 = vmatprep.subr.mxu0 0.0
  %v651 = vand.u32 %v271, 4294901760
  %v652 = vsub.f32 %v271, %v651
  %v653 = vand.u32 %v652, 4294901760
  %654 = vmatpush1.msra.mxu0 %v653
  %655 = vmatprep.subr.mxu0 0.0
  %v656 = vand.u32 %v272, 4294901760
  %v657 = vsub.f32 %v272, %v656
  %v658 = vand.u32 %v657, 4294901760
  %659 = vmatpush1.msra.mxu0 %v658
  %660 = vmatprep.subr.mxu0 0.0
  %v661 = vand.u32 %v273, 4294901760
  %v662 = vsub.f32 %v273, %v661
  %v663 = vand.u32 %v662, 4294901760
  %664 = vmatpush1.msra.mxu0 %v663
  %665 = vmatprep.subr.mxu0 0.0
  %v666 = vand.u32 %v274, 4294901760
  %v667 = vsub.f32 %v274, %v666
  %v668 = vand.u32 %v667, 4294901760
  %669 = vmatpush1.msra.mxu0 %v668
  %670 = vmatprep.subr.mxu0 0.0
  %v671 = vand.u32 %v275, 4294901760
  %v672 = vsub.f32 %v275, %v671
  %v673 = vand.u32 %v672, 4294901760
  %674 = vmatpush1.msra.mxu0 %v673
  %675 = vmatprep.subr.mxu0 0.0
  %v676 = vand.u32 %v276, 4294901760
  %v677 = vsub.f32 %v276, %v676
  %v678 = vand.u32 %v677, 4294901760
  %679 = vmatpush1.msra.mxu0 %v678
  %680 = vmatprep.subr.mxu0 0.0
  %681 = vmatpush1.msra.mxu0 0.0
  %682 = vmatprep.subr.mxu0 0.0
  %683 = vmatpush1.msra.mxu0 0.0
  %684 = vmatprep.subr.mxu0 0.0
  %685 = vmatpush1.msra.mxu0 0.0
  %686 = vmatprep.subr.mxu0 0.0
  %687 = vmatpush1.msra.mxu0 0.0
  %688 = vmatprep.subr.mxu0 0.0
  %689 = vmatpush1.msra.mxu0 0.0
  %690 = vmatprep.subr.mxu0 0.0
  %691 = vmatpush1.msra.mxu0 0.0
  %692 = vmatprep.subr.mxu0 0.0
  %693 = vmatpush1.msra.mxu0 0.0
  %694 = vmatprep.subr.mxu0 0.0
  %695 = vmatpush1.msra.mxu0 0.0
  %696 = vmatprep.subr.mxu0 0.0
  %697 = vmatpush1.msra.mxu0 0.0
  %698 = vmatprep.subr.mxu0 0.0
  %699 = vmatpush1.msra.mxu0 0.0
  %700 = vmatprep.subr.mxu0 0.0
  %701 = vmatpush1.msra.mxu0 0.0
  %702 = vmatprep.subr.mxu0 0.0
  %703 = vmatpush1.msra.mxu0 0.0
  %704 = vmatprep.subr.mxu0 0.0
  %705 = vmatpush1.msra.mxu0 0.0
  %706 = vmatprep.subr.mxu0 0.0
  %707 = vmatpush1.msra.mxu0 0.0
  %708 = vmatprep.subr.mxu0 0.0
  %709 = vmatpush1.msra.mxu0 0.0
  %710 = vmatprep.subr.mxu0 0.0
  %711 = vmatpush1.msra.mxu0 0.0
  %712 = vmatprep.subr.mxu0 0.0
  %713 = vmatpush1.msra.mxu0 0.0
  %714 = vmatprep.subr.mxu0 0.0
  %715 = vmatpush1.msra.mxu0 0.0
  %716 = vmatprep.subr.mxu0 0.0
  %717 = vmatpush1.msra.mxu0 0.0
  %718 = vmatprep.subr.mxu0 0.0
  %719 = vmatpush1.msra.mxu0 0.0
  %720 = vmatprep.subr.mxu0 0.0
  %721 = vmatpush1.msra.mxu0 0.0
  %722 = vmatprep.subr.mxu0 0.0
  %723 = vmatpush1.msra.mxu0 0.0
  %724 = vmatprep.subr.mxu0 0.0
  %725 = vmatpush1.msra.mxu0 0.0
  %726 = vmatprep.subr.mxu0 0.0
  %727 = vmatpush1.msra.mxu0 0.0
  %728 = vmatprep.mubr.f32.mxu0 0.0
  %v729 = vand.u32 %v152, 4294901760
  %730 = vmatmul.mubr.f32.gmra.mrb[0].mxu0 %v729
  %v731 = vpop.f32.mrb[0].mxu0
  %v732 = vadd.f32 %v637, %v731
  %v733 = vpop.f32.mrb[0].mxu0
  %734 = vdwg.mxu0
  %735 = vmatprep.subr.mxu0 0.0
  %v736 = vand.u32 %v269, 4294901760
  %737 = vmatpush1.msra.mxu0 %v736
  %738 = vmatprep.subr.mxu0 0.0
  %v739 = vand.u32 %v270, 4294901760
  %740 = vmatpush1.msra.mxu0 %v739
  %741 = vmatprep.subr.mxu0 0.0
  %v742 = vand.u32 %v271, 4294901760
  %743 = vmatpush1.msra.mxu0 %v742
  %744 = vmatprep.subr.mxu0 0.0
  %v745 = vand.u32 %v272, 4294901760
  %746 = vmatpush1.msra.mxu0 %v745
  %747 = vmatprep.subr.mxu0 0.0
  %v748 = vand.u32 %v273, 4294901760
  %749 = vmatpush1.msra.mxu0 %v748
  %750 = vmatprep.subr.mxu0 0.0
  %v751 = vand.u32 %v274, 4294901760
  %752 = vmatpush1.msra.mxu0 %v751
  %753 = vmatprep.subr.mxu0 0.0
  %v754 = vand.u32 %v275, 4294901760
  %755 = vmatpush1.msra.mxu0 %v754
  %756 = vmatprep.subr.mxu0 0.0
  %v757 = vand.u32 %v276, 4294901760
  %758 = vmatpush1.msra.mxu0 %v757
  %759 = vmatprep.subr.mxu0 0.0
  %760 = vmatpush1.msra.mxu0 0.0
  %761 = vmatprep.subr.mxu0 0.0
  %762 = vmatpush1.msra.mxu0 0.0
  %763 = vmatprep.subr.mxu0 0.0
  %764 = vmatpush1.msra.mxu0 0.0
  %765 = vmatprep.subr.mxu0 0.0
  %766 = vmatpush1.msra.mxu0 0.0
  %767 = vmatprep.subr.mxu0 0.0
  %768 = vmatpush1.msra.mxu0 0.0
  %769 = vmatprep.subr.mxu0 0.0
  %770 = vmatpush1.msra.mxu0 0.0
  %771 = vmatprep.subr.mxu0 0.0
  %772 = vmatpush1.msra.mxu0 0.0
  %773 = vmatprep.subr.mxu0 0.0
  %774 = vmatpush1.msra.mxu0 0.0
  %775 = vmatprep.subr.mxu0 0.0
  %776 = vmatpush1.msra.mxu0 0.0
  %777 = vmatprep.subr.mxu0 0.0
  %778 = vmatpush1.msra.mxu0 0.0
  %779 = vmatprep.subr.mxu0 0.0
  %780 = vmatpush1.msra.mxu0 0.0
  %781 = vmatprep.subr.mxu0 0.0
  %782 = vmatpush1.msra.mxu0 0.0
  %783 = vmatprep.subr.mxu0 0.0
  %784 = vmatpush1.msra.mxu0 0.0
  %785 = vmatprep.subr.mxu0 0.0
  %786 = vmatpush1.msra.mxu0 0.0
  %787 = vmatprep.subr.mxu0 0.0
  %788 = vmatpush1.msra.mxu0 0.0
  %789 = vmatprep.subr.mxu0 0.0
  %790 = vmatpush1.msra.mxu0 0.0
  %791 = vmatprep.subr.mxu0 0.0
  %792 = vmatpush1.msra.mxu0 0.0
  %793 = vmatprep.subr.mxu0 0.0
  %794 = vmatpush1.msra.mxu0 0.0
  %795 = vmatprep.subr.mxu0 0.0
  %796 = vmatpush1.msra.mxu0 0.0
  %797 = vmatprep.subr.mxu0 0.0
  %798 = vmatpush1.msra.mxu0 0.0
  %799 = vmatprep.subr.mxu0 0.0
  %800 = vmatpush1.msra.mxu0 0.0
  %801 = vmatprep.subr.mxu0 0.0
  %802 = vmatpush1.msra.mxu0 0.0
  %803 = vmatprep.subr.mxu0 0.0
  %804 = vmatpush1.msra.mxu0 0.0
  %805 = vmatprep.subr.mxu0 0.0
  %806 = vmatpush1.msra.mxu0 0.0
  %807 = vmatprep.mubr.f32.mxu0 0.0
  %v808 = vand.u32 %v152, 4294901760
  %809 = vmatmul.mubr.f32.gmra.mrb[0].mxu0 %v808
  %v810 = vpop.f32.mrb[0].mxu0
  %v811 = vadd.f32 %v732, %v810
  %v812 = vpop.f32.mrb[0].mxu0
  %813 = vdwg.mxu0
  %814 = vmatprep.subr.mxu0 0.0
  %v815 = vand.u32 %v261, 4294901760
  %816 = vmatpush1.msra.mxu0 %v815
  %817 = vmatprep.subr.mxu0 0.0
  %v818 = vand.u32 %v262, 4294901760
  %819 = vmatpush1.msra.mxu0 %v818
  %820 = vmatprep.subr.mxu0 0.0
  %v821 = vand.u32 %v263, 4294901760
  %822 = vmatpush1.msra.mxu0 %v821
  %823 = vmatprep.subr.mxu0 0.0
  %v824 = vand.u32 %v264, 4294901760
  %825 = vmatpush1.msra.mxu0 %v824
  %826 = vmatprep.subr.mxu0 0.0
  %v827 = vand.u32 %v265, 4294901760
  %828 = vmatpush1.msra.mxu0 %v827
  %829 = vmatprep.subr.mxu0 0.0
  %v830 = vand.u32 %v266, 4294901760
  %831 = vmatpush1.msra.mxu0 %v830
  %832 = vmatprep.subr.mxu0 0.0
  %v833 = vand.u32 %v267, 4294901760
  %834 = vmatpush1.msra.mxu0 %v833
  %835 = vmatprep.subr.mxu0 0.0
  %v836 = vand.u32 %v268, 4294901760
  %837 = vmatpush1.msra.mxu0 %v836
  %838 = vmatprep.subr.mxu0 0.0
  %839 = vmatpush1.msra.mxu0 0.0
  %840 = vmatprep.subr.mxu0 0.0
  %841 = vmatpush1.msra.mxu0 0.0
  %842 = vmatprep.subr.mxu0 0.0
  %843 = vmatpush1.msra.mxu0 0.0
  %844 = vmatprep.subr.mxu0 0.0
  %845 = vmatpush1.msra.mxu0 0.0
  %846 = vmatprep.subr.mxu0 0.0
  %847 = vmatpush1.msra.mxu0 0.0
  %848 = vmatprep.subr.mxu0 0.0
  %849 = vmatpush1.msra.mxu0 0.0
  %850 = vmatprep.subr.mxu0 0.0
  %851 = vmatpush1.msra.mxu0 0.0
  %852 = vmatprep.subr.mxu0 0.0
  %853 = vmatpush1.msra.mxu0 0.0
  %854 = vmatprep.subr.mxu0 0.0
  %855 = vmatpush1.msra.mxu0 0.0
  %856 = vmatprep.subr.mxu0 0.0
  %857 = vmatpush1.msra.mxu0 0.0
  %858 = vmatprep.subr.mxu0 0.0
  %859 = vmatpush1.msra.mxu0 0.0
  %860 = vmatprep.subr.mxu0 0.0
  %861 = vmatpush1.msra.mxu0 0.0
  %862 = vmatprep.subr.mxu0 0.0
  %863 = vmatpush1.msra.mxu0 0.0
  %864 = vmatprep.subr.mxu0 0.0
  %865 = vmatpush1.msra.mxu0 0.0
  %866 = vmatprep.subr.mxu0 0.0
  %867 = vmatpush1.msra.mxu0 0.0
  %868 = vmatprep.subr.mxu0 0.0
  %869 = vmatpush1.msra.mxu0 0.0
  %870 = vmatprep.subr.mxu0 0.0
  %871 = vmatpush1.msra.mxu0 0.0
  %872 = vmatprep.subr.mxu0 0.0
  %873 = vmatpush1.msra.mxu0 0.0
  %874 = vmatprep.subr.mxu0 0.0
  %875 = vmatpush1.msra.mxu0 0.0
  %876 = vmatprep.subr.mxu0 0.0
  %877 = vmatpush1.msra.mxu0 0.0
  %878 = vmatprep.subr.mxu0 0.0
  %879 = vmatpush1.msra.mxu0 0.0
  %880 = vmatprep.subr.mxu0 0.0
  %881 = vmatpush1.msra.mxu0 0.0
  %882 = vmatprep.subr.mxu0 0.0
  %883 = vmatpush1.msra.mxu0 0.0
  %884 = vmatprep.subr.mxu0 0.0
  %885 = vmatpush1.msra.mxu0 0.0
  %886 = vmatprep.mubr.f32.mxu0 0.0
  %v887 = vand.u32 %v67, 4294901760
  %v888 = vsub.f32 %v67, %v887
  %v889 = vand.u32 %v888, 4294901760
  %v890 = vsub.f32 %v888, %v889
  %v891 = vand.u32 %v890, 4294901760
  %892 = vmatmul.mubr.f32.gmra.mrb[0].mxu0 %v891
  %v893 = vpop.f32.mrb[0].mxu0
  %v894 = vadd.f32 %v811, %v893
  %v895 = vpop.f32.mrb[0].mxu0
  %896 = vdwg.mxu0
  %897 = vmatprep.subr.mxu0 0.0
  %v898 = vand.u32 %v261, 4294901760
  %v899 = vsub.f32 %v261, %v898
  %v900 = vand.u32 %v899, 4294901760
  %v901 = vsub.f32 %v899, %v900
  %v902 = vand.u32 %v901, 4294901760
  %903 = vmatpush1.msra.mxu0 %v902
  %904 = vmatprep.subr.mxu0 0.0
  %v905 = vand.u32 %v262, 4294901760
  %v906 = vsub.f32 %v262, %v905
  %v907 = vand.u32 %v906, 4294901760
  %v908 = vsub.f32 %v906, %v907
  %v909 = vand.u32 %v908, 4294901760
  %910 = vmatpush1.msra.mxu0 %v909
  %911 = vmatprep.subr.mxu0 0.0
  %v912 = vand.u32 %v263, 4294901760
  %v913 = vsub.f32 %v263, %v912
  %v914 = vand.u32 %v913, 4294901760
  %v915 = vsub.f32 %v913, %v914
  %v916 = vand.u32 %v915, 4294901760
  %917 = vmatpush1.msra.mxu0 %v916
  %918 = vmatprep.subr.mxu0 0.0
  %v919 = vand.u32 %v264, 4294901760
  %v920 = vsub.f32 %v264, %v919
  %v921 = vand.u32 %v920, 4294901760
  %v922 = vsub.f32 %v920, %v921
  %v923 = vand.u32 %v922, 4294901760
  %924 = vmatpush1.msra.mxu0 %v923
  %925 = vmatprep.subr.mxu0 0.0
  %v926 = vand.u32 %v265, 4294901760
  %v927 = vsub.f32 %v265, %v926
  %v928 = vand.u32 %v927, 4294901760
  %v929 = vsub.f32 %v927, %v928
  %v930 = vand.u32 %v929, 4294901760
  %931 = vmatpush1.msra.mxu0 %v930
  %932 = vmatprep.subr.mxu0 0.0
  %v933 = vand.u32 %v266, 4294901760
  %v934 = vsub.f32 %v266, %v933
  %v935 = vand.u32 %v934, 4294901760
  %v936 = vsub.f32 %v934, %v935
  %v937 = vand.u32 %v936, 4294901760
  %938 = vmatpush1.msra.mxu0 %v937
  %939 = vmatprep.subr.mxu0 0.0
  %v940 = vand.u32 %v267, 4294901760
  %v941 = vsub.f32 %v267, %v940
  %v942 = vand.u32 %v941, 4294901760
  %v943 = vsub.f32 %v941, %v942
  %v944 = vand.u32 %v943, 4294901760
  %945 = vmatpush1.msra.mxu0 %v944
  %946 = vmatprep.subr.mxu0 0.0
  %v947 = vand.u32 %v268, 4294901760
  %v948 = vsub.f32 %v268, %v947
  %v949 = vand.u32 %v948, 4294901760
  %v950 = vsub.f32 %v948, %v949
  %v951 = vand.u32 %v950, 4294901760
  %952 = vmatpush1.msra.mxu0 %v951
  %953 = vmatprep.subr.mxu0 0.0
  %954 = vmatpush1.msra.mxu0 0.0
  %955 = vmatprep.subr.mxu0 0.0
  %956 = vmatpush1.msra.mxu0 0.0
  %957 = vmatprep.subr.mxu0 0.0
  %958 = vmatpush1.msra.mxu0 0.0
  %959 = vmatprep.subr.mxu0 0.0
  %960 = vmatpush1.msra.mxu0 0.0
  %961 = vmatprep.subr.mxu0 0.0
  %962 = vmatpush1.msra.mxu0 0.0
  %963 = vmatprep.subr.mxu0 0.0
  %964 = vmatpush1.msra.mxu0 0.0
  %965 = vmatprep.subr.mxu0 0.0
  %966 = vmatpush1.msra.mxu0 0.0
  %967 = vmatprep.subr.mxu0 0.0
  %968 = vmatpush1.msra.mxu0 0.0
  %969 = vmatprep.subr.mxu0 0.0
  %970 = vmatpush1.msra.mxu0 0.0
  %971 = vmatprep.subr.mxu0 0.0
  %972 = vmatpush1.msra.mxu0 0.0
  %973 = vmatprep.subr.mxu0 0.0
  %974 = vmatpush1.msra.mxu0 0.0
  %975 = vmatprep.subr.mxu0 0.0
  %976 = vmatpush1.msra.mxu0 0.0
  %977 = vmatprep.subr.mxu0 0.0
  %978 = vmatpush1.msra.mxu0 0.0
  %979 = vmatprep.subr.mxu0 0.0
  %980 = vmatpush1.msra.mxu0 0.0
  %981 = vmatprep.subr.mxu0 0.0
  %982 = vmatpush1.msra.mxu0 0.0
  %983 = vmatprep.subr.mxu0 0.0
  %984 = vmatpush1.msra.mxu0 0.0
  %985 = vmatprep.subr.mxu0 0.0
  %986 = vmatpush1.msra.mxu0 0.0
  %987 = vmatprep.subr.mxu0 0.0
  %988 = vmatpush1.msra.mxu0 0.0
  %989 = vmatprep.subr.mxu0 0.0
  %990 = vmatpush1.msra.mxu0 0.0
  %991 = vmatprep.subr.mxu0 0.0
  %992 = vmatpush1.msra.mxu0 0.0
  %993 = vmatprep.subr.mxu0 0.0
  %994 = vmatpush1.msra.mxu0 0.0
  %995 = vmatprep.subr.mxu0 0.0
  %996 = vmatpush1.msra.mxu0 0.0
  %997 = vmatprep.subr.mxu0 0.0
  %998 = vmatpush1.msra.mxu0 0.0
  %999 = vmatprep.subr.mxu0 0.0
  %1000 = vmatpush1.msra.mxu0 0.0
  %1001 = vmatprep.mubr.f32.mxu0 0.0
  %v1002 = vand.u32 %v67, 4294901760
  %1003 = vmatmul.mubr.f32.gmra.mrb[0].mxu0 %v1002
  %v1004 = vpop.f32.mrb[0].mxu0
  %v1005 = vadd.f32 %v894, %v1004
  %v1006 = vpop.f32.mrb[0].mxu0
  %1007 = vdwg.mxu0
  %1008 = vmatprep.subr.mxu0 0.0
  %v1009 = vand.u32 %v261, 4294901760
  %v1010 = vsub.f32 %v261, %v1009
  %1011 = vmatpush1.msra.mxu0 %v1010
  %1012 = vmatprep.subr.mxu0 0.0
  %v1013 = vand.u32 %v262, 4294901760
  %v1014 = vsub.f32 %v262, %v1013
  %1015 = vmatpush1.msra.mxu0 %v1014
  %1016 = vmatprep.subr.mxu0 0.0
  %v1017 = vand.u32 %v263, 4294901760
  %v1018 = vsub.f32 %v263, %v1017
  %1019 = vmatpush1.msra.mxu0 %v1018
  %1020 = vmatprep.subr.mxu0 0.0
  %v1021 = vand.u32 %v264, 4294901760
  %v1022 = vsub.f32 %v264, %v1021
  %1023 = vmatpush1.msra.mxu0 %v1022
  %1024 = vmatprep.subr.mxu0 0.0
  %v1025 = vand.u32 %v265, 4294901760
  %v1026 = vsub.f32 %v265, %v1025
  %1027 = vmatpush1.msra.mxu0 %v1026
  %1028 = vmatprep.subr.mxu0 0.0
  %v1029 = vand.u32 %v266, 4294901760
  %v1030 = vsub.f32 %v266, %v1029
  %1031 = vmatpush1.msra.mxu0 %v1030
  %1032 = vmatprep.subr.mxu0 0.0
  %v1033 = vand.u32 %v267, 4294901760
  %v1034 = vsub.f32 %v267, %v1033
  %1035 = vmatpush1.msra.mxu0 %v1034
  %1036 = vmatprep.subr.mxu0 0.0
  %v1037 = vand.u32 %v268, 4294901760
  %v1038 = vsub.f32 %v268, %v1037
  %1039 = vmatpush1.msra.mxu0 %v1038
  %1040 = vmatprep.subr.mxu0 0.0
  %1041 = vmatpush1.msra.mxu0 0.0
  %1042 = vmatprep.subr.mxu0 0.0
  %1043 = vmatpush1.msra.mxu0 0.0
  %1044 = vmatprep.subr.mxu0 0.0
  %1045 = vmatpush1.msra.mxu0 0.0
  %1046 = vmatprep.subr.mxu0 0.0
  %1047 = vmatpush1.msra.mxu0 0.0
  %1048 = vmatprep.subr.mxu0 0.0
  %1049 = vmatpush1.msra.mxu0 0.0
  %1050 = vmatprep.subr.mxu0 0.0
  %1051 = vmatpush1.msra.mxu0 0.0
  %1052 = vmatprep.subr.mxu0 0.0
  %1053 = vmatpush1.msra.mxu0 0.0
  %1054 = vmatprep.subr.mxu0 0.0
  %1055 = vmatpush1.msra.mxu0 0.0
  %1056 = vmatprep.subr.mxu0 0.0
  %1057 = vmatpush1.msra.mxu0 0.0
  %1058 = vmatprep.subr.mxu0 0.0
  %1059 = vmatpush1.msra.mxu0 0.0
  %1060 = vmatprep.subr.mxu0 0.0
  %1061 = vmatpush1.msra.mxu0 0.0
  %1062 = vmatprep.subr.mxu0 0.0
  %1063 = vmatpush1.msra.mxu0 0.0
  %1064 = vmatprep.subr.mxu0 0.0
  %1065 = vmatpush1.msra.mxu0 0.0
  %1066 = vmatprep.subr.mxu0 0.0
  %1067 = vmatpush1.msra.mxu0 0.0
  %1068 = vmatprep.subr.mxu0 0.0
  %1069 = vmatpush1.msra.mxu0 0.0
  %1070 = vmatprep.subr.mxu0 0.0
  %1071 = vmatpush1.msra.mxu0 0.0
  %1072 = vmatprep.subr.mxu0 0.0
  %1073 = vmatpush1.msra.mxu0 0.0
  %1074 = vmatprep.subr.mxu0 0.0
  %1075 = vmatpush1.msra.mxu0 0.0
  %1076 = vmatprep.subr.mxu0 0.0
  %1077 = vmatpush1.msra.mxu0 0.0
  %1078 = vmatprep.subr.mxu0 0.0
  %1079 = vmatpush1.msra.mxu0 0.0
  %1080 = vmatprep.subr.mxu0 0.0
  %1081 = vmatpush1.msra.mxu0 0.0
  %1082 = vmatprep.subr.mxu0 0.0
  %1083 = vmatpush1.msra.mxu0 0.0
  %1084 = vmatprep.subr.mxu0 0.0
  %1085 = vmatpush1.msra.mxu0 0.0
  %1086 = vmatprep.subr.mxu0 0.0
  %1087 = vmatpush1.msra.mxu0 0.0
  %1088 = vmatprep.mubr.f32.mxu0 0.0
  %v1089 = vand.u32 %v67, 4294901760
  %v1090 = vsub.f32 %v67, %v1089
  %1091 = vmatmul.mubr.f32.gmra.mrb[0].mxu0 %v1090
  %v1092 = vpop.f32.mrb[0].mxu0
  %v1093 = vadd.f32 %v1005, %v1092
  %v1094 = vpop.f32.mrb[0].mxu0
  %1095 = vdwg.mxu0
  %1096 = vmatprep.subr.mxu0 0.0
  %v1097 = vand.u32 %v261, 4294901760
  %1098 = vmatpush1.msra.mxu0 %v1097
  %1099 = vmatprep.subr.mxu0 0.0
  %v1100 = vand.u32 %v262, 4294901760
  %1101 = vmatpush1.msra.mxu0 %v1100
  %1102 = vmatprep.subr.mxu0 0.0
  %v1103 = vand.u32 %v263, 4294901760
  %1104 = vmatpush1.msra.mxu0 %v1103
  %1105 = vmatprep.subr.mxu0 0.0
  %v1106 = vand.u32 %v264, 4294901760
  %1107 = vmatpush1.msra.mxu0 %v1106
  %1108 = vmatprep.subr.mxu0 0.0
  %v1109 = vand.u32 %v265, 4294901760
  %1110 = vmatpush1.msra.mxu0 %v1109
  %1111 = vmatprep.subr.mxu0 0.0
  %v1112 = vand.u32 %v266, 4294901760
  %1113 = vmatpush1.msra.mxu0 %v1112
  %1114 = vmatprep.subr.mxu0 0.0
  %v1115 = vand.u32 %v267, 4294901760
  %1116 = vmatpush1.msra.mxu0 %v1115
  %1117 = vmatprep.subr.mxu0 0.0
  %v1118 = vand.u32 %v268, 4294901760
  %1119 = vmatpush1.msra.mxu0 %v1118
  %1120 = vmatprep.subr.mxu0 0.0
  %1121 = vmatpush1.msra.mxu0 0.0
  %1122 = vmatprep.subr.mxu0 0.0
  %1123 = vmatpush1.msra.mxu0 0.0
  %1124 = vmatprep.subr.mxu0 0.0
  %1125 = vmatpush1.msra.mxu0 0.0
  %1126 = vmatprep.subr.mxu0 0.0
  %1127 = vmatpush1.msra.mxu0 0.0
  %1128 = vmatprep.subr.mxu0 0.0
  %1129 = vmatpush1.msra.mxu0 0.0
  %1130 = vmatprep.subr.mxu0 0.0
  %1131 = vmatpush1.msra.mxu0 0.0
  %1132 = vmatprep.subr.mxu0 0.0
  %1133 = vmatpush1.msra.mxu0 0.0
  %1134 = vmatprep.subr.mxu0 0.0
  %1135 = vmatpush1.msra.mxu0 0.0
  %1136 = vmatprep.subr.mxu0 0.0
  %1137 = vmatpush1.msra.mxu0 0.0
  %1138 = vmatprep.subr.mxu0 0.0
  %1139 = vmatpush1.msra.mxu0 0.0
  %1140 = vmatprep.subr.mxu0 0.0
  %1141 = vmatpush1.msra.mxu0 0.0
  %1142 = vmatprep.subr.mxu0 0.0
  %1143 = vmatpush1.msra.mxu0 0.0
  %1144 = vmatprep.subr.mxu0 0.0
  %1145 = vmatpush1.msra.mxu0 0.0
  %1146 = vmatprep.subr.mxu0 0.0
  %1147 = vmatpush1.msra.mxu0 0.0
  %1148 = vmatprep.subr.mxu0 0.0
  %1149 = vmatpush1.msra.mxu0 0.0
  %1150 = vmatprep.subr.mxu0 0.0
  %1151 = vmatpush1.msra.mxu0 0.0
  %1152 = vmatprep.subr.mxu0 0.0
  %1153 = vmatpush1.msra.mxu0 0.0
  %1154 = vmatprep.subr.mxu0 0.0
  %1155 = vmatpush1.msra.mxu0 0.0
  %1156 = vmatprep.subr.mxu0 0.0
  %1157 = vmatpush1.msra.mxu0 0.0
  %1158 = vmatprep.subr.mxu0 0.0
  %1159 = vmatpush1.msra.mxu0 0.0
  %1160 = vmatprep.subr.mxu0 0.0
  %1161 = vmatpush1.msra.mxu0 0.0
  %1162 = vmatprep.subr.mxu0 0.0
  %1163 = vmatpush1.msra.mxu0 0.0
  %1164 = vmatprep.subr.mxu0 0.0
  %1165 = vmatpush1.msra.mxu0 0.0
  %1166 = vmatprep.subr.mxu0 0.0
  %1167 = vmatpush1.msra.mxu0 0.0
  %1168 = vmatprep.mubr.f32.mxu0 0.0
  %v1169 = vand.u32 %v67, 4294901760
  %v1170 = vsub.f32 %v67, %v1169
  %v1171 = vand.u32 %v1170, 4294901760
  %1172 = vmatmul.mubr.f32.gmra.mrb[0].mxu0 %v1171
  %v1173 = vpop.f32.mrb[0].mxu0
  %v1174 = vadd.f32 %v1093, %v1173
  %v1175 = vpop.f32.mrb[0].mxu0
  %1176 = vdwg.mxu0
  %1177 = vmatprep.subr.mxu0 0.0
  %v1178 = vand.u32 %v261, 4294901760
  %v1179 = vsub.f32 %v261, %v1178
  %v1180 = vand.u32 %v1179, 4294901760
  %1181 = vmatpush1.msra.mxu0 %v1180
  %1182 = vmatprep.subr.mxu0 0.0
  %v1183 = vand.u32 %v262, 4294901760
  %v1184 = vsub.f32 %v262, %v1183
  %v1185 = vand.u32 %v1184, 4294901760
  %1186 = vmatpush1.msra.mxu0 %v1185
  %1187 = vmatprep.subr.mxu0 0.0
  %v1188 = vand.u32 %v263, 4294901760
  %v1189 = vsub.f32 %v263, %v1188
  %v1190 = vand.u32 %v1189, 4294901760
  %1191 = vmatpush1.msra.mxu0 %v1190
  %1192 = vmatprep.subr.mxu0 0.0
  %v1193 = vand.u32 %v264, 4294901760
  %v1194 = vsub.f32 %v264, %v1193
  %v1195 = vand.u32 %v1194, 4294901760
  %1196 = vmatpush1.msra.mxu0 %v1195
  %1197 = vmatprep.subr.mxu0 0.0
  %v1198 = vand.u32 %v265, 4294901760
  %v1199 = vsub.f32 %v265, %v1198
  %v1200 = vand.u32 %v1199, 4294901760
  %1201 = vmatpush1.msra.mxu0 %v1200
  %1202 = vmatprep.subr.mxu0 0.0
  %v1203 = vand.u32 %v266, 4294901760
  %v1204 = vsub.f32 %v266, %v1203
  %v1205 = vand.u32 %v1204, 4294901760
  %1206 = vmatpush1.msra.mxu0 %v1205
  %1207 = vmatprep.subr.mxu0 0.0
  %v1208 = vand.u32 %v267, 4294901760
  %v1209 = vsub.f32 %v267, %v1208
  %v1210 = vand.u32 %v1209, 4294901760
  %1211 = vmatpush1.msra.mxu0 %v1210
  %1212 = vmatprep.subr.mxu0 0.0
  %v1213 = vand.u32 %v268, 4294901760
  %v1214 = vsub.f32 %v268, %v1213
  %v1215 = vand.u32 %v1214, 4294901760
  %1216 = vmatpush1.msra.mxu0 %v1215
  %1217 = vmatprep.subr.mxu0 0.0
  %1218 = vmatpush1.msra.mxu0 0.0
  %1219 = vmatprep.subr.mxu0 0.0
  %1220 = vmatpush1.msra.mxu0 0.0
  %1221 = vmatprep.subr.mxu0 0.0
  %1222 = vmatpush1.msra.mxu0 0.0
  %1223 = vmatprep.subr.mxu0 0.0
  %1224 = vmatpush1.msra.mxu0 0.0
  %1225 = vmatprep.subr.mxu0 0.0
  %1226 = vmatpush1.msra.mxu0 0.0
  %1227 = vmatprep.subr.mxu0 0.0
  %1228 = vmatpush1.msra.mxu0 0.0
  %1229 = vmatprep.subr.mxu0 0.0
  %1230 = vmatpush1.msra.mxu0 0.0
  %1231 = vmatprep.subr.mxu0 0.0
  %1232 = vmatpush1.msra.mxu0 0.0
  %1233 = vmatprep.subr.mxu0 0.0
  %1234 = vmatpush1.msra.mxu0 0.0
  %1235 = vmatprep.subr.mxu0 0.0
  %1236 = vmatpush1.msra.mxu0 0.0
  %1237 = vmatprep.subr.mxu0 0.0
  %1238 = vmatpush1.msra.mxu0 0.0
  %1239 = vmatprep.subr.mxu0 0.0
  %1240 = vmatpush1.msra.mxu0 0.0
  %1241 = vmatprep.subr.mxu0 0.0
  %1242 = vmatpush1.msra.mxu0 0.0
  %1243 = vmatprep.subr.mxu0 0.0
  %1244 = vmatpush1.msra.mxu0 0.0
  %1245 = vmatprep.subr.mxu0 0.0
  %1246 = vmatpush1.msra.mxu0 0.0
  %1247 = vmatprep.subr.mxu0 0.0
  %1248 = vmatpush1.msra.mxu0 0.0
  %1249 = vmatprep.subr.mxu0 0.0
  %1250 = vmatpush1.msra.mxu0 0.0
  %1251 = vmatprep.subr.mxu0 0.0
  %1252 = vmatpush1.msra.mxu0 0.0
  %1253 = vmatprep.subr.mxu0 0.0
  %1254 = vmatpush1.msra.mxu0 0.0
  %1255 = vmatprep.subr.mxu0 0.0
  %1256 = vmatpush1.msra.mxu0 0.0
  %1257 = vmatprep.subr.mxu0 0.0
  %1258 = vmatpush1.msra.mxu0 0.0
  %1259 = vmatprep.subr.mxu0 0.0
  %1260 = vmatpush1.msra.mxu0 0.0
  %1261 = vmatprep.subr.mxu0 0.0
  %1262 = vmatpush1.msra.mxu0 0.0
  %1263 = vmatprep.subr.mxu0 0.0
  %1264 = vmatpush1.msra.mxu0 0.0
  %1265 = vmatprep.mubr.f32.mxu0 0.0
  %v1266 = vand.u32 %v67, 4294901760
  %1267 = vmatmul.mubr.f32.gmra.mrb[0].mxu0 %v1266
  %v1268 = vpop.f32.mrb[0].mxu0
  %v1269 = vadd.f32 %v1174, %v1268
  %v1270 = vpop.f32.mrb[0].mxu0
  %1271 = vdwg.mxu0
  %1272 = vmatprep.subr.mxu0 0.0
  %v1273 = vand.u32 %v261, 4294901760
  %1274 = vmatpush1.msra.mxu0 %v1273
  %1275 = vmatprep.subr.mxu0 0.0
  %v1276 = vand.u32 %v262, 4294901760
  %1277 = vmatpush1.msra.mxu0 %v1276
  %1278 = vmatprep.subr.mxu0 0.0
  %v1279 = vand.u32 %v263, 4294901760
  %1280 = vmatpush1.msra.mxu0 %v1279
  %1281 = vmatprep.subr.mxu0 0.0
  %v1282 = vand.u32 %v264, 4294901760
  %1283 = vmatpush1.msra.mxu0 %v1282
  %1284 = vmatprep.subr.mxu0 0.0
  %v1285 = vand.u32 %v265, 4294901760
  %1286 = vmatpush1.msra.mxu0 %v1285
  %1287 = vmatprep.subr.mxu0 0.0
  %v1288 = vand.u32 %v266, 4294901760
  %1289 = vmatpush1.msra.mxu0 %v1288
  %1290 = vmatprep.subr.mxu0 0.0
  %v1291 = vand.u32 %v267, 4294901760
  %1292 = vmatpush1.msra.mxu0 %v1291
  %1293 = vmatprep.subr.mxu0 0.0
  %v1294 = vand.u32 %v268, 4294901760
  %1295 = vmatpush1.msra.mxu0 %v1294
  %1296 = vmatprep.subr.mxu0 0.0
  %1297 = vmatpush1.msra.mxu0 0.0
  %1298 = vmatprep.subr.mxu0 0.0
  %1299 = vmatpush1.msra.mxu0 0.0
  %1300 = vmatprep.subr.mxu0 0.0
  %1301 = vmatpush1.msra.mxu0 0.0
  %1302 = vmatprep.subr.mxu0 0.0
  %1303 = vmatpush1.msra.mxu0 0.0
  %1304 = vmatprep.subr.mxu0 0.0
  %1305 = vmatpush1.msra.mxu0 0.0
  %1306 = vmatprep.subr.mxu0 0.0
  %1307 = vmatpush1.msra.mxu0 0.0
  %1308 = vmatprep.subr.mxu0 0.0
  %1309 = vmatpush1.msra.mxu0 0.0
  %1310 = vmatprep.subr.mxu0 0.0
  %1311 = vmatpush1.msra.mxu0 0.0
  %1312 = vmatprep.subr.mxu0 0.0
  %1313 = vmatpush1.msra.mxu0 0.0
  %1314 = vmatprep.subr.mxu0 0.0
  %1315 = vmatpush1.msra.mxu0 0.0
  %1316 = vmatprep.subr.mxu0 0.0
  %1317 = vmatpush1.msra.mxu0 0.0
  %1318 = vmatprep.subr.mxu0 0.0
  %1319 = vmatpush1.msra.mxu0 0.0
  %1320 = vmatprep.subr.mxu0 0.0
  %1321 = vmatpush1.msra.mxu0 0.0
  %1322 = vmatprep.subr.mxu0 0.0
  %1323 = vmatpush1.msra.mxu0 0.0
  %1324 = vmatprep.subr.mxu0 0.0
  %1325 = vmatpush1.msra.mxu0 0.0
  %1326 = vmatprep.subr.mxu0 0.0
  %1327 = vmatpush1.msra.mxu0 0.0
  %1328 = vmatprep.subr.mxu0 0.0
  %1329 = vmatpush1.msra.mxu0 0.0
  %1330 = vmatprep.subr.mxu0 0.0
  %1331 = vmatpush1.msra.mxu0 0.0
  %1332 = vmatprep.subr.mxu0 0.0
  %1333 = vmatpush1.msra.mxu0 0.0
  %1334 = vmatprep.subr.mxu0 0.0
  %1335 = vmatpush1.msra.mxu0 0.0
  %1336 = vmatprep.subr.mxu0 0.0
  %1337 = vmatpush1.msra.mxu0 0.0
  %1338 = vmatprep.subr.mxu0 0.0
  %1339 = vmatpush1.msra.mxu0 0.0
  %1340 = vmatprep.subr.mxu0 0.0
  %1341 = vmatpush1.msra.mxu0 0.0
  %1342 = vmatprep.subr.mxu0 0.0
  %1343 = vmatpush1.msra.mxu0 0.0
  %1344 = vmatprep.mubr.f32.mxu0 0.0
  %v1345 = vand.u32 %v67, 4294901760
  %1346 = vmatmul.mubr.f32.gmra.mrb[0].mxu0 %v1345
  %v1347 = vpop.f32.mrb[0].mxu0
  %v1348 = vadd.f32 %v1269, %v1347
  %v1349 = vpop.f32.mrb[0].mxu0
  %1350 = vdwg.mxu0
  %v1351 = vmul.f32 %v39, %v39
  %v1352 = vsel %vm65, %v1351, 0.0
  %1353 = vadd.xlane.f32.xlu0 %v1352
  %v1354 = vpop.xlane.xlu0 %1353
  %v1355 = vadd.f32 %v256, %v1354
  %v1356 = vmul.f32 %v261, %v261
  %v1357 = vmul.f32 %v262, %v262
  %v1358 = vmul.f32 %v263, %v263
  %v1359 = vmul.f32 %v264, %v264
  %v1360 = vmul.f32 %v265, %v265
  %v1361 = vmul.f32 %v266, %v266
  %v1362 = vmul.f32 %v267, %v267
  %v1363 = vmul.f32 %v268, %v268
  %vm1364 = vcmask 130048
  %v1365 = vsel %vm1364, %v1356, 0.0
  %v1366 = vsel %vm1364, %v1357, 0.0
  %v1367 = vadd.f32 %v1365, %v1366
  %v1368 = vsel %vm1364, %v1358, 0.0
  %v1369 = vadd.f32 %v1367, %v1368
  %v1370 = vsel %vm1364, %v1359, 0.0
  %v1371 = vadd.f32 %v1369, %v1370
  %v1372 = vsel %vm1364, %v1360, 0.0
  %v1373 = vadd.f32 %v1371, %v1372
  %v1374 = vsel %vm1364, %v1361, 0.0
  %v1375 = vadd.f32 %v1373, %v1374
  %v1376 = vsel %vm1364, %v1362, 0.0
  %v1377 = vadd.f32 %v1375, %v1376
  %v1378 = vsel %vm1364, %v1363, 0.0
  %v1379 = vadd.f32 %v1377, %v1378
  %v1380 = vrot.slane %v1379, 4
  %v1381 = vadd.f32 %v1379, %v1380
  %v1382 = vrot.slane %v1381, 2
  %v1383 = vadd.f32 %v1381, %v1382
  %v1384 = vrot.slane %v1383, 1
  %v1385 = vadd.f32 %v1383, %v1384
  %v1386 = vmul.f32 %v269, %v269
  %v1387 = vmul.f32 %v270, %v270
  %v1388 = vmul.f32 %v271, %v271
  %v1389 = vmul.f32 %v272, %v272
  %v1390 = vmul.f32 %v273, %v273
  %v1391 = vmul.f32 %v274, %v274
  %v1392 = vmul.f32 %v275, %v275
  %v1393 = vmul.f32 %v276, %v276
  %v1394 = vsel %vm1364, %v1386, 0.0
  %v1395 = vsel %vm1364, %v1387, 0.0
  %v1396 = vadd.f32 %v1394, %v1395
  %v1397 = vsel %vm1364, %v1388, 0.0
  %v1398 = vadd.f32 %v1396, %v1397
  %v1399 = vsel %vm1364, %v1389, 0.0
  %v1400 = vadd.f32 %v1398, %v1399
  %v1401 = vsel %vm1364, %v1390, 0.0
  %v1402 = vadd.f32 %v1400, %v1401
  %v1403 = vsel %vm1364, %v1391, 0.0
  %v1404 = vadd.f32 %v1402, %v1403
  %v1405 = vsel %vm1364, %v1392, 0.0
  %v1406 = vadd.f32 %v1404, %v1405
  %v1407 = vsel %vm1364, %v1393, 0.0
  %v1408 = vadd.f32 %v1406, %v1407
  %v1409 = vrot.slane %v1408, 4
  %v1410 = vadd.f32 %v1408, %v1409
  %v1411 = vrot.slane %v1410, 2
  %v1412 = vadd.f32 %v1410, %v1411
  %v1413 = vrot.slane %v1412, 1
  %v1414 = vadd.f32 %v1412, %v1413
  %v1415 = vadd.f32 %v1385, %v1414
  %v1416 = vmul.f32 %v1348, 2.0
  %v1417 = vsub.f32 %v1355, %v1416
  %v1418 = vadd.f32 %v1417, %v1415
  %v1419 = vmul.f32 %v1418, 0.0078125
  %v1420 = vlaneseq
  %v1421 = vand.u32 %v1420, 127
  %v1422 = vsel %vm1364, %v1419, inf
  %1423 = vmin.xlane.f32.xlu0 %v1422
  %v1424 = vpop.xlane.xlu0 %1423
  %vm1425 = vcmp.le.f32.partialorder %v1419, %v1424
  %v1426 = vsel %vm1425, %v1421, 16
  %v1427 = vsel %vm1364, %v1426, 2147483647
  %v1428 = vand.u32 %v1427, 65535
  %v1429 = vshra.s32 %v1427, 16
  %v1430 = vcvt.s32.f32 %v1428
  %v1431 = vcvt.s32.f32 %v1429
  %1432 = vmin.xlane.f32.xlu0 %v1431
  %v1433 = vpop.xlane.xlu0 %1432
  %vm1434 = vcmp.eq.f32.partialorder %v1431, %v1433
  %v1435 = vsel %vm1434, %v1430, inf
  %1436 = vmin.xlane.f32.xlu0 %v1435
  %v1437 = vpop.xlane.xlu0 %1436
  %v1438 = vcvt.f32.s32 %v1437
  %v1439 = vcvt.f32.s32 %v1433
  %v1440 = vshll.u32 %v1439, 16
  %v1441 = vadd.s32 %v1440, %v1438
  %vm1442 = vcmp.eq.s32.totalorder %v1421, %v1441
  %v1443 = vsel %vm1442, 1, 0
  %v1444 = vcvt.s32.f32 %v1443
  %1445 = vxpose.xlu0.b32.start [1/16] %v261, 128
  %1446 = vxpose.xlu0.b32.cont [2/16] %v262, 128
  %1447 = vxpose.xlu0.b32.cont [3/16] %v263, 128
  %1448 = vxpose.xlu0.b32.cont [4/16] %v264, 128
  %1449 = vxpose.xlu0.b32.cont [5/16] %v265, 128
  %1450 = vxpose.xlu0.b32.cont [6/16] %v266, 128
  %1451 = vxpose.xlu0.b32.cont [7/16] %v267, 128
  %1452 = vxpose.xlu0.b32.cont [8/16] %v268, 128
  %1453 = vxpose.xlu0.b32.cont [9/16] 0.0, 128
  %1454 = vxpose.xlu0.b32.cont [10/16] 0.0, 128
  %1455 = vxpose.xlu0.b32.cont [11/16] 0.0, 128
  %1456 = vxpose.xlu0.b32.cont [12/16] 0.0, 128
  %1457 = vxpose.xlu0.b32.cont [13/16] 0.0, 128
  %1458 = vxpose.xlu0.b32.cont [14/16] 0.0, 128
  %1459 = vxpose.xlu0.b32.cont [15/16] 0.0, 128
  %1460 = vxpose.xlu0.b32.end [16/16] 0.0, 128
  %v1461 = vpop.trf.xlu0
  %v1462 = vpop.trf.xlu0
  %v1463 = vpop.trf.xlu0
  %v1464 = vpop.trf.xlu0
  %v1465 = vpop.trf.xlu0
  %v1466 = vpop.trf.xlu0
  %v1467 = vpop.trf.xlu0
  %v1468 = vpop.trf.xlu0
  %v1469 = vpop.trf.xlu0
  %v1470 = vpop.trf.xlu0
  %v1471 = vpop.trf.xlu0
  %v1472 = vpop.trf.xlu0
  %v1473 = vpop.trf.xlu0
  %v1474 = vpop.trf.xlu0
  %v1475 = vpop.trf.xlu0
  %v1476 = vpop.trf.xlu0
  %v1478 = vsel %vm65, %v1461, 0
  %v1481 = vsel %vm65, %v1462, 0
  %1483 = vmatprep.subr.mxu0 0.0
  %1484 = vmatpush1.msra.mxu0 %v41
  %1485 = vmatprep.subr.mxu0 0.0
  %1486 = vmatpush1.msra.mxu0 %v42
  %1487 = vmatprep.subr.mxu0 0.0
  %1488 = vmatpush1.msra.mxu0 %v43
  %1489 = vmatprep.subr.mxu0 0.0
  %1490 = vmatpush1.msra.mxu0 %v44
  %1491 = vmatprep.subr.mxu0 0.0
  %1492 = vmatpush1.msra.mxu0 %v45
  %1493 = vmatprep.subr.mxu0 0.0
  %1494 = vmatpush1.msra.mxu0 %v46
  %1495 = vmatprep.subr.mxu0 0.0
  %1496 = vmatpush1.msra.mxu0 %v47
  %1497 = vmatprep.subr.mxu0 0.0
  %1498 = vmatpush1.msra.mxu0 %v48
  %1499 = vmatprep.subr.mxu0 0.0
  %1500 = vmatpush1.msra.mxu0 0.0
  %1501 = vmatprep.subr.mxu0 0.0
  %1502 = vmatpush1.msra.mxu0 0.0
  %1503 = vmatprep.subr.mxu0 0.0
  %1504 = vmatpush1.msra.mxu0 0.0
  %1505 = vmatprep.subr.mxu0 0.0
  %1506 = vmatpush1.msra.mxu0 0.0
  %1507 = vmatprep.subr.mxu0 0.0
  %1508 = vmatpush1.msra.mxu0 0.0
  %1509 = vmatprep.subr.mxu0 0.0
  %1510 = vmatpush1.msra.mxu0 0.0
  %1511 = vmatprep.subr.mxu0 0.0
  %1512 = vmatpush1.msra.mxu0 0.0
  %1513 = vmatprep.subr.mxu0 0.0
  %1514 = vmatpush1.msra.mxu0 0.0
  %1515 = vmatprep.subr.mxu0 0.0
  %1516 = vmatpush1.msra.mxu0 0.0
  %1517 = vmatprep.subr.mxu0 0.0
  %1518 = vmatpush1.msra.mxu0 0.0
  %1519 = vmatprep.subr.mxu0 0.0
  %1520 = vmatpush1.msra.mxu0 0.0
  %1521 = vmatprep.subr.mxu0 0.0
  %1522 = vmatpush1.msra.mxu0 0.0
  %1523 = vmatprep.subr.mxu0 0.0
  %1524 = vmatpush1.msra.mxu0 0.0
  %1525 = vmatprep.subr.mxu0 0.0
  %1526 = vmatpush1.msra.mxu0 0.0
  %1527 = vmatprep.subr.mxu0 0.0
  %1528 = vmatpush1.msra.mxu0 0.0
  %1529 = vmatprep.subr.mxu0 0.0
  %1530 = vmatpush1.msra.mxu0 0.0
  %1531 = vmatprep.subr.mxu0 0.0
  %1532 = vmatpush1.msra.mxu0 0.0
  %1533 = vmatprep.subr.mxu0 0.0
  %1534 = vmatpush1.msra.mxu0 0.0
  %1535 = vmatprep.subr.mxu0 0.0
  %1536 = vmatpush1.msra.mxu0 0.0
  %1537 = vmatprep.subr.mxu0 0.0
  %1538 = vmatpush1.msra.mxu0 0.0
  %1539 = vmatprep.subr.mxu0 0.0
  %1540 = vmatpush1.msra.mxu0 0.0
  %1541 = vmatprep.subr.mxu0 0.0
  %1542 = vmatpush1.msra.mxu0 0.0
  %1543 = vmatprep.subr.mxu0 0.0
  %1544 = vmatpush1.msra.mxu0 0.0
  %1545 = vmatprep.subr.mxu0 0.0
  %1546 = vmatpush1.msra.mxu0 0.0
  %1547 = vmatprep.mubr.f32.mxu0 0.0
  %1548 = vmatmul.mubr.f32.gmra.mrb[0].mxu0 %v1478
  %v1549 = vpop.f32.mrb[0].mxu0
  %v1550 = vadd.f32 0.0, %v1549
  %v1551 = vpop.f32.mrb[0].mxu0
  %1552 = vmatprep.mubr.f32.mxu0 0.0
  %1553 = vmatmul.mubr.f32.gmra.mrb[0].mxu0 %v1481
  %v1554 = vpop.f32.mrb[0].mxu0
  %v1555 = vadd.f32 0.0, %v1554
  %v1556 = vpop.f32.mrb[0].mxu0
  %1557 = vdwg.mxu0
  %1558 = vxpose.xlu0.b32.start [1/16] %v269, 128
  %1559 = vxpose.xlu0.b32.cont [2/16] %v270, 128
  %1560 = vxpose.xlu0.b32.cont [3/16] %v271, 128
  %1561 = vxpose.xlu0.b32.cont [4/16] %v272, 128
  %1562 = vxpose.xlu0.b32.cont [5/16] %v273, 128
  %1563 = vxpose.xlu0.b32.cont [6/16] %v274, 128
  %1564 = vxpose.xlu0.b32.cont [7/16] %v275, 128
  %1565 = vxpose.xlu0.b32.cont [8/16] %v276, 128
  %1566 = vxpose.xlu0.b32.cont [9/16] 0.0, 128
  %1567 = vxpose.xlu0.b32.cont [10/16] 0.0, 128
  %1568 = vxpose.xlu0.b32.cont [11/16] 0.0, 128
  %1569 = vxpose.xlu0.b32.cont [12/16] 0.0, 128
  %1570 = vxpose.xlu0.b32.cont [13/16] 0.0, 128
  %1571 = vxpose.xlu0.b32.cont [14/16] 0.0, 128
  %1572 = vxpose.xlu0.b32.cont [15/16] 0.0, 128
  %1573 = vxpose.xlu0.b32.end [16/16] 0.0, 128
  %v1574 = vpop.trf.xlu0
  %v1575 = vpop.trf.xlu0
  %v1576 = vpop.trf.xlu0
  %v1577 = vpop.trf.xlu0
  %v1578 = vpop.trf.xlu0
  %v1579 = vpop.trf.xlu0
  %v1580 = vpop.trf.xlu0
  %v1581 = vpop.trf.xlu0
  %v1582 = vpop.trf.xlu0
  %v1583 = vpop.trf.xlu0
  %v1584 = vpop.trf.xlu0
  %v1585 = vpop.trf.xlu0
  %v1586 = vpop.trf.xlu0
  %v1587 = vpop.trf.xlu0
  %v1588 = vpop.trf.xlu0
  %v1589 = vpop.trf.xlu0
  %v1591 = vsel %vm65, %v1574, 0
  %v1594 = vsel %vm65, %v1575, 0
  %1596 = vmatprep.subr.mxu0 0.0
  %1597 = vmatpush1.msra.mxu0 %v50
  %1598 = vmatprep.subr.mxu0 0.0
  %1599 = vmatpush1.msra.mxu0 %v51
  %1600 = vmatprep.subr.mxu0 0.0
  %1601 = vmatpush1.msra.mxu0 %v52
  %1602 = vmatprep.subr.mxu0 0.0
  %1603 = vmatpush1.msra.mxu0 %v53
  %1604 = vmatprep.subr.mxu0 0.0
  %1605 = vmatpush1.msra.mxu0 %v54
  %1606 = vmatprep.subr.mxu0 0.0
  %1607 = vmatpush1.msra.mxu0 %v55
  %1608 = vmatprep.subr.mxu0 0.0
  %1609 = vmatpush1.msra.mxu0 %v56
  %1610 = vmatprep.subr.mxu0 0.0
  %1611 = vmatpush1.msra.mxu0 %v57
  %1612 = vmatprep.subr.mxu0 0.0
  %1613 = vmatpush1.msra.mxu0 0.0
  %1614 = vmatprep.subr.mxu0 0.0
  %1615 = vmatpush1.msra.mxu0 0.0
  %1616 = vmatprep.subr.mxu0 0.0
  %1617 = vmatpush1.msra.mxu0 0.0
  %1618 = vmatprep.subr.mxu0 0.0
  %1619 = vmatpush1.msra.mxu0 0.0
  %1620 = vmatprep.subr.mxu0 0.0
  %1621 = vmatpush1.msra.mxu0 0.0
  %1622 = vmatprep.subr.mxu0 0.0
  %1623 = vmatpush1.msra.mxu0 0.0
  %1624 = vmatprep.subr.mxu0 0.0
  %1625 = vmatpush1.msra.mxu0 0.0
  %1626 = vmatprep.subr.mxu0 0.0
  %1627 = vmatpush1.msra.mxu0 0.0
  %1628 = vmatprep.subr.mxu0 0.0
  %1629 = vmatpush1.msra.mxu0 0.0
  %1630 = vmatprep.subr.mxu0 0.0
  %1631 = vmatpush1.msra.mxu0 0.0
  %1632 = vmatprep.subr.mxu0 0.0
  %1633 = vmatpush1.msra.mxu0 0.0
  %1634 = vmatprep.subr.mxu0 0.0
  %1635 = vmatpush1.msra.mxu0 0.0
  %1636 = vmatprep.subr.mxu0 0.0
  %1637 = vmatpush1.msra.mxu0 0.0
  %1638 = vmatprep.subr.mxu0 0.0
  %1639 = vmatpush1.msra.mxu0 0.0
  %1640 = vmatprep.subr.mxu0 0.0
  %1641 = vmatpush1.msra.mxu0 0.0
  %1642 = vmatprep.subr.mxu0 0.0
  %1643 = vmatpush1.msra.mxu0 0.0
  %1644 = vmatprep.subr.mxu0 0.0
  %1645 = vmatpush1.msra.mxu0 0.0
  %1646 = vmatprep.subr.mxu0 0.0
  %1647 = vmatpush1.msra.mxu0 0.0
  %1648 = vmatprep.subr.mxu0 0.0
  %1649 = vmatpush1.msra.mxu0 0.0
  %1650 = vmatprep.subr.mxu0 0.0
  %1651 = vmatpush1.msra.mxu0 0.0
  %1652 = vmatprep.subr.mxu0 0.0
  %1653 = vmatpush1.msra.mxu0 0.0
  %1654 = vmatprep.subr.mxu0 0.0
  %1655 = vmatpush1.msra.mxu0 0.0
  %1656 = vmatprep.subr.mxu0 0.0
  %1657 = vmatpush1.msra.mxu0 0.0
  %1658 = vmatprep.subr.mxu0 0.0
  %1659 = vmatpush1.msra.mxu0 0.0
  %1660 = vmatprep.mubr.f32.mxu0 0.0
  %1661 = vmatmul.mubr.f32.gmra.mrb[0].mxu0 %v1591
  %v1662 = vpop.f32.mrb[0].mxu0
  %v1663 = vadd.f32 0.0, %v1662
  %v1664 = vpop.f32.mrb[0].mxu0
  %1665 = vmatprep.mubr.f32.mxu0 0.0
  %1666 = vmatmul.mubr.f32.gmra.mrb[0].mxu0 %v1594
  %v1667 = vpop.f32.mrb[0].mxu0
  %v1668 = vadd.f32 0.0, %v1667
  %v1669 = vpop.f32.mrb[0].mxu0
  %1670 = vdwg.mxu0
  %1673 = vrot.lane.b32.xlu0 %v1663, 32
  %v1674 = vpop.permute.xlu0 %1673
  %1675 = vrot.lane.b32.xlu0 %v1668, 32
  %v1676 = vpop.permute.xlu0 %1675
  %v1679 = vsel %vm245, %v1550, %v1674
  %v1680 = vsel %vm245, %v1555, %v1676
  %v1681 = vlaneseq
  %v1682 = vshrl.u32 %v1681, 7
  %v1683 = vsub.s32 0, %v1682
  %v1684 = vrot.slane %v260, %v1683
  %v1686 = vsel %vm1364, %v1444, 0
  %1688 = vmatprep.subr.mxu0 0.0
  %1689 = vmatpush1.msra.mxu0 %v1679
  %1690 = vmatprep.subr.mxu0 0.0
  %1691 = vmatpush1.msra.mxu0 %v1680
  %1692 = vmatprep.subr.mxu0 0.0
  %1693 = vmatpush1.msra.mxu0 0.0
  %1694 = vmatprep.subr.mxu0 0.0
  %1695 = vmatpush1.msra.mxu0 0.0
  %1696 = vmatprep.subr.mxu0 0.0
  %1697 = vmatpush1.msra.mxu0 0.0
  %1698 = vmatprep.subr.mxu0 0.0
  %1699 = vmatpush1.msra.mxu0 0.0
  %1700 = vmatprep.subr.mxu0 0.0
  %1701 = vmatpush1.msra.mxu0 0.0
  %1702 = vmatprep.subr.mxu0 0.0
  %1703 = vmatpush1.msra.mxu0 0.0
  %1704 = vmatprep.subr.mxu0 0.0
  %1705 = vmatpush1.msra.mxu0 0.0
  %1706 = vmatprep.subr.mxu0 0.0
  %1707 = vmatpush1.msra.mxu0 0.0
  %1708 = vmatprep.subr.mxu0 0.0
  %1709 = vmatpush1.msra.mxu0 0.0
  %1710 = vmatprep.subr.mxu0 0.0
  %1711 = vmatpush1.msra.mxu0 0.0
  %1712 = vmatprep.subr.mxu0 0.0
  %1713 = vmatpush1.msra.mxu0 0.0
  %1714 = vmatprep.subr.mxu0 0.0
  %1715 = vmatpush1.msra.mxu0 0.0
  %1716 = vmatprep.subr.mxu0 0.0
  %1717 = vmatpush1.msra.mxu0 0.0
  %1718 = vmatprep.subr.mxu0 0.0
  %1719 = vmatpush1.msra.mxu0 0.0
  %1720 = vmatprep.subr.mxu0 0.0
  %1721 = vmatpush1.msra.mxu0 0.0
  %1722 = vmatprep.subr.mxu0 0.0
  %1723 = vmatpush1.msra.mxu0 0.0
  %1724 = vmatprep.subr.mxu0 0.0
  %1725 = vmatpush1.msra.mxu0 0.0
  %1726 = vmatprep.subr.mxu0 0.0
  %1727 = vmatpush1.msra.mxu0 0.0
  %1728 = vmatprep.subr.mxu0 0.0
  %1729 = vmatpush1.msra.mxu0 0.0
  %1730 = vmatprep.subr.mxu0 0.0
  %1731 = vmatpush1.msra.mxu0 0.0
  %1732 = vmatprep.subr.mxu0 0.0
  %1733 = vmatpush1.msra.mxu0 0.0
  %1734 = vmatprep.subr.mxu0 0.0
  %1735 = vmatpush1.msra.mxu0 0.0
  %1736 = vmatprep.subr.mxu0 0.0
  %1737 = vmatpush1.msra.mxu0 0.0
  %1738 = vmatprep.subr.mxu0 0.0
  %1739 = vmatpush1.msra.mxu0 0.0
  %1740 = vmatprep.subr.mxu0 0.0
  %1741 = vmatpush1.msra.mxu0 0.0
  %1742 = vmatprep.subr.mxu0 0.0
  %1743 = vmatpush1.msra.mxu0 0.0
  %1744 = vmatprep.subr.mxu0 0.0
  %1745 = vmatpush1.msra.mxu0 0.0
  %1746 = vmatprep.subr.mxu0 0.0
  %1747 = vmatpush1.msra.mxu0 0.0
  %1748 = vmatprep.subr.mxu0 0.0
  %1749 = vmatpush1.msra.mxu0 0.0
  %1750 = vmatprep.subr.mxu0 0.0
  %1751 = vmatpush1.msra.mxu0 0.0
  %1752 = vmatprep.mubr.f32.mxu0 0.0
  %1753 = vmatmul.mubr.f32.gmra.mrb[0].mxu0 %v1686
  %v1754 = vpop.f32.mrb[0].mxu0
  %v1755 = vadd.f32 %v1684, %v1754
  %v1756 = vpop.f32.mrb[0].mxu0
  %1757 = vdwg.mxu0
  %v1758 = vxor.u32 %v1755, 2147483648
  %v1759 = vmul.f32 %v1758, 1.442695
  %v1760 = vpow.pop %v1759
  %v1761 = vadd.f32 %v1760, 1.0
  %v1762 = vrcp.pop %v1761
  %v1763 = vmul.f32 1.0, %v1762
  %1765 = vrot.lane.b32.xlu0 %v1763, 96
  %v1766 = vpop.permute.xlu0 %1765
  %v1768 = vmul.f32 %v1763, %v1766
  %v1769 = vsel %vm245, %v1768, 0.0
  %1770 = vadd.xlane.f32.xlu0 %v1769
  %v1771 = vpop.xlane.xlu0 %1770
  %v1772 = vld [vmem:[%s5] sm:$0xff]
  %v1773 = vld [vmem:[%s5 + $0x8] sm:$0xff]
  %v1774 = vld [vmem:[%s5 + $0x10] sm:$0xff]
  %v1775 = vld [vmem:[%s5 + $0x18] sm:$0xff]
  %v1776 = vld [vmem:[%s5 + $0x20] sm:$0xff]
  %v1777 = vld [vmem:[%s5 + $0x28] sm:$0xff]
  %v1778 = vld [vmem:[%s5 + $0x30] sm:$0xff]
  %v1779 = vld [vmem:[%s5 + $0x38] sm:$0xff]
  %v1780 = vld [vmem:[%s6] sm:$0xff]
  %v1781 = vld [vmem:[%s6 + $0x8] sm:$0xff]
  %v1782 = vld [vmem:[%s6 + $0x10] sm:$0xff]
  %v1783 = vld [vmem:[%s6 + $0x18] sm:$0xff]
  %v1784 = vld [vmem:[%s6 + $0x20] sm:$0xff]
  %v1785 = vld [vmem:[%s6 + $0x28] sm:$0xff]
  %v1786 = vld [vmem:[%s6 + $0x30] sm:$0xff]
  %v1787 = vld [vmem:[%s6 + $0x38] sm:$0xff]
  %1788 = vmatprep.subr.mxu0 0.0
  %v1789 = vand.u32 %v1780, 4294901760
  %1790 = vmatpush1.msra.mxu0 %v1789
  %1791 = vmatprep.subr.mxu0 0.0
  %v1792 = vand.u32 %v1781, 4294901760
  %1793 = vmatpush1.msra.mxu0 %v1792
  %1794 = vmatprep.subr.mxu0 0.0
  %v1795 = vand.u32 %v1782, 4294901760
  %1796 = vmatpush1.msra.mxu0 %v1795
  %1797 = vmatprep.subr.mxu0 0.0
  %v1798 = vand.u32 %v1783, 4294901760
  %1799 = vmatpush1.msra.mxu0 %v1798
  %1800 = vmatprep.subr.mxu0 0.0
  %v1801 = vand.u32 %v1784, 4294901760
  %1802 = vmatpush1.msra.mxu0 %v1801
  %1803 = vmatprep.subr.mxu0 0.0
  %v1804 = vand.u32 %v1785, 4294901760
  %1805 = vmatpush1.msra.mxu0 %v1804
  %1806 = vmatprep.subr.mxu0 0.0
  %v1807 = vand.u32 %v1786, 4294901760
  %1808 = vmatpush1.msra.mxu0 %v1807
  %1809 = vmatprep.subr.mxu0 0.0
  %v1810 = vand.u32 %v1787, 4294901760
  %1811 = vmatpush1.msra.mxu0 %v1810
  %1812 = vmatprep.subr.mxu0 0.0
  %1813 = vmatpush1.msra.mxu0 0.0
  %1814 = vmatprep.subr.mxu0 0.0
  %1815 = vmatpush1.msra.mxu0 0.0
  %1816 = vmatprep.subr.mxu0 0.0
  %1817 = vmatpush1.msra.mxu0 0.0
  %1818 = vmatprep.subr.mxu0 0.0
  %1819 = vmatpush1.msra.mxu0 0.0
  %1820 = vmatprep.subr.mxu0 0.0
  %1821 = vmatpush1.msra.mxu0 0.0
  %1822 = vmatprep.subr.mxu0 0.0
  %1823 = vmatpush1.msra.mxu0 0.0
  %1824 = vmatprep.subr.mxu0 0.0
  %1825 = vmatpush1.msra.mxu0 0.0
  %1826 = vmatprep.subr.mxu0 0.0
  %1827 = vmatpush1.msra.mxu0 0.0
  %1828 = vmatprep.subr.mxu0 0.0
  %1829 = vmatpush1.msra.mxu0 0.0
  %1830 = vmatprep.subr.mxu0 0.0
  %1831 = vmatpush1.msra.mxu0 0.0
  %1832 = vmatprep.subr.mxu0 0.0
  %1833 = vmatpush1.msra.mxu0 0.0
  %1834 = vmatprep.subr.mxu0 0.0
  %1835 = vmatpush1.msra.mxu0 0.0
  %1836 = vmatprep.subr.mxu0 0.0
  %1837 = vmatpush1.msra.mxu0 0.0
  %1838 = vmatprep.subr.mxu0 0.0
  %1839 = vmatpush1.msra.mxu0 0.0
  %1840 = vmatprep.subr.mxu0 0.0
  %1841 = vmatpush1.msra.mxu0 0.0
  %1842 = vmatprep.subr.mxu0 0.0
  %1843 = vmatpush1.msra.mxu0 0.0
  %1844 = vmatprep.subr.mxu0 0.0
  %1845 = vmatpush1.msra.mxu0 0.0
  %1846 = vmatprep.subr.mxu0 0.0
  %1847 = vmatpush1.msra.mxu0 0.0
  %1848 = vmatprep.subr.mxu0 0.0
  %1849 = vmatpush1.msra.mxu0 0.0
  %1850 = vmatprep.subr.mxu0 0.0
  %1851 = vmatpush1.msra.mxu0 0.0
  %1852 = vmatprep.subr.mxu0 0.0
  %1853 = vmatpush1.msra.mxu0 0.0
  %1854 = vmatprep.subr.mxu0 0.0
  %1855 = vmatpush1.msra.mxu0 0.0
  %1856 = vmatprep.subr.mxu0 0.0
  %1857 = vmatpush1.msra.mxu0 0.0
  %1858 = vmatprep.subr.mxu0 0.0
  %1859 = vmatpush1.msra.mxu0 0.0
  %1860 = vmatprep.mubr.f32.mxu0 0.0
  %v1861 = vand.u32 %v155, 4294901760
  %v1862 = vsub.f32 %v155, %v1861
  %v1863 = vand.u32 %v1862, 4294901760
  %v1864 = vsub.f32 %v1862, %v1863
  %v1865 = vand.u32 %v1864, 4294901760
  %1866 = vmatmul.mubr.f32.gmra.mrb[0].mxu0 %v1865
  %v1867 = vpop.f32.mrb[0].mxu0
  %v1868 = vadd.f32 0.0, %v1867
  %v1869 = vpop.f32.mrb[0].mxu0
  %1870 = vdwg.mxu0
  %1871 = vmatprep.subr.mxu0 0.0
  %v1872 = vand.u32 %v1780, 4294901760
  %v1873 = vsub.f32 %v1780, %v1872
  %v1874 = vand.u32 %v1873, 4294901760
  %v1875 = vsub.f32 %v1873, %v1874
  %v1876 = vand.u32 %v1875, 4294901760
  %1877 = vmatpush1.msra.mxu0 %v1876
  %1878 = vmatprep.subr.mxu0 0.0
  %v1879 = vand.u32 %v1781, 4294901760
  %v1880 = vsub.f32 %v1781, %v1879
  %v1881 = vand.u32 %v1880, 4294901760
  %v1882 = vsub.f32 %v1880, %v1881
  %v1883 = vand.u32 %v1882, 4294901760
  %1884 = vmatpush1.msra.mxu0 %v1883
  %1885 = vmatprep.subr.mxu0 0.0
  %v1886 = vand.u32 %v1782, 4294901760
  %v1887 = vsub.f32 %v1782, %v1886
  %v1888 = vand.u32 %v1887, 4294901760
  %v1889 = vsub.f32 %v1887, %v1888
  %v1890 = vand.u32 %v1889, 4294901760
  %1891 = vmatpush1.msra.mxu0 %v1890
  %1892 = vmatprep.subr.mxu0 0.0
  %v1893 = vand.u32 %v1783, 4294901760
  %v1894 = vsub.f32 %v1783, %v1893
  %v1895 = vand.u32 %v1894, 4294901760
  %v1896 = vsub.f32 %v1894, %v1895
  %v1897 = vand.u32 %v1896, 4294901760
  %1898 = vmatpush1.msra.mxu0 %v1897
  %1899 = vmatprep.subr.mxu0 0.0
  %v1900 = vand.u32 %v1784, 4294901760
  %v1901 = vsub.f32 %v1784, %v1900
  %v1902 = vand.u32 %v1901, 4294901760
  %v1903 = vsub.f32 %v1901, %v1902
  %v1904 = vand.u32 %v1903, 4294901760
  %1905 = vmatpush1.msra.mxu0 %v1904
  %1906 = vmatprep.subr.mxu0 0.0
  %v1907 = vand.u32 %v1785, 4294901760
  %v1908 = vsub.f32 %v1785, %v1907
  %v1909 = vand.u32 %v1908, 4294901760
  %v1910 = vsub.f32 %v1908, %v1909
  %v1911 = vand.u32 %v1910, 4294901760
  %1912 = vmatpush1.msra.mxu0 %v1911
  %1913 = vmatprep.subr.mxu0 0.0
  %v1914 = vand.u32 %v1786, 4294901760
  %v1915 = vsub.f32 %v1786, %v1914
  %v1916 = vand.u32 %v1915, 4294901760
  %v1917 = vsub.f32 %v1915, %v1916
  %v1918 = vand.u32 %v1917, 4294901760
  %1919 = vmatpush1.msra.mxu0 %v1918
  %1920 = vmatprep.subr.mxu0 0.0
  %v1921 = vand.u32 %v1787, 4294901760
  %v1922 = vsub.f32 %v1787, %v1921
  %v1923 = vand.u32 %v1922, 4294901760
  %v1924 = vsub.f32 %v1922, %v1923
  %v1925 = vand.u32 %v1924, 4294901760
  %1926 = vmatpush1.msra.mxu0 %v1925
  %1927 = vmatprep.subr.mxu0 0.0
  %1928 = vmatpush1.msra.mxu0 0.0
  %1929 = vmatprep.subr.mxu0 0.0
  %1930 = vmatpush1.msra.mxu0 0.0
  %1931 = vmatprep.subr.mxu0 0.0
  %1932 = vmatpush1.msra.mxu0 0.0
  %1933 = vmatprep.subr.mxu0 0.0
  %1934 = vmatpush1.msra.mxu0 0.0
  %1935 = vmatprep.subr.mxu0 0.0
  %1936 = vmatpush1.msra.mxu0 0.0
  %1937 = vmatprep.subr.mxu0 0.0
  %1938 = vmatpush1.msra.mxu0 0.0
  %1939 = vmatprep.subr.mxu0 0.0
  %1940 = vmatpush1.msra.mxu0 0.0
  %1941 = vmatprep.subr.mxu0 0.0
  %1942 = vmatpush1.msra.mxu0 0.0
  %1943 = vmatprep.subr.mxu0 0.0
  %1944 = vmatpush1.msra.mxu0 0.0
  %1945 = vmatprep.subr.mxu0 0.0
  %1946 = vmatpush1.msra.mxu0 0.0
  %1947 = vmatprep.subr.mxu0 0.0
  %1948 = vmatpush1.msra.mxu0 0.0
  %1949 = vmatprep.subr.mxu0 0.0
  %1950 = vmatpush1.msra.mxu0 0.0
  %1951 = vmatprep.subr.mxu0 0.0
  %1952 = vmatpush1.msra.mxu0 0.0
  %1953 = vmatprep.subr.mxu0 0.0
  %1954 = vmatpush1.msra.mxu0 0.0
  %1955 = vmatprep.subr.mxu0 0.0
  %1956 = vmatpush1.msra.mxu0 0.0
  %1957 = vmatprep.subr.mxu0 0.0
  %1958 = vmatpush1.msra.mxu0 0.0
  %1959 = vmatprep.subr.mxu0 0.0
  %1960 = vmatpush1.msra.mxu0 0.0
  %1961 = vmatprep.subr.mxu0 0.0
  %1962 = vmatpush1.msra.mxu0 0.0
  %1963 = vmatprep.subr.mxu0 0.0
  %1964 = vmatpush1.msra.mxu0 0.0
  %1965 = vmatprep.subr.mxu0 0.0
  %1966 = vmatpush1.msra.mxu0 0.0
  %1967 = vmatprep.subr.mxu0 0.0
  %1968 = vmatpush1.msra.mxu0 0.0
  %1969 = vmatprep.subr.mxu0 0.0
  %1970 = vmatpush1.msra.mxu0 0.0
  %1971 = vmatprep.subr.mxu0 0.0
  %1972 = vmatpush1.msra.mxu0 0.0
  %1973 = vmatprep.subr.mxu0 0.0
  %1974 = vmatpush1.msra.mxu0 0.0
  %1975 = vmatprep.mubr.f32.mxu0 0.0
  %v1976 = vand.u32 %v155, 4294901760
  %1977 = vmatmul.mubr.f32.gmra.mrb[0].mxu0 %v1976
  %v1978 = vpop.f32.mrb[0].mxu0
  %v1979 = vadd.f32 %v1868, %v1978
  %v1980 = vpop.f32.mrb[0].mxu0
  %1981 = vdwg.mxu0
  %1982 = vmatprep.subr.mxu0 0.0
  %v1983 = vand.u32 %v1780, 4294901760
  %v1984 = vsub.f32 %v1780, %v1983
  %1985 = vmatpush1.msra.mxu0 %v1984
  %1986 = vmatprep.subr.mxu0 0.0
  %v1987 = vand.u32 %v1781, 4294901760
  %v1988 = vsub.f32 %v1781, %v1987
  %1989 = vmatpush1.msra.mxu0 %v1988
  %1990 = vmatprep.subr.mxu0 0.0
  %v1991 = vand.u32 %v1782, 4294901760
  %v1992 = vsub.f32 %v1782, %v1991
  %1993 = vmatpush1.msra.mxu0 %v1992
  %1994 = vmatprep.subr.mxu0 0.0
  %v1995 = vand.u32 %v1783, 4294901760
  %v1996 = vsub.f32 %v1783, %v1995
  %1997 = vmatpush1.msra.mxu0 %v1996
  %1998 = vmatprep.subr.mxu0 0.0
  %v1999 = vand.u32 %v1784, 4294901760
  %v2000 = vsub.f32 %v1784, %v1999
  %2001 = vmatpush1.msra.mxu0 %v2000
  %2002 = vmatprep.subr.mxu0 0.0
  %v2003 = vand.u32 %v1785, 4294901760
  %v2004 = vsub.f32 %v1785, %v2003
  %2005 = vmatpush1.msra.mxu0 %v2004
  %2006 = vmatprep.subr.mxu0 0.0
  %v2007 = vand.u32 %v1786, 4294901760
  %v2008 = vsub.f32 %v1786, %v2007
  %2009 = vmatpush1.msra.mxu0 %v2008
  %2010 = vmatprep.subr.mxu0 0.0
  %v2011 = vand.u32 %v1787, 4294901760
  %v2012 = vsub.f32 %v1787, %v2011
  %2013 = vmatpush1.msra.mxu0 %v2012
  %2014 = vmatprep.subr.mxu0 0.0
  %2015 = vmatpush1.msra.mxu0 0.0
  %2016 = vmatprep.subr.mxu0 0.0
  %2017 = vmatpush1.msra.mxu0 0.0
  %2018 = vmatprep.subr.mxu0 0.0
  %2019 = vmatpush1.msra.mxu0 0.0
  %2020 = vmatprep.subr.mxu0 0.0
  %2021 = vmatpush1.msra.mxu0 0.0
  %2022 = vmatprep.subr.mxu0 0.0
  %2023 = vmatpush1.msra.mxu0 0.0
  %2024 = vmatprep.subr.mxu0 0.0
  %2025 = vmatpush1.msra.mxu0 0.0
  %2026 = vmatprep.subr.mxu0 0.0
  %2027 = vmatpush1.msra.mxu0 0.0
  %2028 = vmatprep.subr.mxu0 0.0
  %2029 = vmatpush1.msra.mxu0 0.0
  %2030 = vmatprep.subr.mxu0 0.0
  %2031 = vmatpush1.msra.mxu0 0.0
  %2032 = vmatprep.subr.mxu0 0.0
  %2033 = vmatpush1.msra.mxu0 0.0
  %2034 = vmatprep.subr.mxu0 0.0
  %2035 = vmatpush1.msra.mxu0 0.0
  %2036 = vmatprep.subr.mxu0 0.0
  %2037 = vmatpush1.msra.mxu0 0.0
  %2038 = vmatprep.subr.mxu0 0.0
  %2039 = vmatpush1.msra.mxu0 0.0
  %2040 = vmatprep.subr.mxu0 0.0
  %2041 = vmatpush1.msra.mxu0 0.0
  %2042 = vmatprep.subr.mxu0 0.0
  %2043 = vmatpush1.msra.mxu0 0.0
  %2044 = vmatprep.subr.mxu0 0.0
  %2045 = vmatpush1.msra.mxu0 0.0
  %2046 = vmatprep.subr.mxu0 0.0
  %2047 = vmatpush1.msra.mxu0 0.0
  %2048 = vmatprep.subr.mxu0 0.0
  %2049 = vmatpush1.msra.mxu0 0.0
  %2050 = vmatprep.subr.mxu0 0.0
  %2051 = vmatpush1.msra.mxu0 0.0
  %2052 = vmatprep.subr.mxu0 0.0
  %2053 = vmatpush1.msra.mxu0 0.0
  %2054 = vmatprep.subr.mxu0 0.0
  %2055 = vmatpush1.msra.mxu0 0.0
  %2056 = vmatprep.subr.mxu0 0.0
  %2057 = vmatpush1.msra.mxu0 0.0
  %2058 = vmatprep.subr.mxu0 0.0
  %2059 = vmatpush1.msra.mxu0 0.0
  %2060 = vmatprep.subr.mxu0 0.0
  %2061 = vmatpush1.msra.mxu0 0.0
  %2062 = vmatprep.mubr.f32.mxu0 0.0
  %v2063 = vand.u32 %v155, 4294901760
  %v2064 = vsub.f32 %v155, %v2063
  %2065 = vmatmul.mubr.f32.gmra.mrb[0].mxu0 %v2064
  %v2066 = vpop.f32.mrb[0].mxu0
  %v2067 = vadd.f32 %v1979, %v2066
  %v2068 = vpop.f32.mrb[0].mxu0
  %2069 = vdwg.mxu0
  %2070 = vmatprep.subr.mxu0 0.0
  %v2071 = vand.u32 %v1780, 4294901760
  %2072 = vmatpush1.msra.mxu0 %v2071
  %2073 = vmatprep.subr.mxu0 0.0
  %v2074 = vand.u32 %v1781, 4294901760
  %2075 = vmatpush1.msra.mxu0 %v2074
  %2076 = vmatprep.subr.mxu0 0.0
  %v2077 = vand.u32 %v1782, 4294901760
  %2078 = vmatpush1.msra.mxu0 %v2077
  %2079 = vmatprep.subr.mxu0 0.0
  %v2080 = vand.u32 %v1783, 4294901760
  %2081 = vmatpush1.msra.mxu0 %v2080
  %2082 = vmatprep.subr.mxu0 0.0
  %v2083 = vand.u32 %v1784, 4294901760
  %2084 = vmatpush1.msra.mxu0 %v2083
  %2085 = vmatprep.subr.mxu0 0.0
  %v2086 = vand.u32 %v1785, 4294901760
  %2087 = vmatpush1.msra.mxu0 %v2086
  %2088 = vmatprep.subr.mxu0 0.0
  %v2089 = vand.u32 %v1786, 4294901760
  %2090 = vmatpush1.msra.mxu0 %v2089
  %2091 = vmatprep.subr.mxu0 0.0
  %v2092 = vand.u32 %v1787, 4294901760
  %2093 = vmatpush1.msra.mxu0 %v2092
  %2094 = vmatprep.subr.mxu0 0.0
  %2095 = vmatpush1.msra.mxu0 0.0
  %2096 = vmatprep.subr.mxu0 0.0
  %2097 = vmatpush1.msra.mxu0 0.0
  %2098 = vmatprep.subr.mxu0 0.0
  %2099 = vmatpush1.msra.mxu0 0.0
  %2100 = vmatprep.subr.mxu0 0.0
  %2101 = vmatpush1.msra.mxu0 0.0
  %2102 = vmatprep.subr.mxu0 0.0
  %2103 = vmatpush1.msra.mxu0 0.0
  %2104 = vmatprep.subr.mxu0 0.0
  %2105 = vmatpush1.msra.mxu0 0.0
  %2106 = vmatprep.subr.mxu0 0.0
  %2107 = vmatpush1.msra.mxu0 0.0
  %2108 = vmatprep.subr.mxu0 0.0
  %2109 = vmatpush1.msra.mxu0 0.0
  %2110 = vmatprep.subr.mxu0 0.0
  %2111 = vmatpush1.msra.mxu0 0.0
  %2112 = vmatprep.subr.mxu0 0.0
  %2113 = vmatpush1.msra.mxu0 0.0
  %2114 = vmatprep.subr.mxu0 0.0
  %2115 = vmatpush1.msra.mxu0 0.0
  %2116 = vmatprep.subr.mxu0 0.0
  %2117 = vmatpush1.msra.mxu0 0.0
  %2118 = vmatprep.subr.mxu0 0.0
  %2119 = vmatpush1.msra.mxu0 0.0
  %2120 = vmatprep.subr.mxu0 0.0
  %2121 = vmatpush1.msra.mxu0 0.0
  %2122 = vmatprep.subr.mxu0 0.0
  %2123 = vmatpush1.msra.mxu0 0.0
  %2124 = vmatprep.subr.mxu0 0.0
  %2125 = vmatpush1.msra.mxu0 0.0
  %2126 = vmatprep.subr.mxu0 0.0
  %2127 = vmatpush1.msra.mxu0 0.0
  %2128 = vmatprep.subr.mxu0 0.0
  %2129 = vmatpush1.msra.mxu0 0.0
  %2130 = vmatprep.subr.mxu0 0.0
  %2131 = vmatpush1.msra.mxu0 0.0
  %2132 = vmatprep.subr.mxu0 0.0
  %2133 = vmatpush1.msra.mxu0 0.0
  %2134 = vmatprep.subr.mxu0 0.0
  %2135 = vmatpush1.msra.mxu0 0.0
  %2136 = vmatprep.subr.mxu0 0.0
  %2137 = vmatpush1.msra.mxu0 0.0
  %2138 = vmatprep.subr.mxu0 0.0
  %2139 = vmatpush1.msra.mxu0 0.0
  %2140 = vmatprep.subr.mxu0 0.0
  %2141 = vmatpush1.msra.mxu0 0.0
  %2142 = vmatprep.mubr.f32.mxu0 0.0
  %v2143 = vand.u32 %v155, 4294901760
  %v2144 = vsub.f32 %v155, %v2143
  %v2145 = vand.u32 %v2144, 4294901760
  %2146 = vmatmul.mubr.f32.gmra.mrb[0].mxu0 %v2145
  %v2147 = vpop.f32.mrb[0].mxu0
  %v2148 = vadd.f32 %v2067, %v2147
  %v2149 = vpop.f32.mrb[0].mxu0
  %2150 = vdwg.mxu0
  %2151 = vmatprep.subr.mxu0 0.0
  %v2152 = vand.u32 %v1780, 4294901760
  %v2153 = vsub.f32 %v1780, %v2152
  %v2154 = vand.u32 %v2153, 4294901760
  %2155 = vmatpush1.msra.mxu0 %v2154
  %2156 = vmatprep.subr.mxu0 0.0
  %v2157 = vand.u32 %v1781, 4294901760
  %v2158 = vsub.f32 %v1781, %v2157
  %v2159 = vand.u32 %v2158, 4294901760
  %2160 = vmatpush1.msra.mxu0 %v2159
  %2161 = vmatprep.subr.mxu0 0.0
  %v2162 = vand.u32 %v1782, 4294901760
  %v2163 = vsub.f32 %v1782, %v2162
  %v2164 = vand.u32 %v2163, 4294901760
  %2165 = vmatpush1.msra.mxu0 %v2164
  %2166 = vmatprep.subr.mxu0 0.0
  %v2167 = vand.u32 %v1783, 4294901760
  %v2168 = vsub.f32 %v1783, %v2167
  %v2169 = vand.u32 %v2168, 4294901760
  %2170 = vmatpush1.msra.mxu0 %v2169
  %2171 = vmatprep.subr.mxu0 0.0
  %v2172 = vand.u32 %v1784, 4294901760
  %v2173 = vsub.f32 %v1784, %v2172
  %v2174 = vand.u32 %v2173, 4294901760
  %2175 = vmatpush1.msra.mxu0 %v2174
  %2176 = vmatprep.subr.mxu0 0.0
  %v2177 = vand.u32 %v1785, 4294901760
  %v2178 = vsub.f32 %v1785, %v2177
  %v2179 = vand.u32 %v2178, 4294901760
  %2180 = vmatpush1.msra.mxu0 %v2179
  %2181 = vmatprep.subr.mxu0 0.0
  %v2182 = vand.u32 %v1786, 4294901760
  %v2183 = vsub.f32 %v1786, %v2182
  %v2184 = vand.u32 %v2183, 4294901760
  %2185 = vmatpush1.msra.mxu0 %v2184
  %2186 = vmatprep.subr.mxu0 0.0
  %v2187 = vand.u32 %v1787, 4294901760
  %v2188 = vsub.f32 %v1787, %v2187
  %v2189 = vand.u32 %v2188, 4294901760
  %2190 = vmatpush1.msra.mxu0 %v2189
  %2191 = vmatprep.subr.mxu0 0.0
  %2192 = vmatpush1.msra.mxu0 0.0
  %2193 = vmatprep.subr.mxu0 0.0
  %2194 = vmatpush1.msra.mxu0 0.0
  %2195 = vmatprep.subr.mxu0 0.0
  %2196 = vmatpush1.msra.mxu0 0.0
  %2197 = vmatprep.subr.mxu0 0.0
  %2198 = vmatpush1.msra.mxu0 0.0
  %2199 = vmatprep.subr.mxu0 0.0
  %2200 = vmatpush1.msra.mxu0 0.0
  %2201 = vmatprep.subr.mxu0 0.0
  %2202 = vmatpush1.msra.mxu0 0.0
  %2203 = vmatprep.subr.mxu0 0.0
  %2204 = vmatpush1.msra.mxu0 0.0
  %2205 = vmatprep.subr.mxu0 0.0
  %2206 = vmatpush1.msra.mxu0 0.0
  %2207 = vmatprep.subr.mxu0 0.0
  %2208 = vmatpush1.msra.mxu0 0.0
  %2209 = vmatprep.subr.mxu0 0.0
  %2210 = vmatpush1.msra.mxu0 0.0
  %2211 = vmatprep.subr.mxu0 0.0
  %2212 = vmatpush1.msra.mxu0 0.0
  %2213 = vmatprep.subr.mxu0 0.0
  %2214 = vmatpush1.msra.mxu0 0.0
  %2215 = vmatprep.subr.mxu0 0.0
  %2216 = vmatpush1.msra.mxu0 0.0
  %2217 = vmatprep.subr.mxu0 0.0
  %2218 = vmatpush1.msra.mxu0 0.0
  %2219 = vmatprep.subr.mxu0 0.0
  %2220 = vmatpush1.msra.mxu0 0.0
  %2221 = vmatprep.subr.mxu0 0.0
  %2222 = vmatpush1.msra.mxu0 0.0
  %2223 = vmatprep.subr.mxu0 0.0
  %2224 = vmatpush1.msra.mxu0 0.0
  %2225 = vmatprep.subr.mxu0 0.0
  %2226 = vmatpush1.msra.mxu0 0.0
  %2227 = vmatprep.subr.mxu0 0.0
  %2228 = vmatpush1.msra.mxu0 0.0
  %2229 = vmatprep.subr.mxu0 0.0
  %2230 = vmatpush1.msra.mxu0 0.0
  %2231 = vmatprep.subr.mxu0 0.0
  %2232 = vmatpush1.msra.mxu0 0.0
  %2233 = vmatprep.subr.mxu0 0.0
  %2234 = vmatpush1.msra.mxu0 0.0
  %2235 = vmatprep.subr.mxu0 0.0
  %2236 = vmatpush1.msra.mxu0 0.0
  %2237 = vmatprep.subr.mxu0 0.0
  %2238 = vmatpush1.msra.mxu0 0.0
  %2239 = vmatprep.mubr.f32.mxu0 0.0
  %v2240 = vand.u32 %v155, 4294901760
  %2241 = vmatmul.mubr.f32.gmra.mrb[0].mxu0 %v2240
  %v2242 = vpop.f32.mrb[0].mxu0
  %v2243 = vadd.f32 %v2148, %v2242
  %v2244 = vpop.f32.mrb[0].mxu0
  %2245 = vdwg.mxu0
  %2246 = vmatprep.subr.mxu0 0.0
  %v2247 = vand.u32 %v1780, 4294901760
  %2248 = vmatpush1.msra.mxu0 %v2247
  %2249 = vmatprep.subr.mxu0 0.0
  %v2250 = vand.u32 %v1781, 4294901760
  %2251 = vmatpush1.msra.mxu0 %v2250
  %2252 = vmatprep.subr.mxu0 0.0
  %v2253 = vand.u32 %v1782, 4294901760
  %2254 = vmatpush1.msra.mxu0 %v2253
  %2255 = vmatprep.subr.mxu0 0.0
  %v2256 = vand.u32 %v1783, 4294901760
  %2257 = vmatpush1.msra.mxu0 %v2256
  %2258 = vmatprep.subr.mxu0 0.0
  %v2259 = vand.u32 %v1784, 4294901760
  %2260 = vmatpush1.msra.mxu0 %v2259
  %2261 = vmatprep.subr.mxu0 0.0
  %v2262 = vand.u32 %v1785, 4294901760
  %2263 = vmatpush1.msra.mxu0 %v2262
  %2264 = vmatprep.subr.mxu0 0.0
  %v2265 = vand.u32 %v1786, 4294901760
  %2266 = vmatpush1.msra.mxu0 %v2265
  %2267 = vmatprep.subr.mxu0 0.0
  %v2268 = vand.u32 %v1787, 4294901760
  %2269 = vmatpush1.msra.mxu0 %v2268
  %2270 = vmatprep.subr.mxu0 0.0
  %2271 = vmatpush1.msra.mxu0 0.0
  %2272 = vmatprep.subr.mxu0 0.0
  %2273 = vmatpush1.msra.mxu0 0.0
  %2274 = vmatprep.subr.mxu0 0.0
  %2275 = vmatpush1.msra.mxu0 0.0
  %2276 = vmatprep.subr.mxu0 0.0
  %2277 = vmatpush1.msra.mxu0 0.0
  %2278 = vmatprep.subr.mxu0 0.0
  %2279 = vmatpush1.msra.mxu0 0.0
  %2280 = vmatprep.subr.mxu0 0.0
  %2281 = vmatpush1.msra.mxu0 0.0
  %2282 = vmatprep.subr.mxu0 0.0
  %2283 = vmatpush1.msra.mxu0 0.0
  %2284 = vmatprep.subr.mxu0 0.0
  %2285 = vmatpush1.msra.mxu0 0.0
  %2286 = vmatprep.subr.mxu0 0.0
  %2287 = vmatpush1.msra.mxu0 0.0
  %2288 = vmatprep.subr.mxu0 0.0
  %2289 = vmatpush1.msra.mxu0 0.0
  %2290 = vmatprep.subr.mxu0 0.0
  %2291 = vmatpush1.msra.mxu0 0.0
  %2292 = vmatprep.subr.mxu0 0.0
  %2293 = vmatpush1.msra.mxu0 0.0
  %2294 = vmatprep.subr.mxu0 0.0
  %2295 = vmatpush1.msra.mxu0 0.0
  %2296 = vmatprep.subr.mxu0 0.0
  %2297 = vmatpush1.msra.mxu0 0.0
  %2298 = vmatprep.subr.mxu0 0.0
  %2299 = vmatpush1.msra.mxu0 0.0
  %2300 = vmatprep.subr.mxu0 0.0
  %2301 = vmatpush1.msra.mxu0 0.0
  %2302 = vmatprep.subr.mxu0 0.0
  %2303 = vmatpush1.msra.mxu0 0.0
  %2304 = vmatprep.subr.mxu0 0.0
  %2305 = vmatpush1.msra.mxu0 0.0
  %2306 = vmatprep.subr.mxu0 0.0
  %2307 = vmatpush1.msra.mxu0 0.0
  %2308 = vmatprep.subr.mxu0 0.0
  %2309 = vmatpush1.msra.mxu0 0.0
  %2310 = vmatprep.subr.mxu0 0.0
  %2311 = vmatpush1.msra.mxu0 0.0
  %2312 = vmatprep.subr.mxu0 0.0
  %2313 = vmatpush1.msra.mxu0 0.0
  %2314 = vmatprep.subr.mxu0 0.0
  %2315 = vmatpush1.msra.mxu0 0.0
  %2316 = vmatprep.subr.mxu0 0.0
  %2317 = vmatpush1.msra.mxu0 0.0
  %2318 = vmatprep.mubr.f32.mxu0 0.0
  %v2319 = vand.u32 %v155, 4294901760
  %2320 = vmatmul.mubr.f32.gmra.mrb[0].mxu0 %v2319
  %v2321 = vpop.f32.mrb[0].mxu0
  %v2322 = vadd.f32 %v2243, %v2321
  %v2323 = vpop.f32.mrb[0].mxu0
  %2324 = vdwg.mxu0
  %2325 = vmatprep.subr.mxu0 0.0
  %v2326 = vand.u32 %v1772, 4294901760
  %2327 = vmatpush1.msra.mxu0 %v2326
  %2328 = vmatprep.subr.mxu0 0.0
  %v2329 = vand.u32 %v1773, 4294901760
  %2330 = vmatpush1.msra.mxu0 %v2329
  %2331 = vmatprep.subr.mxu0 0.0
  %v2332 = vand.u32 %v1774, 4294901760
  %2333 = vmatpush1.msra.mxu0 %v2332
  %2334 = vmatprep.subr.mxu0 0.0
  %v2335 = vand.u32 %v1775, 4294901760
  %2336 = vmatpush1.msra.mxu0 %v2335
  %2337 = vmatprep.subr.mxu0 0.0
  %v2338 = vand.u32 %v1776, 4294901760
  %2339 = vmatpush1.msra.mxu0 %v2338
  %2340 = vmatprep.subr.mxu0 0.0
  %v2341 = vand.u32 %v1777, 4294901760
  %2342 = vmatpush1.msra.mxu0 %v2341
  %2343 = vmatprep.subr.mxu0 0.0
  %v2344 = vand.u32 %v1778, 4294901760
  %2345 = vmatpush1.msra.mxu0 %v2344
  %2346 = vmatprep.subr.mxu0 0.0
  %v2347 = vand.u32 %v1779, 4294901760
  %2348 = vmatpush1.msra.mxu0 %v2347
  %2349 = vmatprep.subr.mxu0 0.0
  %2350 = vmatpush1.msra.mxu0 0.0
  %2351 = vmatprep.subr.mxu0 0.0
  %2352 = vmatpush1.msra.mxu0 0.0
  %2353 = vmatprep.subr.mxu0 0.0
  %2354 = vmatpush1.msra.mxu0 0.0
  %2355 = vmatprep.subr.mxu0 0.0
  %2356 = vmatpush1.msra.mxu0 0.0
  %2357 = vmatprep.subr.mxu0 0.0
  %2358 = vmatpush1.msra.mxu0 0.0
  %2359 = vmatprep.subr.mxu0 0.0
  %2360 = vmatpush1.msra.mxu0 0.0
  %2361 = vmatprep.subr.mxu0 0.0
  %2362 = vmatpush1.msra.mxu0 0.0
  %2363 = vmatprep.subr.mxu0 0.0
  %2364 = vmatpush1.msra.mxu0 0.0
  %2365 = vmatprep.subr.mxu0 0.0
  %2366 = vmatpush1.msra.mxu0 0.0
  %2367 = vmatprep.subr.mxu0 0.0
  %2368 = vmatpush1.msra.mxu0 0.0
  %2369 = vmatprep.subr.mxu0 0.0
  %2370 = vmatpush1.msra.mxu0 0.0
  %2371 = vmatprep.subr.mxu0 0.0
  %2372 = vmatpush1.msra.mxu0 0.0
  %2373 = vmatprep.subr.mxu0 0.0
  %2374 = vmatpush1.msra.mxu0 0.0
  %2375 = vmatprep.subr.mxu0 0.0
  %2376 = vmatpush1.msra.mxu0 0.0
  %2377 = vmatprep.subr.mxu0 0.0
  %2378 = vmatpush1.msra.mxu0 0.0
  %2379 = vmatprep.subr.mxu0 0.0
  %2380 = vmatpush1.msra.mxu0 0.0
  %2381 = vmatprep.subr.mxu0 0.0
  %2382 = vmatpush1.msra.mxu0 0.0
  %2383 = vmatprep.subr.mxu0 0.0
  %2384 = vmatpush1.msra.mxu0 0.0
  %2385 = vmatprep.subr.mxu0 0.0
  %2386 = vmatpush1.msra.mxu0 0.0
  %2387 = vmatprep.subr.mxu0 0.0
  %2388 = vmatpush1.msra.mxu0 0.0
  %2389 = vmatprep.subr.mxu0 0.0
  %2390 = vmatpush1.msra.mxu0 0.0
  %2391 = vmatprep.subr.mxu0 0.0
  %2392 = vmatpush1.msra.mxu0 0.0
  %2393 = vmatprep.subr.mxu0 0.0
  %2394 = vmatpush1.msra.mxu0 0.0
  %2395 = vmatprep.subr.mxu0 0.0
  %2396 = vmatpush1.msra.mxu0 0.0
  %2397 = vmatprep.mubr.f32.mxu0 0.0
  %v2398 = vand.u32 %v67, 4294901760
  %v2399 = vsub.f32 %v67, %v2398
  %v2400 = vand.u32 %v2399, 4294901760
  %v2401 = vsub.f32 %v2399, %v2400
  %v2402 = vand.u32 %v2401, 4294901760
  %2403 = vmatmul.mubr.f32.gmra.mrb[0].mxu0 %v2402
  %v2404 = vpop.f32.mrb[0].mxu0
  %v2405 = vadd.f32 %v2322, %v2404
  %v2406 = vpop.f32.mrb[0].mxu0
  %2407 = vdwg.mxu0
  %2408 = vmatprep.subr.mxu0 0.0
  %v2409 = vand.u32 %v1772, 4294901760
  %v2410 = vsub.f32 %v1772, %v2409
  %v2411 = vand.u32 %v2410, 4294901760
  %v2412 = vsub.f32 %v2410, %v2411
  %v2413 = vand.u32 %v2412, 4294901760
  %2414 = vmatpush1.msra.mxu0 %v2413
  %2415 = vmatprep.subr.mxu0 0.0
  %v2416 = vand.u32 %v1773, 4294901760
  %v2417 = vsub.f32 %v1773, %v2416
  %v2418 = vand.u32 %v2417, 4294901760
  %v2419 = vsub.f32 %v2417, %v2418
  %v2420 = vand.u32 %v2419, 4294901760
  %2421 = vmatpush1.msra.mxu0 %v2420
  %2422 = vmatprep.subr.mxu0 0.0
  %v2423 = vand.u32 %v1774, 4294901760
  %v2424 = vsub.f32 %v1774, %v2423
  %v2425 = vand.u32 %v2424, 4294901760
  %v2426 = vsub.f32 %v2424, %v2425
  %v2427 = vand.u32 %v2426, 4294901760
  %2428 = vmatpush1.msra.mxu0 %v2427
  %2429 = vmatprep.subr.mxu0 0.0
  %v2430 = vand.u32 %v1775, 4294901760
  %v2431 = vsub.f32 %v1775, %v2430
  %v2432 = vand.u32 %v2431, 4294901760
  %v2433 = vsub.f32 %v2431, %v2432
  %v2434 = vand.u32 %v2433, 4294901760
  %2435 = vmatpush1.msra.mxu0 %v2434
  %2436 = vmatprep.subr.mxu0 0.0
  %v2437 = vand.u32 %v1776, 4294901760
  %v2438 = vsub.f32 %v1776, %v2437
  %v2439 = vand.u32 %v2438, 4294901760
  %v2440 = vsub.f32 %v2438, %v2439
  %v2441 = vand.u32 %v2440, 4294901760
  %2442 = vmatpush1.msra.mxu0 %v2441
  %2443 = vmatprep.subr.mxu0 0.0
  %v2444 = vand.u32 %v1777, 4294901760
  %v2445 = vsub.f32 %v1777, %v2444
  %v2446 = vand.u32 %v2445, 4294901760
  %v2447 = vsub.f32 %v2445, %v2446
  %v2448 = vand.u32 %v2447, 4294901760
  %2449 = vmatpush1.msra.mxu0 %v2448
  %2450 = vmatprep.subr.mxu0 0.0
  %v2451 = vand.u32 %v1778, 4294901760
  %v2452 = vsub.f32 %v1778, %v2451
  %v2453 = vand.u32 %v2452, 4294901760
  %v2454 = vsub.f32 %v2452, %v2453
  %v2455 = vand.u32 %v2454, 4294901760
  %2456 = vmatpush1.msra.mxu0 %v2455
  %2457 = vmatprep.subr.mxu0 0.0
  %v2458 = vand.u32 %v1779, 4294901760
  %v2459 = vsub.f32 %v1779, %v2458
  %v2460 = vand.u32 %v2459, 4294901760
  %v2461 = vsub.f32 %v2459, %v2460
  %v2462 = vand.u32 %v2461, 4294901760
  %2463 = vmatpush1.msra.mxu0 %v2462
  %2464 = vmatprep.subr.mxu0 0.0
  %2465 = vmatpush1.msra.mxu0 0.0
  %2466 = vmatprep.subr.mxu0 0.0
  %2467 = vmatpush1.msra.mxu0 0.0
  %2468 = vmatprep.subr.mxu0 0.0
  %2469 = vmatpush1.msra.mxu0 0.0
  %2470 = vmatprep.subr.mxu0 0.0
  %2471 = vmatpush1.msra.mxu0 0.0
  %2472 = vmatprep.subr.mxu0 0.0
  %2473 = vmatpush1.msra.mxu0 0.0
  %2474 = vmatprep.subr.mxu0 0.0
  %2475 = vmatpush1.msra.mxu0 0.0
  %2476 = vmatprep.subr.mxu0 0.0
  %2477 = vmatpush1.msra.mxu0 0.0
  %2478 = vmatprep.subr.mxu0 0.0
  %2479 = vmatpush1.msra.mxu0 0.0
  %2480 = vmatprep.subr.mxu0 0.0
  %2481 = vmatpush1.msra.mxu0 0.0
  %2482 = vmatprep.subr.mxu0 0.0
  %2483 = vmatpush1.msra.mxu0 0.0
  %2484 = vmatprep.subr.mxu0 0.0
  %2485 = vmatpush1.msra.mxu0 0.0
  %2486 = vmatprep.subr.mxu0 0.0
  %2487 = vmatpush1.msra.mxu0 0.0
  %2488 = vmatprep.subr.mxu0 0.0
  %2489 = vmatpush1.msra.mxu0 0.0
  %2490 = vmatprep.subr.mxu0 0.0
  %2491 = vmatpush1.msra.mxu0 0.0
  %2492 = vmatprep.subr.mxu0 0.0
  %2493 = vmatpush1.msra.mxu0 0.0
  %2494 = vmatprep.subr.mxu0 0.0
  %2495 = vmatpush1.msra.mxu0 0.0
  %2496 = vmatprep.subr.mxu0 0.0
  %2497 = vmatpush1.msra.mxu0 0.0
  %2498 = vmatprep.subr.mxu0 0.0
  %2499 = vmatpush1.msra.mxu0 0.0
  %2500 = vmatprep.subr.mxu0 0.0
  %2501 = vmatpush1.msra.mxu0 0.0
  %2502 = vmatprep.subr.mxu0 0.0
  %2503 = vmatpush1.msra.mxu0 0.0
  %2504 = vmatprep.subr.mxu0 0.0
  %2505 = vmatpush1.msra.mxu0 0.0
  %2506 = vmatprep.subr.mxu0 0.0
  %2507 = vmatpush1.msra.mxu0 0.0
  %2508 = vmatprep.subr.mxu0 0.0
  %2509 = vmatpush1.msra.mxu0 0.0
  %2510 = vmatprep.subr.mxu0 0.0
  %2511 = vmatpush1.msra.mxu0 0.0
  %2512 = vmatprep.mubr.f32.mxu0 0.0
  %v2513 = vand.u32 %v67, 4294901760
  %2514 = vmatmul.mubr.f32.gmra.mrb[0].mxu0 %v2513
  %v2515 = vpop.f32.mrb[0].mxu0
  %v2516 = vadd.f32 %v2405, %v2515
  %v2517 = vpop.f32.mrb[0].mxu0
  %2518 = vdwg.mxu0
  %2519 = vmatprep.subr.mxu0 0.0
  %v2520 = vand.u32 %v1772, 4294901760
  %v2521 = vsub.f32 %v1772, %v2520
  %2522 = vmatpush1.msra.mxu0 %v2521
  %2523 = vmatprep.subr.mxu0 0.0
  %v2524 = vand.u32 %v1773, 4294901760
  %v2525 = vsub.f32 %v1773, %v2524
  %2526 = vmatpush1.msra.mxu0 %v2525
  %2527 = vmatprep.subr.mxu0 0.0
  %v2528 = vand.u32 %v1774, 4294901760
  %v2529 = vsub.f32 %v1774, %v2528
  %2530 = vmatpush1.msra.mxu0 %v2529
  %2531 = vmatprep.subr.mxu0 0.0
  %v2532 = vand.u32 %v1775, 4294901760
  %v2533 = vsub.f32 %v1775, %v2532
  %2534 = vmatpush1.msra.mxu0 %v2533
  %2535 = vmatprep.subr.mxu0 0.0
  %v2536 = vand.u32 %v1776, 4294901760
  %v2537 = vsub.f32 %v1776, %v2536
  %2538 = vmatpush1.msra.mxu0 %v2537
  %2539 = vmatprep.subr.mxu0 0.0
  %v2540 = vand.u32 %v1777, 4294901760
  %v2541 = vsub.f32 %v1777, %v2540
  %2542 = vmatpush1.msra.mxu0 %v2541
  %2543 = vmatprep.subr.mxu0 0.0
  %v2544 = vand.u32 %v1778, 4294901760
  %v2545 = vsub.f32 %v1778, %v2544
  %2546 = vmatpush1.msra.mxu0 %v2545
  %2547 = vmatprep.subr.mxu0 0.0
  %v2548 = vand.u32 %v1779, 4294901760
  %v2549 = vsub.f32 %v1779, %v2548
  %2550 = vmatpush1.msra.mxu0 %v2549
  %2551 = vmatprep.subr.mxu0 0.0
  %2552 = vmatpush1.msra.mxu0 0.0
  %2553 = vmatprep.subr.mxu0 0.0
  %2554 = vmatpush1.msra.mxu0 0.0
  %2555 = vmatprep.subr.mxu0 0.0
  %2556 = vmatpush1.msra.mxu0 0.0
  %2557 = vmatprep.subr.mxu0 0.0
  %2558 = vmatpush1.msra.mxu0 0.0
  %2559 = vmatprep.subr.mxu0 0.0
  %2560 = vmatpush1.msra.mxu0 0.0
  %2561 = vmatprep.subr.mxu0 0.0
  %2562 = vmatpush1.msra.mxu0 0.0
  %2563 = vmatprep.subr.mxu0 0.0
  %2564 = vmatpush1.msra.mxu0 0.0
  %2565 = vmatprep.subr.mxu0 0.0
  %2566 = vmatpush1.msra.mxu0 0.0
  %2567 = vmatprep.subr.mxu0 0.0
  %2568 = vmatpush1.msra.mxu0 0.0
  %2569 = vmatprep.subr.mxu0 0.0
  %2570 = vmatpush1.msra.mxu0 0.0
  %2571 = vmatprep.subr.mxu0 0.0
  %2572 = vmatpush1.msra.mxu0 0.0
  %2573 = vmatprep.subr.mxu0 0.0
  %2574 = vmatpush1.msra.mxu0 0.0
  %2575 = vmatprep.subr.mxu0 0.0
  %2576 = vmatpush1.msra.mxu0 0.0
  %2577 = vmatprep.subr.mxu0 0.0
  %2578 = vmatpush1.msra.mxu0 0.0
  %2579 = vmatprep.subr.mxu0 0.0
  %2580 = vmatpush1.msra.mxu0 0.0
  %2581 = vmatprep.subr.mxu0 0.0
  %2582 = vmatpush1.msra.mxu0 0.0
  %2583 = vmatprep.subr.mxu0 0.0
  %2584 = vmatpush1.msra.mxu0 0.0
  %2585 = vmatprep.subr.mxu0 0.0
  %2586 = vmatpush1.msra.mxu0 0.0
  %2587 = vmatprep.subr.mxu0 0.0
  %2588 = vmatpush1.msra.mxu0 0.0
  %2589 = vmatprep.subr.mxu0 0.0
  %2590 = vmatpush1.msra.mxu0 0.0
  %2591 = vmatprep.subr.mxu0 0.0
  %2592 = vmatpush1.msra.mxu0 0.0
  %2593 = vmatprep.subr.mxu0 0.0
  %2594 = vmatpush1.msra.mxu0 0.0
  %2595 = vmatprep.subr.mxu0 0.0
  %2596 = vmatpush1.msra.mxu0 0.0
  %2597 = vmatprep.subr.mxu0 0.0
  %2598 = vmatpush1.msra.mxu0 0.0
  %2599 = vmatprep.mubr.f32.mxu0 0.0
  %v2600 = vand.u32 %v67, 4294901760
  %v2601 = vsub.f32 %v67, %v2600
  %2602 = vmatmul.mubr.f32.gmra.mrb[0].mxu0 %v2601
  %v2603 = vpop.f32.mrb[0].mxu0
  %v2604 = vadd.f32 %v2516, %v2603
  %v2605 = vpop.f32.mrb[0].mxu0
  %2606 = vdwg.mxu0
  %2607 = vmatprep.subr.mxu0 0.0
  %v2608 = vand.u32 %v1772, 4294901760
  %2609 = vmatpush1.msra.mxu0 %v2608
  %2610 = vmatprep.subr.mxu0 0.0
  %v2611 = vand.u32 %v1773, 4294901760
  %2612 = vmatpush1.msra.mxu0 %v2611
  %2613 = vmatprep.subr.mxu0 0.0
  %v2614 = vand.u32 %v1774, 4294901760
  %2615 = vmatpush1.msra.mxu0 %v2614
  %2616 = vmatprep.subr.mxu0 0.0
  %v2617 = vand.u32 %v1775, 4294901760
  %2618 = vmatpush1.msra.mxu0 %v2617
  %2619 = vmatprep.subr.mxu0 0.0
  %v2620 = vand.u32 %v1776, 4294901760
  %2621 = vmatpush1.msra.mxu0 %v2620
  %2622 = vmatprep.subr.mxu0 0.0
  %v2623 = vand.u32 %v1777, 4294901760
  %2624 = vmatpush1.msra.mxu0 %v2623
  %2625 = vmatprep.subr.mxu0 0.0
  %v2626 = vand.u32 %v1778, 4294901760
  %2627 = vmatpush1.msra.mxu0 %v2626
  %2628 = vmatprep.subr.mxu0 0.0
  %v2629 = vand.u32 %v1779, 4294901760
  %2630 = vmatpush1.msra.mxu0 %v2629
  %2631 = vmatprep.subr.mxu0 0.0
  %2632 = vmatpush1.msra.mxu0 0.0
  %2633 = vmatprep.subr.mxu0 0.0
  %2634 = vmatpush1.msra.mxu0 0.0
  %2635 = vmatprep.subr.mxu0 0.0
  %2636 = vmatpush1.msra.mxu0 0.0
  %2637 = vmatprep.subr.mxu0 0.0
  %2638 = vmatpush1.msra.mxu0 0.0
  %2639 = vmatprep.subr.mxu0 0.0
  %2640 = vmatpush1.msra.mxu0 0.0
  %2641 = vmatprep.subr.mxu0 0.0
  %2642 = vmatpush1.msra.mxu0 0.0
  %2643 = vmatprep.subr.mxu0 0.0
  %2644 = vmatpush1.msra.mxu0 0.0
  %2645 = vmatprep.subr.mxu0 0.0
  %2646 = vmatpush1.msra.mxu0 0.0
  %2647 = vmatprep.subr.mxu0 0.0
  %2648 = vmatpush1.msra.mxu0 0.0
  %2649 = vmatprep.subr.mxu0 0.0
  %2650 = vmatpush1.msra.mxu0 0.0
  %2651 = vmatprep.subr.mxu0 0.0
  %2652 = vmatpush1.msra.mxu0 0.0
  %2653 = vmatprep.subr.mxu0 0.0
  %2654 = vmatpush1.msra.mxu0 0.0
  %2655 = vmatprep.subr.mxu0 0.0
  %2656 = vmatpush1.msra.mxu0 0.0
  %2657 = vmatprep.subr.mxu0 0.0
  %2658 = vmatpush1.msra.mxu0 0.0
  %2659 = vmatprep.subr.mxu0 0.0
  %2660 = vmatpush1.msra.mxu0 0.0
  %2661 = vmatprep.subr.mxu0 0.0
  %2662 = vmatpush1.msra.mxu0 0.0
  %2663 = vmatprep.subr.mxu0 0.0
  %2664 = vmatpush1.msra.mxu0 0.0
  %2665 = vmatprep.subr.mxu0 0.0
  %2666 = vmatpush1.msra.mxu0 0.0
  %2667 = vmatprep.subr.mxu0 0.0
  %2668 = vmatpush1.msra.mxu0 0.0
  %2669 = vmatprep.subr.mxu0 0.0
  %2670 = vmatpush1.msra.mxu0 0.0
  %2671 = vmatprep.subr.mxu0 0.0
  %2672 = vmatpush1.msra.mxu0 0.0
  %2673 = vmatprep.subr.mxu0 0.0
  %2674 = vmatpush1.msra.mxu0 0.0
  %2675 = vmatprep.subr.mxu0 0.0
  %2676 = vmatpush1.msra.mxu0 0.0
  %2677 = vmatprep.subr.mxu0 0.0
  %2678 = vmatpush1.msra.mxu0 0.0
  %2679 = vmatprep.mubr.f32.mxu0 0.0
  %v2680 = vand.u32 %v67, 4294901760
  %v2681 = vsub.f32 %v67, %v2680
  %v2682 = vand.u32 %v2681, 4294901760
  %2683 = vmatmul.mubr.f32.gmra.mrb[0].mxu0 %v2682
  %v2684 = vpop.f32.mrb[0].mxu0
  %v2685 = vadd.f32 %v2604, %v2684
  %v2686 = vpop.f32.mrb[0].mxu0
  %2687 = vdwg.mxu0
  %2688 = vmatprep.subr.mxu0 0.0
  %v2689 = vand.u32 %v1772, 4294901760
  %v2690 = vsub.f32 %v1772, %v2689
  %v2691 = vand.u32 %v2690, 4294901760
  %2692 = vmatpush1.msra.mxu0 %v2691
  %2693 = vmatprep.subr.mxu0 0.0
  %v2694 = vand.u32 %v1773, 4294901760
  %v2695 = vsub.f32 %v1773, %v2694
  %v2696 = vand.u32 %v2695, 4294901760
  %2697 = vmatpush1.msra.mxu0 %v2696
  %2698 = vmatprep.subr.mxu0 0.0
  %v2699 = vand.u32 %v1774, 4294901760
  %v2700 = vsub.f32 %v1774, %v2699
  %v2701 = vand.u32 %v2700, 4294901760
  %2702 = vmatpush1.msra.mxu0 %v2701
  %2703 = vmatprep.subr.mxu0 0.0
  %v2704 = vand.u32 %v1775, 4294901760
  %v2705 = vsub.f32 %v1775, %v2704
  %v2706 = vand.u32 %v2705, 4294901760
  %2707 = vmatpush1.msra.mxu0 %v2706
  %2708 = vmatprep.subr.mxu0 0.0
  %v2709 = vand.u32 %v1776, 4294901760
  %v2710 = vsub.f32 %v1776, %v2709
  %v2711 = vand.u32 %v2710, 4294901760
  %2712 = vmatpush1.msra.mxu0 %v2711
  %2713 = vmatprep.subr.mxu0 0.0
  %v2714 = vand.u32 %v1777, 4294901760
  %v2715 = vsub.f32 %v1777, %v2714
  %v2716 = vand.u32 %v2715, 4294901760
  %2717 = vmatpush1.msra.mxu0 %v2716
  %2718 = vmatprep.subr.mxu0 0.0
  %v2719 = vand.u32 %v1778, 4294901760
  %v2720 = vsub.f32 %v1778, %v2719
  %v2721 = vand.u32 %v2720, 4294901760
  %2722 = vmatpush1.msra.mxu0 %v2721
  %2723 = vmatprep.subr.mxu0 0.0
  %v2724 = vand.u32 %v1779, 4294901760
  %v2725 = vsub.f32 %v1779, %v2724
  %v2726 = vand.u32 %v2725, 4294901760
  %2727 = vmatpush1.msra.mxu0 %v2726
  %2728 = vmatprep.subr.mxu0 0.0
  %2729 = vmatpush1.msra.mxu0 0.0
  %2730 = vmatprep.subr.mxu0 0.0
  %2731 = vmatpush1.msra.mxu0 0.0
  %2732 = vmatprep.subr.mxu0 0.0
  %2733 = vmatpush1.msra.mxu0 0.0
  %2734 = vmatprep.subr.mxu0 0.0
  %2735 = vmatpush1.msra.mxu0 0.0
  %2736 = vmatprep.subr.mxu0 0.0
  %2737 = vmatpush1.msra.mxu0 0.0
  %2738 = vmatprep.subr.mxu0 0.0
  %2739 = vmatpush1.msra.mxu0 0.0
  %2740 = vmatprep.subr.mxu0 0.0
  %2741 = vmatpush1.msra.mxu0 0.0
  %2742 = vmatprep.subr.mxu0 0.0
  %2743 = vmatpush1.msra.mxu0 0.0
  %2744 = vmatprep.subr.mxu0 0.0
  %2745 = vmatpush1.msra.mxu0 0.0
  %2746 = vmatprep.subr.mxu0 0.0
  %2747 = vmatpush1.msra.mxu0 0.0
  %2748 = vmatprep.subr.mxu0 0.0
  %2749 = vmatpush1.msra.mxu0 0.0
  %2750 = vmatprep.subr.mxu0 0.0
  %2751 = vmatpush1.msra.mxu0 0.0
  %2752 = vmatprep.subr.mxu0 0.0
  %2753 = vmatpush1.msra.mxu0 0.0
  %2754 = vmatprep.subr.mxu0 0.0
  %2755 = vmatpush1.msra.mxu0 0.0
  %2756 = vmatprep.subr.mxu0 0.0
  %2757 = vmatpush1.msra.mxu0 0.0
  %2758 = vmatprep.subr.mxu0 0.0
  %2759 = vmatpush1.msra.mxu0 0.0
  %2760 = vmatprep.subr.mxu0 0.0
  %2761 = vmatpush1.msra.mxu0 0.0
  %2762 = vmatprep.subr.mxu0 0.0
  %2763 = vmatpush1.msra.mxu0 0.0
  %2764 = vmatprep.subr.mxu0 0.0
  %2765 = vmatpush1.msra.mxu0 0.0
  %2766 = vmatprep.subr.mxu0 0.0
  %2767 = vmatpush1.msra.mxu0 0.0
  %2768 = vmatprep.subr.mxu0 0.0
  %2769 = vmatpush1.msra.mxu0 0.0
  %2770 = vmatprep.subr.mxu0 0.0
  %2771 = vmatpush1.msra.mxu0 0.0
  %2772 = vmatprep.subr.mxu0 0.0
  %2773 = vmatpush1.msra.mxu0 0.0
  %2774 = vmatprep.subr.mxu0 0.0
  %2775 = vmatpush1.msra.mxu0 0.0
  %2776 = vmatprep.mubr.f32.mxu0 0.0
  %v2777 = vand.u32 %v67, 4294901760
  %2778 = vmatmul.mubr.f32.gmra.mrb[0].mxu0 %v2777
  %v2779 = vpop.f32.mrb[0].mxu0
  %v2780 = vadd.f32 %v2685, %v2779
  %v2781 = vpop.f32.mrb[0].mxu0
  %2782 = vdwg.mxu0
  %2783 = vmatprep.subr.mxu0 0.0
  %v2784 = vand.u32 %v1772, 4294901760
  %2785 = vmatpush1.msra.mxu0 %v2784
  %2786 = vmatprep.subr.mxu0 0.0
  %v2787 = vand.u32 %v1773, 4294901760
  %2788 = vmatpush1.msra.mxu0 %v2787
  %2789 = vmatprep.subr.mxu0 0.0
  %v2790 = vand.u32 %v1774, 4294901760
  %2791 = vmatpush1.msra.mxu0 %v2790
  %2792 = vmatprep.subr.mxu0 0.0
  %v2793 = vand.u32 %v1775, 4294901760
  %2794 = vmatpush1.msra.mxu0 %v2793
  %2795 = vmatprep.subr.mxu0 0.0
  %v2796 = vand.u32 %v1776, 4294901760
  %2797 = vmatpush1.msra.mxu0 %v2796
  %2798 = vmatprep.subr.mxu0 0.0
  %v2799 = vand.u32 %v1777, 4294901760
  %2800 = vmatpush1.msra.mxu0 %v2799
  %2801 = vmatprep.subr.mxu0 0.0
  %v2802 = vand.u32 %v1778, 4294901760
  %2803 = vmatpush1.msra.mxu0 %v2802
  %2804 = vmatprep.subr.mxu0 0.0
  %v2805 = vand.u32 %v1779, 4294901760
  %2806 = vmatpush1.msra.mxu0 %v2805
  %2807 = vmatprep.subr.mxu0 0.0
  %2808 = vmatpush1.msra.mxu0 0.0
  %2809 = vmatprep.subr.mxu0 0.0
  %2810 = vmatpush1.msra.mxu0 0.0
  %2811 = vmatprep.subr.mxu0 0.0
  %2812 = vmatpush1.msra.mxu0 0.0
  %2813 = vmatprep.subr.mxu0 0.0
  %2814 = vmatpush1.msra.mxu0 0.0
  %2815 = vmatprep.subr.mxu0 0.0
  %2816 = vmatpush1.msra.mxu0 0.0
  %2817 = vmatprep.subr.mxu0 0.0
  %2818 = vmatpush1.msra.mxu0 0.0
  %2819 = vmatprep.subr.mxu0 0.0
  %2820 = vmatpush1.msra.mxu0 0.0
  %2821 = vmatprep.subr.mxu0 0.0
  %2822 = vmatpush1.msra.mxu0 0.0
  %2823 = vmatprep.subr.mxu0 0.0
  %2824 = vmatpush1.msra.mxu0 0.0
  %2825 = vmatprep.subr.mxu0 0.0
  %2826 = vmatpush1.msra.mxu0 0.0
  %2827 = vmatprep.subr.mxu0 0.0
  %2828 = vmatpush1.msra.mxu0 0.0
  %2829 = vmatprep.subr.mxu0 0.0
  %2830 = vmatpush1.msra.mxu0 0.0
  %2831 = vmatprep.subr.mxu0 0.0
  %2832 = vmatpush1.msra.mxu0 0.0
  %2833 = vmatprep.subr.mxu0 0.0
  %2834 = vmatpush1.msra.mxu0 0.0
  %2835 = vmatprep.subr.mxu0 0.0
  %2836 = vmatpush1.msra.mxu0 0.0
  %2837 = vmatprep.subr.mxu0 0.0
  %2838 = vmatpush1.msra.mxu0 0.0
  %2839 = vmatprep.subr.mxu0 0.0
  %2840 = vmatpush1.msra.mxu0 0.0
  %2841 = vmatprep.subr.mxu0 0.0
  %2842 = vmatpush1.msra.mxu0 0.0
  %2843 = vmatprep.subr.mxu0 0.0
  %2844 = vmatpush1.msra.mxu0 0.0
  %2845 = vmatprep.subr.mxu0 0.0
  %2846 = vmatpush1.msra.mxu0 0.0
  %2847 = vmatprep.subr.mxu0 0.0
  %2848 = vmatpush1.msra.mxu0 0.0
  %2849 = vmatprep.subr.mxu0 0.0
  %2850 = vmatpush1.msra.mxu0 0.0
  %2851 = vmatprep.subr.mxu0 0.0
  %2852 = vmatpush1.msra.mxu0 0.0
  %2853 = vmatprep.subr.mxu0 0.0
  %2854 = vmatpush1.msra.mxu0 0.0
  %2855 = vmatprep.mubr.f32.mxu0 0.0
  %v2856 = vand.u32 %v67, 4294901760
  %2857 = vmatmul.mubr.f32.gmra.mrb[0].mxu0 %v2856
  %v2858 = vpop.f32.mrb[0].mxu0
  %v2859 = vadd.f32 %v2780, %v2858
  %v2860 = vpop.f32.mrb[0].mxu0
  %2861 = vdwg.mxu0
  %v2862 = vmul.f32 %v40, %v40
  %v2863 = vsel %vm65, %v2862, 0.0
  %2864 = vadd.xlane.f32.xlu0 %v2863
  %v2865 = vpop.xlane.xlu0 %2864
  %v2866 = vadd.f32 %v256, %v2865
  %v2867 = vmul.f32 %v1772, %v1772
  %v2868 = vmul.f32 %v1773, %v1773
  %v2869 = vmul.f32 %v1774, %v1774
  %v2870 = vmul.f32 %v1775, %v1775
  %v2871 = vmul.f32 %v1776, %v1776
  %v2872 = vmul.f32 %v1777, %v1777
  %v2873 = vmul.f32 %v1778, %v1778
  %v2874 = vmul.f32 %v1779, %v1779
  %v2875 = vsel %vm1364, %v2867, 0.0
  %v2876 = vsel %vm1364, %v2868, 0.0
  %v2877 = vadd.f32 %v2875, %v2876
  %v2878 = vsel %vm1364, %v2869, 0.0
  %v2879 = vadd.f32 %v2877, %v2878
  %v2880 = vsel %vm1364, %v2870, 0.0
  %v2881 = vadd.f32 %v2879, %v2880
  %v2882 = vsel %vm1364, %v2871, 0.0
  %v2883 = vadd.f32 %v2881, %v2882
  %v2884 = vsel %vm1364, %v2872, 0.0
  %v2885 = vadd.f32 %v2883, %v2884
  %v2886 = vsel %vm1364, %v2873, 0.0
  %v2887 = vadd.f32 %v2885, %v2886
  %v2888 = vsel %vm1364, %v2874, 0.0
  %v2889 = vadd.f32 %v2887, %v2888
  %v2890 = vrot.slane %v2889, 4
  %v2891 = vadd.f32 %v2889, %v2890
  %v2892 = vrot.slane %v2891, 2
  %v2893 = vadd.f32 %v2891, %v2892
  %v2894 = vrot.slane %v2893, 1
  %v2895 = vadd.f32 %v2893, %v2894
  %v2896 = vmul.f32 %v1780, %v1780
  %v2897 = vmul.f32 %v1781, %v1781
  %v2898 = vmul.f32 %v1782, %v1782
  %v2899 = vmul.f32 %v1783, %v1783
  %v2900 = vmul.f32 %v1784, %v1784
  %v2901 = vmul.f32 %v1785, %v1785
  %v2902 = vmul.f32 %v1786, %v1786
  %v2903 = vmul.f32 %v1787, %v1787
  %v2904 = vsel %vm1364, %v2896, 0.0
  %v2905 = vsel %vm1364, %v2897, 0.0
  %v2906 = vadd.f32 %v2904, %v2905
  %v2907 = vsel %vm1364, %v2898, 0.0
  %v2908 = vadd.f32 %v2906, %v2907
  %v2909 = vsel %vm1364, %v2899, 0.0
  %v2910 = vadd.f32 %v2908, %v2909
  %v2911 = vsel %vm1364, %v2900, 0.0
  %v2912 = vadd.f32 %v2910, %v2911
  %v2913 = vsel %vm1364, %v2901, 0.0
  %v2914 = vadd.f32 %v2912, %v2913
  %v2915 = vsel %vm1364, %v2902, 0.0
  %v2916 = vadd.f32 %v2914, %v2915
  %v2917 = vsel %vm1364, %v2903, 0.0
  %v2918 = vadd.f32 %v2916, %v2917
  %v2919 = vrot.slane %v2918, 4
  %v2920 = vadd.f32 %v2918, %v2919
  %v2921 = vrot.slane %v2920, 2
  %v2922 = vadd.f32 %v2920, %v2921
  %v2923 = vrot.slane %v2922, 1
  %v2924 = vadd.f32 %v2922, %v2923
  %v2925 = vadd.f32 %v2895, %v2924
  %v2926 = vmul.f32 %v2859, 2.0
  %v2927 = vsub.f32 %v2866, %v2926
  %v2928 = vadd.f32 %v2927, %v2925
  %v2929 = vmul.f32 %v2928, 0.0078125
  %v2930 = vsel %vm1364, %v2929, inf
  %2931 = vmin.xlane.f32.xlu0 %v2930
  %v2932 = vpop.xlane.xlu0 %2931
  %vm2933 = vcmp.le.f32.partialorder %v2929, %v2932
  %v2934 = vsel %vm2933, %v1421, 16
  %v2935 = vsel %vm1364, %v2934, 2147483647
  %v2936 = vand.u32 %v2935, 65535
  %v2937 = vshra.s32 %v2935, 16
  %v2938 = vcvt.s32.f32 %v2936
  %v2939 = vcvt.s32.f32 %v2937
  %2940 = vmin.xlane.f32.xlu0 %v2939
  %v2941 = vpop.xlane.xlu0 %2940
  %vm2942 = vcmp.eq.f32.partialorder %v2939, %v2941
  %v2943 = vsel %vm2942, %v2938, inf
  %2944 = vmin.xlane.f32.xlu0 %v2943
  %v2945 = vpop.xlane.xlu0 %2944
  %v2946 = vcvt.f32.s32 %v2945
  %v2947 = vcvt.f32.s32 %v2941
  %v2948 = vshll.u32 %v2947, 16
  %v2949 = vadd.s32 %v2948, %v2946
  %vm2950 = vcmp.eq.s32.totalorder %v1421, %v2949
  %v2951 = vsel %vm2950, 1, 0
  %v2952 = vcvt.s32.f32 %v2951
  %2953 = vxpose.xlu0.b32.start [1/16] %v1772, 128
  %2954 = vxpose.xlu0.b32.cont [2/16] %v1773, 128
  %2955 = vxpose.xlu0.b32.cont [3/16] %v1774, 128
  %2956 = vxpose.xlu0.b32.cont [4/16] %v1775, 128
  %2957 = vxpose.xlu0.b32.cont [5/16] %v1776, 128
  %2958 = vxpose.xlu0.b32.cont [6/16] %v1777, 128
  %2959 = vxpose.xlu0.b32.cont [7/16] %v1778, 128
  %2960 = vxpose.xlu0.b32.cont [8/16] %v1779, 128
  %2961 = vxpose.xlu0.b32.cont [9/16] 0.0, 128
  %2962 = vxpose.xlu0.b32.cont [10/16] 0.0, 128
  %2963 = vxpose.xlu0.b32.cont [11/16] 0.0, 128
  %2964 = vxpose.xlu0.b32.cont [12/16] 0.0, 128
  %2965 = vxpose.xlu0.b32.cont [13/16] 0.0, 128
  %2966 = vxpose.xlu0.b32.cont [14/16] 0.0, 128
  %2967 = vxpose.xlu0.b32.cont [15/16] 0.0, 128
  %2968 = vxpose.xlu0.b32.end [16/16] 0.0, 128
  %v2969 = vpop.trf.xlu0
  %v2970 = vpop.trf.xlu0
  %v2971 = vpop.trf.xlu0
  %v2972 = vpop.trf.xlu0
  %v2973 = vpop.trf.xlu0
  %v2974 = vpop.trf.xlu0
  %v2975 = vpop.trf.xlu0
  %v2976 = vpop.trf.xlu0
  %v2977 = vpop.trf.xlu0
  %v2978 = vpop.trf.xlu0
  %v2979 = vpop.trf.xlu0
  %v2980 = vpop.trf.xlu0
  %v2981 = vpop.trf.xlu0
  %v2982 = vpop.trf.xlu0
  %v2983 = vpop.trf.xlu0
  %v2984 = vpop.trf.xlu0
  %v2986 = vsel %vm65, %v2969, 0
  %v2989 = vsel %vm65, %v2970, 0
  %2991 = vmatprep.subr.mxu0 0.0
  %2992 = vmatpush1.msra.mxu0 %v41
  %2993 = vmatprep.subr.mxu0 0.0
  %2994 = vmatpush1.msra.mxu0 %v42
  %2995 = vmatprep.subr.mxu0 0.0
  %2996 = vmatpush1.msra.mxu0 %v43
  %2997 = vmatprep.subr.mxu0 0.0
  %2998 = vmatpush1.msra.mxu0 %v44
  %2999 = vmatprep.subr.mxu0 0.0
  %3000 = vmatpush1.msra.mxu0 %v45
  %3001 = vmatprep.subr.mxu0 0.0
  %3002 = vmatpush1.msra.mxu0 %v46
  %3003 = vmatprep.subr.mxu0 0.0
  %3004 = vmatpush1.msra.mxu0 %v47
  %3005 = vmatprep.subr.mxu0 0.0
  %3006 = vmatpush1.msra.mxu0 %v48
  %3007 = vmatprep.subr.mxu0 0.0
  %3008 = vmatpush1.msra.mxu0 0.0
  %3009 = vmatprep.subr.mxu0 0.0
  %3010 = vmatpush1.msra.mxu0 0.0
  %3011 = vmatprep.subr.mxu0 0.0
  %3012 = vmatpush1.msra.mxu0 0.0
  %3013 = vmatprep.subr.mxu0 0.0
  %3014 = vmatpush1.msra.mxu0 0.0
  %3015 = vmatprep.subr.mxu0 0.0
  %3016 = vmatpush1.msra.mxu0 0.0
  %3017 = vmatprep.subr.mxu0 0.0
  %3018 = vmatpush1.msra.mxu0 0.0
  %3019 = vmatprep.subr.mxu0 0.0
  %3020 = vmatpush1.msra.mxu0 0.0
  %3021 = vmatprep.subr.mxu0 0.0
  %3022 = vmatpush1.msra.mxu0 0.0
  %3023 = vmatprep.subr.mxu0 0.0
  %3024 = vmatpush1.msra.mxu0 0.0
  %3025 = vmatprep.subr.mxu0 0.0
  %3026 = vmatpush1.msra.mxu0 0.0
  %3027 = vmatprep.subr.mxu0 0.0
  %3028 = vmatpush1.msra.mxu0 0.0
  %3029 = vmatprep.subr.mxu0 0.0
  %3030 = vmatpush1.msra.mxu0 0.0
  %3031 = vmatprep.subr.mxu0 0.0
  %3032 = vmatpush1.msra.mxu0 0.0
  %3033 = vmatprep.subr.mxu0 0.0
  %3034 = vmatpush1.msra.mxu0 0.0
  %3035 = vmatprep.subr.mxu0 0.0
  %3036 = vmatpush1.msra.mxu0 0.0
  %3037 = vmatprep.subr.mxu0 0.0
  %3038 = vmatpush1.msra.mxu0 0.0
  %3039 = vmatprep.subr.mxu0 0.0
  %3040 = vmatpush1.msra.mxu0 0.0
  %3041 = vmatprep.subr.mxu0 0.0
  %3042 = vmatpush1.msra.mxu0 0.0
  %3043 = vmatprep.subr.mxu0 0.0
  %3044 = vmatpush1.msra.mxu0 0.0
  %3045 = vmatprep.subr.mxu0 0.0
  %3046 = vmatpush1.msra.mxu0 0.0
  %3047 = vmatprep.subr.mxu0 0.0
  %3048 = vmatpush1.msra.mxu0 0.0
  %3049 = vmatprep.subr.mxu0 0.0
  %3050 = vmatpush1.msra.mxu0 0.0
  %3051 = vmatprep.subr.mxu0 0.0
  %3052 = vmatpush1.msra.mxu0 0.0
  %3053 = vmatprep.subr.mxu0 0.0
  %3054 = vmatpush1.msra.mxu0 0.0
  %3055 = vmatprep.mubr.f32.mxu0 0.0
  %3056 = vmatmul.mubr.f32.gmra.mrb[0].mxu0 %v2986
  %v3057 = vpop.f32.mrb[0].mxu0
  %v3058 = vadd.f32 0.0, %v3057
  %v3059 = vpop.f32.mrb[0].mxu0
  %3060 = vmatprep.mubr.f32.mxu0 0.0
  %3061 = vmatmul.mubr.f32.gmra.mrb[0].mxu0 %v2989
  %v3062 = vpop.f32.mrb[0].mxu0
  %v3063 = vadd.f32 0.0, %v3062
  %v3064 = vpop.f32.mrb[0].mxu0
  %3065 = vdwg.mxu0
  %3066 = vxpose.xlu0.b32.start [1/16] %v1780, 128
  %3067 = vxpose.xlu0.b32.cont [2/16] %v1781, 128
  %3068 = vxpose.xlu0.b32.cont [3/16] %v1782, 128
  %3069 = vxpose.xlu0.b32.cont [4/16] %v1783, 128
  %3070 = vxpose.xlu0.b32.cont [5/16] %v1784, 128
  %3071 = vxpose.xlu0.b32.cont [6/16] %v1785, 128
  %3072 = vxpose.xlu0.b32.cont [7/16] %v1786, 128
  %3073 = vxpose.xlu0.b32.cont [8/16] %v1787, 128
  %3074 = vxpose.xlu0.b32.cont [9/16] 0.0, 128
  %3075 = vxpose.xlu0.b32.cont [10/16] 0.0, 128
  %3076 = vxpose.xlu0.b32.cont [11/16] 0.0, 128
  %3077 = vxpose.xlu0.b32.cont [12/16] 0.0, 128
  %3078 = vxpose.xlu0.b32.cont [13/16] 0.0, 128
  %3079 = vxpose.xlu0.b32.cont [14/16] 0.0, 128
  %3080 = vxpose.xlu0.b32.cont [15/16] 0.0, 128
  %3081 = vxpose.xlu0.b32.end [16/16] 0.0, 128
  %v3082 = vpop.trf.xlu0
  %v3083 = vpop.trf.xlu0
  %v3084 = vpop.trf.xlu0
  %v3085 = vpop.trf.xlu0
  %v3086 = vpop.trf.xlu0
  %v3087 = vpop.trf.xlu0
  %v3088 = vpop.trf.xlu0
  %v3089 = vpop.trf.xlu0
  %v3090 = vpop.trf.xlu0
  %v3091 = vpop.trf.xlu0
  %v3092 = vpop.trf.xlu0
  %v3093 = vpop.trf.xlu0
  %v3094 = vpop.trf.xlu0
  %v3095 = vpop.trf.xlu0
  %v3096 = vpop.trf.xlu0
  %v3097 = vpop.trf.xlu0
  %v3099 = vsel %vm65, %v3082, 0
  %v3102 = vsel %vm65, %v3083, 0
  %3104 = vmatprep.subr.mxu0 0.0
  %3105 = vmatpush1.msra.mxu0 %v50
  %3106 = vmatprep.subr.mxu0 0.0
  %3107 = vmatpush1.msra.mxu0 %v51
  %3108 = vmatprep.subr.mxu0 0.0
  %3109 = vmatpush1.msra.mxu0 %v52
  %3110 = vmatprep.subr.mxu0 0.0
  %3111 = vmatpush1.msra.mxu0 %v53
  %3112 = vmatprep.subr.mxu0 0.0
  %3113 = vmatpush1.msra.mxu0 %v54
  %3114 = vmatprep.subr.mxu0 0.0
  %3115 = vmatpush1.msra.mxu0 %v55
  %3116 = vmatprep.subr.mxu0 0.0
  %3117 = vmatpush1.msra.mxu0 %v56
  %3118 = vmatprep.subr.mxu0 0.0
  %3119 = vmatpush1.msra.mxu0 %v57
  %3120 = vmatprep.subr.mxu0 0.0
  %3121 = vmatpush1.msra.mxu0 0.0
  %3122 = vmatprep.subr.mxu0 0.0
  %3123 = vmatpush1.msra.mxu0 0.0
  %3124 = vmatprep.subr.mxu0 0.0
  %3125 = vmatpush1.msra.mxu0 0.0
  %3126 = vmatprep.subr.mxu0 0.0
  %3127 = vmatpush1.msra.mxu0 0.0
  %3128 = vmatprep.subr.mxu0 0.0
  %3129 = vmatpush1.msra.mxu0 0.0
  %3130 = vmatprep.subr.mxu0 0.0
  %3131 = vmatpush1.msra.mxu0 0.0
  %3132 = vmatprep.subr.mxu0 0.0
  %3133 = vmatpush1.msra.mxu0 0.0
  %3134 = vmatprep.subr.mxu0 0.0
  %3135 = vmatpush1.msra.mxu0 0.0
  %3136 = vmatprep.subr.mxu0 0.0
  %3137 = vmatpush1.msra.mxu0 0.0
  %3138 = vmatprep.subr.mxu0 0.0
  %3139 = vmatpush1.msra.mxu0 0.0
  %3140 = vmatprep.subr.mxu0 0.0
  %3141 = vmatpush1.msra.mxu0 0.0
  %3142 = vmatprep.subr.mxu0 0.0
  %3143 = vmatpush1.msra.mxu0 0.0
  %3144 = vmatprep.subr.mxu0 0.0
  %3145 = vmatpush1.msra.mxu0 0.0
  %3146 = vmatprep.subr.mxu0 0.0
  %3147 = vmatpush1.msra.mxu0 0.0
  %3148 = vmatprep.subr.mxu0 0.0
  %3149 = vmatpush1.msra.mxu0 0.0
  %3150 = vmatprep.subr.mxu0 0.0
  %3151 = vmatpush1.msra.mxu0 0.0
  %3152 = vmatprep.subr.mxu0 0.0
  %3153 = vmatpush1.msra.mxu0 0.0
  %3154 = vmatprep.subr.mxu0 0.0
  %3155 = vmatpush1.msra.mxu0 0.0
  %3156 = vmatprep.subr.mxu0 0.0
  %3157 = vmatpush1.msra.mxu0 0.0
  %3158 = vmatprep.subr.mxu0 0.0
  %3159 = vmatpush1.msra.mxu0 0.0
  %3160 = vmatprep.subr.mxu0 0.0
  %3161 = vmatpush1.msra.mxu0 0.0
  %3162 = vmatprep.subr.mxu0 0.0
  %3163 = vmatpush1.msra.mxu0 0.0
  %3164 = vmatprep.subr.mxu0 0.0
  %3165 = vmatpush1.msra.mxu0 0.0
  %3166 = vmatprep.subr.mxu0 0.0
  %3167 = vmatpush1.msra.mxu0 0.0
  %3168 = vmatprep.mubr.f32.mxu0 0.0
  %3169 = vmatmul.mubr.f32.gmra.mrb[0].mxu0 %v3099
  %v3170 = vpop.f32.mrb[0].mxu0
  %v3171 = vadd.f32 0.0, %v3170
  %v3172 = vpop.f32.mrb[0].mxu0
  %3173 = vmatprep.mubr.f32.mxu0 0.0
  %3174 = vmatmul.mubr.f32.gmra.mrb[0].mxu0 %v3102
  %v3175 = vpop.f32.mrb[0].mxu0
  %v3176 = vadd.f32 0.0, %v3175
  %v3177 = vpop.f32.mrb[0].mxu0
  %3178 = vdwg.mxu0
  %3181 = vrot.lane.b32.xlu0 %v3171, 32
  %v3182 = vpop.permute.xlu0 %3181
  %3183 = vrot.lane.b32.xlu0 %v3176, 32
  %v3184 = vpop.permute.xlu0 %3183
  %v3187 = vsel %vm245, %v3058, %v3182
  %v3188 = vsel %vm245, %v3063, %v3184
  %v3190 = vsel %vm1364, %v2952, 0
  %3192 = vmatprep.subr.mxu0 0.0
  %3193 = vmatpush1.msra.mxu0 %v3187
  %3194 = vmatprep.subr.mxu0 0.0
  %3195 = vmatpush1.msra.mxu0 %v3188
  %3196 = vmatprep.subr.mxu0 0.0
  %3197 = vmatpush1.msra.mxu0 0.0
  %3198 = vmatprep.subr.mxu0 0.0
  %3199 = vmatpush1.msra.mxu0 0.0
  %3200 = vmatprep.subr.mxu0 0.0
  %3201 = vmatpush1.msra.mxu0 0.0
  %3202 = vmatprep.subr.mxu0 0.0
  %3203 = vmatpush1.msra.mxu0 0.0
  %3204 = vmatprep.subr.mxu0 0.0
  %3205 = vmatpush1.msra.mxu0 0.0
  %3206 = vmatprep.subr.mxu0 0.0
  %3207 = vmatpush1.msra.mxu0 0.0
  %3208 = vmatprep.subr.mxu0 0.0
  %3209 = vmatpush1.msra.mxu0 0.0
  %3210 = vmatprep.subr.mxu0 0.0
  %3211 = vmatpush1.msra.mxu0 0.0
  %3212 = vmatprep.subr.mxu0 0.0
  %3213 = vmatpush1.msra.mxu0 0.0
  %3214 = vmatprep.subr.mxu0 0.0
  %3215 = vmatpush1.msra.mxu0 0.0
  %3216 = vmatprep.subr.mxu0 0.0
  %3217 = vmatpush1.msra.mxu0 0.0
  %3218 = vmatprep.subr.mxu0 0.0
  %3219 = vmatpush1.msra.mxu0 0.0
  %3220 = vmatprep.subr.mxu0 0.0
  %3221 = vmatpush1.msra.mxu0 0.0
  %3222 = vmatprep.subr.mxu0 0.0
  %3223 = vmatpush1.msra.mxu0 0.0
  %3224 = vmatprep.subr.mxu0 0.0
  %3225 = vmatpush1.msra.mxu0 0.0
  %3226 = vmatprep.subr.mxu0 0.0
  %3227 = vmatpush1.msra.mxu0 0.0
  %3228 = vmatprep.subr.mxu0 0.0
  %3229 = vmatpush1.msra.mxu0 0.0
  %3230 = vmatprep.subr.mxu0 0.0
  %3231 = vmatpush1.msra.mxu0 0.0
  %3232 = vmatprep.subr.mxu0 0.0
  %3233 = vmatpush1.msra.mxu0 0.0
  %3234 = vmatprep.subr.mxu0 0.0
  %3235 = vmatpush1.msra.mxu0 0.0
  %3236 = vmatprep.subr.mxu0 0.0
  %3237 = vmatpush1.msra.mxu0 0.0
  %3238 = vmatprep.subr.mxu0 0.0
  %3239 = vmatpush1.msra.mxu0 0.0
  %3240 = vmatprep.subr.mxu0 0.0
  %3241 = vmatpush1.msra.mxu0 0.0
  %3242 = vmatprep.subr.mxu0 0.0
  %3243 = vmatpush1.msra.mxu0 0.0
  %3244 = vmatprep.subr.mxu0 0.0
  %3245 = vmatpush1.msra.mxu0 0.0
  %3246 = vmatprep.subr.mxu0 0.0
  %3247 = vmatpush1.msra.mxu0 0.0
  %3248 = vmatprep.subr.mxu0 0.0
  %3249 = vmatpush1.msra.mxu0 0.0
  %3250 = vmatprep.subr.mxu0 0.0
  %3251 = vmatpush1.msra.mxu0 0.0
  %3252 = vmatprep.subr.mxu0 0.0
  %3253 = vmatpush1.msra.mxu0 0.0
  %3254 = vmatprep.subr.mxu0 0.0
  %3255 = vmatpush1.msra.mxu0 0.0
  %3256 = vmatprep.mubr.f32.mxu0 0.0
  %3257 = vmatmul.mubr.f32.gmra.mrb[0].mxu0 %v3190
  %v3258 = vpop.f32.mrb[0].mxu0
  %v3259 = vadd.f32 %v1684, %v3258
  %v3260 = vpop.f32.mrb[0].mxu0
  %3261 = vdwg.mxu0
  %v3262 = vxor.u32 %v3259, 2147483648
  %v3263 = vmul.f32 %v3262, 1.442695
  %v3264 = vpow.pop %v3263
  %v3265 = vadd.f32 %v3264, 1.0
  %v3266 = vrcp.pop %v3265
  %v3267 = vmul.f32 1.0, %v3266
  %3269 = vrot.lane.b32.xlu0 %v3267, 96
  %v3270 = vpop.permute.xlu0 %3269
  %v3272 = vmul.f32 %v3267, %v3270
  %v3273 = vsel %vm245, %v3272, 0.0
  %3274 = vadd.xlane.f32.xlu0 %v3273
  %v3275 = vpop.xlane.xlu0 %3274
  %vm3276 = vcmp.eq.s32.totalorder %v1421, 0
  %v3277 = vsel %vm3276, %v248, 0.0
  %vm3278 = vcmp.eq.s32.totalorder %v1421, 1
  %v3279 = vsel %vm3278, %v252, 0.0
  %v3280 = vadd.f32 %v3277, %v3279
  %vm3281 = vcmp.eq.s32.totalorder %v1421, 2
  %v3282 = vsel %vm3281, %v1771, 0.0
  %v3283 = vadd.f32 %v3280, %v3282
  %vm3284 = vcmp.eq.s32.totalorder %v1421, 3
  %v3285 = vsel %vm3284, %v3275, 0.0
  %v3286 = vadd.f32 %v3283, %v3285
  %3287 = vst [vmem:[%s11] sm:$0xff] %v3286
  // Predicated region
  $region46: #{paicm_forward.2} parent=0 // pred_check
    _
  $region47: #{paicm_forward.2} parent=0 // pred_check_branch
    %3289 = sbr.rel (0) target = $region49
  $region48: #{paicm_forward.2} parent=0 // pred_region
    _
  $region49: #{paicm_forward.2} parent=0 // pred_fallthru
    _
  // Predicated region
  $region50: #{paicm_forward.2} parent=0 // pred_check
    _
  $region51: #{paicm_forward.2} parent=0 // pred_check_branch
    %3291 = sbr.rel (0) target = $region53
  $region52: #{paicm_forward.2} parent=0 // pred_region
    _
  $region53: #{paicm_forward.2} parent=0 // pred_fallthru
    _

</llo_original>
